<compile_context>
chip_gen: v5e
topology: v5e:2x2
jax: 0.10.0
libtpu: 0.0.40
codegen_flags: <defaults>
</compile_context>

<pallas_src>
import jax
import jax.numpy as jnp
from jax.experimental import pallas as pl
from jax.experimental.pallas import tpu as pltpu

TXT_DIM = 128          # txt_dim (small stand-in for 768)
VIS_DIM = 64           # vis_dim (small stand-in for 512)
HEADS = 8
HEAD_DIM = TXT_DIM // HEADS
FF_DIM = TXT_DIM * 4
L = 2
EPS = 1e-5


def _layer_norm(x, g, b):
    mu = jnp.mean(x, axis=-1, keepdims=True)
    var = jnp.mean((x - mu) ** 2, axis=-1, keepdims=True)
    return (x - mu) * jax.lax.rsqrt(var + EPS) * g + b


# ---------------------------------------------------------------------------
# Fused per-batch-element kernel: map_vis + concat + L encoder layers + scorer
# ---------------------------------------------------------------------------
def fused_reranker_kernel(txt_ref, vis_ref, mvw_ref, mvb_ref,
                          wqkv_ref, bqkv_ref, wo_ref, bo_ref,
                          g1_ref, be1_ref, w1_ref, b1_ref, w2_ref, b2_ref,
                          g2_ref, be2_ref, scw_ref, scb_ref, o_ref):
    f32 = jnp.float32
    bf16 = jnp.bfloat16
    S_txt, D = txt_ref.shape
    scale = 1.0 / (HEAD_DIM ** 0.5)

    # ---- map_vis: Linear(vis_dim -> txt_dim), bf16 operands / f32 accumulate --------
    vis = jnp.dot(vis_ref[...].astype(bf16), mvw_ref[...],
                  preferred_element_type=f32) + mvb_ref[...]

    # ---- seq = cat([txt, vis], dim=1) for this batch element -> (S, D), f32 stream --
    x = jnp.concatenate([txt_ref[...], vis], axis=0)

    for l in range(L):                         # static unroll; weights resident in VMEM
        # -------- fused QKV projection: one (S,D)x(D,3D) MXU pass --------------------
        qkv = jnp.dot(x.astype(bf16), wqkv_ref[l],
                      preferred_element_type=f32) + bqkv_ref[l]          # (S, 3D) f32

        # head-major q/k/v via static 16-lane slices + leading-dim stack
        qh = jnp.stack([qkv[:, h * HEAD_DIM:(h + 1) * HEAD_DIM]
                        for h in range(HEADS)], axis=0).astype(bf16)     # (H, S, Hd)
        kh = jnp.stack([qkv[:, D + h * HEAD_DIM:D + (h + 1) * HEAD_DIM]
                        for h in range(HEADS)], axis=0).astype(bf16)
        vh = jnp.stack([qkv[:, 2 * D + h * HEAD_DIM:2 * D + (h + 1) * HEAD_DIM]
                        for h in range(HEADS)], axis=0).astype(bf16)

        # -------- scaled dot-product attention (batch-local by construction) ---------
        s = jnp.einsum('hqe,hke->hqk', qh, kh,
                       preferred_element_type=f32) * scale               # (H, S, S) f32
        s = s - jnp.max(s, axis=-1, keepdims=True)
        p = jnp.exp(s)
        p = p * pl.reciprocal(jnp.sum(p, axis=-1, keepdims=True), approx=True)

        o = jnp.einsum('hqk,hke->hqe', p.astype(bf16), vh,
                       preferred_element_type=f32)                       # (H, S, Hd) f32

        # -------- head concat + single full-depth (K=128) output projection ----------
        o_flat = jnp.concatenate([o[h] for h in range(HEADS)], axis=-1)  # (S, D)
        attn = jnp.dot(o_flat.astype(bf16), wo_ref[l],
                       preferred_element_type=f32) + bo_ref[l]

        # -------- residual + LayerNorm1 (post-norm), f32 -----------------------------
        x = _layer_norm(x + attn, g1_ref[l], be1_ref[l])

        # -------- feed-forward (ReLU) + residual + LayerNorm2 ------------------------
        h1 = jnp.maximum(
            jnp.dot(x.astype(bf16), w1_ref[l],
                    preferred_element_type=f32) + b1_ref[l], 0.0)
        ff = jnp.dot(h1.astype(bf16), w2_ref[l],
                     preferred_element_type=f32) + b2_ref[l]
        x = _layer_norm(x + ff, g2_ref[l], be2_ref[l])

    # ---- scorer on the CLS token (first txt token): f32 VPU mul + lane reduction ----
    cls = x[0:1, :]                                                      # (1, D)
    score = jnp.sum(cls * scw_ref[...], axis=-1, keepdims=True) + scb_ref[...]
    o_ref[...] = score[None].astype(o_ref.dtype)                         # (1, 1, 1)


# ---------------------------------------------------------------------------
# Wrapper: weight re-layout / bf16 cast (plain JAX) + single pallas_call
# ---------------------------------------------------------------------------
def cross_modal_reranker(txt_tok, vis_tok, params):
    B, S_txt, D = txt_tok.shape
    _, S_vis, Dv = vis_tok.shape
    bf16 = jnp.bfloat16

    layers = params["layers"]

    def _stack(fn, dtype=jnp.float32):
        return jnp.stack([fn(lp) for lp in layers], axis=0).astype(dtype)

    # lane-dense, pre-transposed layouts; matmul weights stored bf16 (f32 accumulate
    # in-kernel), biases / LayerNorm / scorer params stay f32.
    wqkv = _stack(lambda p: p["w_in"].T, bf16)                 # (L, D, 3D)
    bqkv = _stack(lambda p: p["b_in"].reshape(1, 3 * D))       # (L, 1, 3D)
    wo = _stack(lambda p: p["w_out"].T, bf16)                  # (L, D, D)
    bo = _stack(lambda p: p["b_out"].reshape(1, D))
    g1 = _stack(lambda p: p["g1"].reshape(1, D))
    be1 = _stack(lambda p: p["be1"].reshape(1, D))
    w1 = _stack(lambda p: p["w1"].T, bf16)                     # (L, D, FF)
    b1 = _stack(lambda p: p["b1"].reshape(1, FF_DIM))
    w2 = _stack(lambda p: p["w2"].T, bf16)                     # (L, FF, D)
    b2 = _stack(lambda p: p["b2"].reshape(1, D))
    g2 = _stack(lambda p: p["g2"].reshape(1, D))
    be2 = _stack(lambda p: p["be2"].reshape(1, D))

    mvw = params["map_vis_w"].T.astype(bf16)                   # (Dv, D)
    mvb = params["map_vis_b"].reshape(1, D)
    scw = params["scorer_w"].reshape(1, D)
    scb = params["scorer_b"].reshape(1, 1)

    weights = [mvw, mvb, wqkv, bqkv, wo, bo, g1, be1,
               w1, b1, w2, b2, g2, be2, scw, scb]
    # whole-array, VMEM-resident specs (fetched once; ~1 MB bf16 total)
    resident = [pl.BlockSpec(memory_space=pltpu.MemorySpace.VMEM) for _ in weights]

    score = pl.pallas_call(
        fused_reranker_kernel,
        out_shape=jax.ShapeDtypeStruct((B, 1, 1), jnp.float32),
        grid=(B,),
        in_specs=[
            pl.BlockSpec((None, S_txt, D), lambda b: (b, 0, 0)),   # per-batch txt tile
            pl.BlockSpec((None, S_vis, Dv), lambda b: (b, 0, 0)),  # per-batch vis tile
            *resident,
        ],
        out_specs=pl.BlockSpec((1, 1, 1), lambda b: (b, 0, 0)),
        compiler_params=pltpu.CompilerParams(
            dimension_semantics=("parallel",),      # batch axis: independent work
            vmem_limit_bytes=32 * 1024 * 1024,      # actual footprint ~2-4 MiB; headroom
        ),
    )(txt_tok, vis_tok, *weights)
    return score.reshape(B)


# ---------------------------------------------------------------------------
# Deterministic parameter init (shapes match the PyTorch module)
# ---------------------------------------------------------------------------
def init_params(key):
    keys = iter(jax.random.split(key, 64))

    def rnd(shape, scale=0.05):
        return scale * jax.random.normal(next(keys), shape, dtype=jnp.float32)

    params = {
        "map_vis_w": rnd((TXT_DIM, VIS_DIM)),
        "map_vis_b": rnd((TXT_DIM,)),
        "scorer_w": rnd((1, TXT_DIM)),
        "scorer_b": rnd((1,)),
        "layers": [],
    }
    for _ in range(L):
        params["layers"].append({
            "w_in": rnd((3 * TXT_DIM, TXT_DIM)),
            "b_in": rnd((3 * TXT_DIM,)),
            "w_out": rnd((TXT_DIM, TXT_DIM)),
            "b_out": rnd((TXT_DIM,)),
            "g1": jnp.ones((TXT_DIM,), jnp.float32),
            "be1": jnp.zeros((TXT_DIM,), jnp.float32),
            "w1": rnd((FF_DIM, TXT_DIM)),
            "b1": rnd((FF_DIM,)),
            "w2": rnd((TXT_DIM, FF_DIM)),
            "b2": rnd((TXT_DIM,)),
            "g2": jnp.ones((TXT_DIM,), jnp.float32),
            "be2": jnp.zeros((TXT_DIM,), jnp.float32),
        })
    return params


# ---------------------------------------------------------------------------
# Pure-JAX f32 reference (correctness check)
# ---------------------------------------------------------------------------
def reference(txt_tok, vis_tok, params):
    vis = vis_tok @ params["map_vis_w"].T + params["map_vis_b"]
    seq = jnp.concatenate([txt_tok, vis], axis=1)
    for p in params["layers"]:
        B, S, D = seq.shape
        qkv = seq @ p["w_in"].T + p["b_in"]
        q, k, v = jnp.split(qkv, 3, axis=-1)
        heads = lambda t: t.reshape(B, S, HEADS, HEAD_DIM).transpose(0, 2, 1, 3)
        qh, kh, vh = heads(q), heads(k), heads(v)
        s = jnp.einsum("bhqd,bhkd->bhqk", qh, kh) / jnp.sqrt(jnp.float32(HEAD_DIM))
        a = jax.nn.softmax(s, axis=-1)
        o = jnp.einsum("bhqk,bhkd->bhqd", a, vh).transpose(0, 2, 1, 3).reshape(B, S, D)
        o = o @ p["w_out"].T + p["b_out"]
        seq = _layer_norm(seq + o, p["g1"], p["be1"])
        ff = jax.nn.relu(seq @ p["w1"].T + p["b1"]) @ p["w2"].T + p["b2"]
        seq = _layer_norm(seq + ff, p["g2"], p["be2"])
    return (seq[:, 0] @ params["scorer_w"].T + params["scorer_b"])[:, 0]


if __name__ == "__main__":
    key = jax.random.PRNGKey(0)
    k1, k2, k3 = jax.random.split(key, 3)
    # S_txt / S_vis kept multiples of 8 so the concat/tiling stays (8,128)-aligned
    B, S_txt, S_vis = 2, 8, 8
    txt_tok = jax.random.normal(k1, (B, S_txt, TXT_DIM), dtype=jnp.float32)
    vis_tok = jax.random.normal(k2, (B, S_vis, VIS_DIM), dtype=jnp.float32)
    params = init_params(k3)

    fwd = jax.jit(cross_modal_reranker)
    out = jax.block_until_ready(fwd(txt_tok, vis_tok, params))
    ref = reference(txt_tok, vis_tok, params)

    assert out.shape == (B,), out.shape
    # bf16 matmul operands (f32 accumulation) + approx softmax reciprocal loosen
    # agreement with the exact f32 reference (perf review expects ~1e-2-level drift).
    assert jnp.allclose(out, ref, atol=4e-2, rtol=4e-2), (out, ref)
    print("KERNEL_OK")
</pallas_src>

<mosaic_0001>
module attributes {stable_mosaic.version = 11 : i64} {
  func.func @fused_reranker_kernel(%arg0: i32, %arg1: memref<1x8x128xf32, #tpu.memory_space<vmem>>, %arg2: memref<1x8x64xf32, #tpu.memory_space<vmem>>, %arg3: memref<64x128xbf16, #tpu.memory_space<vmem>>, %arg4: memref<1x128xf32, #tpu.memory_space<vmem>>, %arg5: memref<2x128x384xbf16, #tpu.memory_space<vmem>>, %arg6: memref<2x1x384xf32, #tpu.memory_space<vmem>>, %arg7: memref<2x128x128xbf16, #tpu.memory_space<vmem>>, %arg8: memref<2x1x128xf32, #tpu.memory_space<vmem>>, %arg9: memref<2x1x128xf32, #tpu.memory_space<vmem>>, %arg10: memref<2x1x128xf32, #tpu.memory_space<vmem>>, %arg11: memref<2x128x512xbf16, #tpu.memory_space<vmem>>, %arg12: memref<2x1x512xf32, #tpu.memory_space<vmem>>, %arg13: memref<2x512x128xbf16, #tpu.memory_space<vmem>>, %arg14: memref<2x1x128xf32, #tpu.memory_space<vmem>>, %arg15: memref<2x1x128xf32, #tpu.memory_space<vmem>>, %arg16: memref<2x1x128xf32, #tpu.memory_space<vmem>>, %arg17: memref<1x128xf32, #tpu.memory_space<vmem>>, %arg18: memref<1x1xf32, #tpu.memory_space<vmem>>, %arg19: memref<1x1x1xf32, #tpu.memory_space<vmem>>) attributes {dimension_semantics = [#tpu.dimension_semantics<parallel>], iteration_bounds = array<i64: 2>, scalar_prefetch = 0 : i64, scratch_operands = 0 : i64, tpu.core_type = #tpu.core_type<tc>, window_params = [{transform_indices = @transform_0, window_bounds = array<i64: 1, 8, 128>}, {transform_indices = @transform_1, window_bounds = array<i64: 1, 8, 64>}, {pipeline_mode = #tpu.pipeline_mode<synchronous>, transform_indices = @transform_2, window_bounds = array<i64: 64, 128>}, {pipeline_mode = #tpu.pipeline_mode<synchronous>, transform_indices = @transform_3, window_bounds = array<i64: 1, 128>}, {pipeline_mode = #tpu.pipeline_mode<synchronous>, transform_indices = @transform_4, window_bounds = array<i64: 2, 128, 384>}, {pipeline_mode = #tpu.pipeline_mode<synchronous>, transform_indices = @transform_5, window_bounds = array<i64: 2, 1, 384>}, {pipeline_mode = #tpu.pipeline_mode<synchronous>, transform_indices = @transform_6, window_bounds = array<i64: 2, 128, 128>}, {pipeline_mode = #tpu.pipeline_mode<synchronous>, transform_indices = @transform_7, window_bounds = array<i64: 2, 1, 128>}, {pipeline_mode = #tpu.pipeline_mode<synchronous>, transform_indices = @transform_8, window_bounds = array<i64: 2, 1, 128>}, {pipeline_mode = #tpu.pipeline_mode<synchronous>, transform_indices = @transform_9, window_bounds = array<i64: 2, 1, 128>}, {pipeline_mode = #tpu.pipeline_mode<synchronous>, transform_indices = @transform_10, window_bounds = array<i64: 2, 128, 512>}, {pipeline_mode = #tpu.pipeline_mode<synchronous>, transform_indices = @transform_11, window_bounds = array<i64: 2, 1, 512>}, {pipeline_mode = #tpu.pipeline_mode<synchronous>, transform_indices = @transform_12, window_bounds = array<i64: 2, 512, 128>}, {pipeline_mode = #tpu.pipeline_mode<synchronous>, transform_indices = @transform_13, window_bounds = array<i64: 2, 1, 128>}, {pipeline_mode = #tpu.pipeline_mode<synchronous>, transform_indices = @transform_14, window_bounds = array<i64: 2, 1, 128>}, {pipeline_mode = #tpu.pipeline_mode<synchronous>, transform_indices = @transform_15, window_bounds = array<i64: 2, 1, 128>}, {pipeline_mode = #tpu.pipeline_mode<synchronous>, transform_indices = @transform_16, window_bounds = array<i64: 1, 128>}, {pipeline_mode = #tpu.pipeline_mode<synchronous>, transform_indices = @transform_17, window_bounds = array<i64: 1, 1>}, {transform_indices = @transform_18, window_bounds = array<i64: 1, 1, 1>}]} {
    %c0 = arith.constant 0 : index
    %c0_0 = arith.constant 0 : index
    %c0_1 = arith.constant 0 : index
    %0 = vector.load %arg2[%c0, %c0_0, %c0_1] : memref<1x8x64xf32, #tpu.memory_space<vmem>>, vector<1x8x64xf32>
    %1 = vector.shape_cast %0 : vector<1x8x64xf32> to vector<8x64xf32>
    %2 = arith.truncf %1 : vector<8x64xf32> to vector<8x64xbf16>
    %c0_2 = arith.constant 0 : index
    %c0_3 = arith.constant 0 : index
    %3 = vector.load %arg3[%c0_2, %c0_3] : memref<64x128xbf16, #tpu.memory_space<vmem>>, vector<64x128xbf16>
    %cst = arith.constant dense<0.000000e+00> : vector<8x128xf32>
    %4 = tpu.matmul %2, %3, %cst {dimension_numbers = #tpu.dot_dimension_numbers<[1], [0], [0], [1], [0, 0, 1, 1], [], []>} : vector<8x64xbf16>, vector<64x128xbf16>, vector<8x128xf32> -> vector<8x128xf32>
    %c0_4 = arith.constant 0 : index
    %c0_5 = arith.constant 0 : index
    %5 = vector.load %arg4[%c0_4, %c0_5] : memref<1x128xf32, #tpu.memory_space<vmem>>, vector<1x128xf32>
    %6 = vector.broadcast %5 : vector<1x128xf32> to vector<8x128xf32>
    %7 = arith.addf %4, %6 : vector<8x128xf32>
    %c0_6 = arith.constant 0 : index
    %c0_7 = arith.constant 0 : index
    %c0_8 = arith.constant 0 : index
    %8 = vector.load %arg1[%c0_6, %c0_7, %c0_8] : memref<1x8x128xf32, #tpu.memory_space<vmem>>, vector<1x8x128xf32>
    %9 = vector.shape_cast %8 : vector<1x8x128xf32> to vector<8x128xf32>
    %10 = tpu.concatenate %9, %7 in 0 : vector<8x128xf32>, vector<8x128xf32> -> vector<16x128xf32>
    %11 = arith.truncf %10 : vector<16x128xf32> to vector<16x128xbf16>
    %c0_9 = arith.constant 0 : index
    %c0_10 = arith.constant 0 : index
    %c0_11 = arith.constant 0 : index
    %12 = vector.load %arg5[%c0_9, %c0_10, %c0_11] : memref<2x128x384xbf16, #tpu.memory_space<vmem>>, vector<1x128x384xbf16>
    %13 = vector.shape_cast %12 : vector<1x128x384xbf16> to vector<128x384xbf16>
    %cst_12 = arith.constant dense<0.000000e+00> : vector<16x384xf32>
    %14 = tpu.matmul %11, %13, %cst_12 {dimension_numbers = #tpu.dot_dimension_numbers<[1], [0], [0], [1], [0, 0, 1, 1], [], []>} : vector<16x128xbf16>, vector<128x384xbf16>, vector<16x384xf32> -> vector<16x384xf32>
    %c0_13 = arith.constant 0 : index
    %c0_14 = arith.constant 0 : index
    %c0_15 = arith.constant 0 : index
    %15 = vector.load %arg6[%c0_13, %c0_14, %c0_15] : memref<2x1x384xf32, #tpu.memory_space<vmem>>, vector<1x1x384xf32>
    %16 = vector.shape_cast %15 : vector<1x1x384xf32> to vector<1x384xf32>
    %17 = vector.broadcast %16 : vector<1x384xf32> to vector<16x384xf32>
    %18 = arith.addf %14, %17 : vector<16x384xf32>
    %19 = vector.extract_strided_slice %18 {offsets = [0, 0], sizes = [16, 16], strides = [1, 1]} : vector<16x384xf32> to vector<16x16xf32>
    %20 = vector.extract_strided_slice %18 {offsets = [0, 16], sizes = [16, 16], strides = [1, 1]} : vector<16x384xf32> to vector<16x16xf32>
    %21 = vector.extract_strided_slice %18 {offsets = [0, 32], sizes = [16, 16], strides = [1, 1]} : vector<16x384xf32> to vector<16x16xf32>
    %22 = vector.extract_strided_slice %18 {offsets = [0, 48], sizes = [16, 16], strides = [1, 1]} : vector<16x384xf32> to vector<16x16xf32>
    %23 = vector.extract_strided_slice %18 {offsets = [0, 64], sizes = [16, 16], strides = [1, 1]} : vector<16x384xf32> to vector<16x16xf32>
    %24 = vector.extract_strided_slice %18 {offsets = [0, 80], sizes = [16, 16], strides = [1, 1]} : vector<16x384xf32> to vector<16x16xf32>
    %25 = vector.extract_strided_slice %18 {offsets = [0, 96], sizes = [16, 16], strides = [1, 1]} : vector<16x384xf32> to vector<16x16xf32>
    %26 = vector.extract_strided_slice %18 {offsets = [0, 112], sizes = [16, 16], strides = [1, 1]} : vector<16x384xf32> to vector<16x16xf32>
    %27 = vector.shape_cast %19 : vector<16x16xf32> to vector<1x16x16xf32>
    %28 = vector.shape_cast %20 : vector<16x16xf32> to vector<1x16x16xf32>
    %29 = vector.shape_cast %21 : vector<16x16xf32> to vector<1x16x16xf32>
    %30 = vector.shape_cast %22 : vector<16x16xf32> to vector<1x16x16xf32>
    %31 = vector.shape_cast %23 : vector<16x16xf32> to vector<1x16x16xf32>
    %32 = vector.shape_cast %24 : vector<16x16xf32> to vector<1x16x16xf32>
    %33 = vector.shape_cast %25 : vector<16x16xf32> to vector<1x16x16xf32>
    %34 = vector.shape_cast %26 : vector<16x16xf32> to vector<1x16x16xf32>
    %35 = tpu.concatenate %27, %28, %29, %30, %31, %32, %33, %34 in 0 : vector<1x16x16xf32>, vector<1x16x16xf32>, vector<1x16x16xf32>, vector<1x16x16xf32>, vector<1x16x16xf32>, vector<1x16x16xf32>, vector<1x16x16xf32>, vector<1x16x16xf32> -> vector<8x16x16xf32>
    %36 = arith.truncf %35 : vector<8x16x16xf32> to vector<8x16x16xbf16>
    %37 = vector.extract_strided_slice %18 {offsets = [0, 128], sizes = [16, 16], strides = [1, 1]} : vector<16x384xf32> to vector<16x16xf32>
    %38 = vector.extract_strided_slice %18 {offsets = [0, 144], sizes = [16, 16], strides = [1, 1]} : vector<16x384xf32> to vector<16x16xf32>
    %39 = vector.extract_strided_slice %18 {offsets = [0, 160], sizes = [16, 16], strides = [1, 1]} : vector<16x384xf32> to vector<16x16xf32>
    %40 = vector.extract_strided_slice %18 {offsets = [0, 176], sizes = [16, 16], strides = [1, 1]} : vector<16x384xf32> to vector<16x16xf32>
    %41 = vector.extract_strided_slice %18 {offsets = [0, 192], sizes = [16, 16], strides = [1, 1]} : vector<16x384xf32> to vector<16x16xf32>
    %42 = vector.extract_strided_slice %18 {offsets = [0, 208], sizes = [16, 16], strides = [1, 1]} : vector<16x384xf32> to vector<16x16xf32>
    %43 = vector.extract_strided_slice %18 {offsets = [0, 224], sizes = [16, 16], strides = [1, 1]} : vector<16x384xf32> to vector<16x16xf32>
    %44 = vector.extract_strided_slice %18 {offsets = [0, 240], sizes = [16, 16], strides = [1, 1]} : vector<16x384xf32> to vector<16x16xf32>
    %45 = vector.shape_cast %37 : vector<16x16xf32> to vector<1x16x16xf32>
    %46 = vector.shape_cast %38 : vector<16x16xf32> to vector<1x16x16xf32>
    %47 = vector.shape_cast %39 : vector<16x16xf32> to vector<1x16x16xf32>
    %48 = vector.shape_cast %40 : vector<16x16xf32> to vector<1x16x16xf32>
    %49 = vector.shape_cast %41 : vector<16x16xf32> to vector<1x16x16xf32>
    %50 = vector.shape_cast %42 : vector<16x16xf32> to vector<1x16x16xf32>
    %51 = vector.shape_cast %43 : vector<16x16xf32> to vector<1x16x16xf32>
    %52 = vector.shape_cast %44 : vector<16x16xf32> to vector<1x16x16xf32>
    %53 = tpu.concatenate %45, %46, %47, %48, %49, %50, %51, %52 in 0 : vector<1x16x16xf32>, vector<1x16x16xf32>, vector<1x16x16xf32>, vector<1x16x16xf32>, vector<1x16x16xf32>, vector<1x16x16xf32>, vector<1x16x16xf32>, vector<1x16x16xf32> -> vector<8x16x16xf32>
    %54 = arith.truncf %53 : vector<8x16x16xf32> to vector<8x16x16xbf16>
    %55 = vector.extract_strided_slice %18 {offsets = [0, 256], sizes = [16, 16], strides = [1, 1]} : vector<16x384xf32> to vector<16x16xf32>
    %56 = vector.extract_strided_slice %18 {offsets = [0, 272], sizes = [16, 16], strides = [1, 1]} : vector<16x384xf32> to vector<16x16xf32>
    %57 = vector.extract_strided_slice %18 {offsets = [0, 288], sizes = [16, 16], strides = [1, 1]} : vector<16x384xf32> to vector<16x16xf32>
    %58 = vector.extract_strided_slice %18 {offsets = [0, 304], sizes = [16, 16], strides = [1, 1]} : vector<16x384xf32> to vector<16x16xf32>
    %59 = vector.extract_strided_slice %18 {offsets = [0, 320], sizes = [16, 16], strides = [1, 1]} : vector<16x384xf32> to vector<16x16xf32>
    %60 = vector.extract_strided_slice %18 {offsets = [0, 336], sizes = [16, 16], strides = [1, 1]} : vector<16x384xf32> to vector<16x16xf32>
    %61 = vector.extract_strided_slice %18 {offsets = [0, 352], sizes = [16, 16], strides = [1, 1]} : vector<16x384xf32> to vector<16x16xf32>
    %62 = vector.extract_strided_slice %18 {offsets = [0, 368], sizes = [16, 16], strides = [1, 1]} : vector<16x384xf32> to vector<16x16xf32>
    %63 = vector.shape_cast %55 : vector<16x16xf32> to vector<1x16x16xf32>
    %64 = vector.shape_cast %56 : vector<16x16xf32> to vector<1x16x16xf32>
    %65 = vector.shape_cast %57 : vector<16x16xf32> to vector<1x16x16xf32>
    %66 = vector.shape_cast %58 : vector<16x16xf32> to vector<1x16x16xf32>
    %67 = vector.shape_cast %59 : vector<16x16xf32> to vector<1x16x16xf32>
    %68 = vector.shape_cast %60 : vector<16x16xf32> to vector<1x16x16xf32>
    %69 = vector.shape_cast %61 : vector<16x16xf32> to vector<1x16x16xf32>
    %70 = vector.shape_cast %62 : vector<16x16xf32> to vector<1x16x16xf32>
    %71 = tpu.concatenate %63, %64, %65, %66, %67, %68, %69, %70 in 0 : vector<1x16x16xf32>, vector<1x16x16xf32>, vector<1x16x16xf32>, vector<1x16x16xf32>, vector<1x16x16xf32>, vector<1x16x16xf32>, vector<1x16x16xf32>, vector<1x16x16xf32> -> vector<8x16x16xf32>
    %72 = arith.truncf %71 : vector<8x16x16xf32> to vector<8x16x16xbf16>
    "tpu.trace_start"() <{level = 10 : i32, message = "hqe,hke->hqk"}> : () -> ()
    %cst_16 = arith.constant dense<0.000000e+00> : vector<8x16x16xf32>
    %73 = tpu.matmul %36, %54, %cst_16 {dimension_numbers = #tpu.dot_dimension_numbers<[2], [2], [1], [1], [0, 0, 0, 1, 1, 1], [0], [0]>} : vector<8x16x16xbf16>, vector<8x16x16xbf16>, vector<8x16x16xf32> -> vector<8x16x16xf32>
    "tpu.trace_stop"() : () -> ()
    %cst_17 = arith.constant 2.500000e-01 : f32
    %74 = vector.broadcast %cst_17 : f32 to vector<8x16x16xf32>
    %75 = arith.mulf %73, %74 : vector<8x16x16xf32>
    %cst_18 = arith.constant dense<0xFF800000> : vector<8x16xf32>
    %76 = vector.multi_reduction <maximumf>, %75, %cst_18 [2] : vector<8x16x16xf32> to vector<8x16xf32>
    %77 = vector.shape_cast %76 : vector<8x16xf32> to vector<8x16x1xf32>
    %78 = vector.broadcast %77 : vector<8x16x1xf32> to vector<8x16x16xf32>
    %79 = arith.subf %75, %78 : vector<8x16x16xf32>
    %80 = math.exp %79 : vector<8x16x16xf32>
    %cst_19 = arith.constant dense<0.000000e+00> : vector<8x16xf32>
    %81 = vector.multi_reduction <add>, %80, %cst_19 [2] : vector<8x16x16xf32> to vector<8x16xf32>
    %82 = vector.shape_cast %81 : vector<8x16xf32> to vector<8x16x1xf32>
    %83 = tpu.reciprocal %82 {approx = true} : vector<8x16x1xf32> -> vector<8x16x1xf32>
    %84 = vector.broadcast %83 : vector<8x16x1xf32> to vector<8x16x16xf32>
    %85 = arith.mulf %80, %84 : vector<8x16x16xf32>
    %86 = arith.truncf %85 : vector<8x16x16xf32> to vector<8x16x16xbf16>
    "tpu.trace_start"() <{level = 10 : i32, message = "hqk,hke->hqe"}> : () -> ()
    %cst_20 = arith.constant dense<0.000000e+00> : vector<8x16x16xf32>
    %87 = tpu.matmul %86, %72, %cst_20 {dimension_numbers = #tpu.dot_dimension_numbers<[2], [1], [1], [2], [0, 0, 0, 1, 1, 2], [0], [0]>} : vector<8x16x16xbf16>, vector<8x16x16xbf16>, vector<8x16x16xf32> -> vector<8x16x16xf32>
    "tpu.trace_stop"() : () -> ()
    %88 = vector.extract_strided_slice %87 {offsets = [0, 0, 0], sizes = [1, 16, 16], strides = [1, 1, 1]} : vector<8x16x16xf32> to vector<1x16x16xf32>
    %89 = vector.shape_cast %88 : vector<1x16x16xf32> to vector<16x16xf32>
    %90 = vector.extract_strided_slice %87 {offsets = [1, 0, 0], sizes = [1, 16, 16], strides = [1, 1, 1]} : vector<8x16x16xf32> to vector<1x16x16xf32>
    %91 = vector.shape_cast %90 : vector<1x16x16xf32> to vector<16x16xf32>
    %92 = vector.extract_strided_slice %87 {offsets = [2, 0, 0], sizes = [1, 16, 16], strides = [1, 1, 1]} : vector<8x16x16xf32> to vector<1x16x16xf32>
    %93 = vector.shape_cast %92 : vector<1x16x16xf32> to vector<16x16xf32>
    %94 = vector.extract_strided_slice %87 {offsets = [3, 0, 0], sizes = [1, 16, 16], strides = [1, 1, 1]} : vector<8x16x16xf32> to vector<1x16x16xf32>
    %95 = vector.shape_cast %94 : vector<1x16x16xf32> to vector<16x16xf32>
    %96 = vector.extract_strided_slice %87 {offsets = [4, 0, 0], sizes = [1, 16, 16], strides = [1, 1, 1]} : vector<8x16x16xf32> to vector<1x16x16xf32>
    %97 = vector.shape_cast %96 : vector<1x16x16xf32> to vector<16x16xf32>
    %98 = vector.extract_strided_slice %87 {offsets = [5, 0, 0], sizes = [1, 16, 16], strides = [1, 1, 1]} : vector<8x16x16xf32> to vector<1x16x16xf32>
    %99 = vector.shape_cast %98 : vector<1x16x16xf32> to vector<16x16xf32>
    %100 = vector.extract_strided_slice %87 {offsets = [6, 0, 0], sizes = [1, 16, 16], strides = [1, 1, 1]} : vector<8x16x16xf32> to vector<1x16x16xf32>
    %101 = vector.shape_cast %100 : vector<1x16x16xf32> to vector<16x16xf32>
    %102 = vector.extract_strided_slice %87 {offsets = [7, 0, 0], sizes = [1, 16, 16], strides = [1, 1, 1]} : vector<8x16x16xf32> to vector<1x16x16xf32>
    %103 = vector.shape_cast %102 : vector<1x16x16xf32> to vector<16x16xf32>
    %104 = tpu.concatenate %89, %91, %93, %95, %97, %99, %101, %103 in 1 : vector<16x16xf32>, vector<16x16xf32>, vector<16x16xf32>, vector<16x16xf32>, vector<16x16xf32>, vector<16x16xf32>, vector<16x16xf32>, vector<16x16xf32> -> vector<16x128xf32>
    %105 = arith.truncf %104 : vector<16x128xf32> to vector<16x128xbf16>
    %c0_21 = arith.constant 0 : index
    %c0_22 = arith.constant 0 : index
    %c0_23 = arith.constant 0 : index
    %106 = vector.load %arg7[%c0_21, %c0_22, %c0_23] : memref<2x128x128xbf16, #tpu.memory_space<vmem>>, vector<1x128x128xbf16>
    %107 = vector.shape_cast %106 : vector<1x128x128xbf16> to vector<128x128xbf16>
    %cst_24 = arith.constant dense<0.000000e+00> : vector<16x128xf32>
    %108 = tpu.matmul %105, %107, %cst_24 {dimension_numbers = #tpu.dot_dimension_numbers<[1], [0], [0], [1], [0, 0, 1, 1], [], []>} : vector<16x128xbf16>, vector<128x128xbf16>, vector<16x128xf32> -> vector<16x128xf32>
    %c0_25 = arith.constant 0 : index
    %c0_26 = arith.constant 0 : index
    %c0_27 = arith.constant 0 : index
    %109 = vector.load %arg8[%c0_25, %c0_26, %c0_27] : memref<2x1x128xf32, #tpu.memory_space<vmem>>, vector<1x1x128xf32>
    %110 = vector.shape_cast %109 : vector<1x1x128xf32> to vector<1x128xf32>
    %111 = vector.broadcast %110 : vector<1x128xf32> to vector<16x128xf32>
    %112 = arith.addf %108, %111 : vector<16x128xf32>
    %113 = arith.addf %10, %112 : vector<16x128xf32>
    %c0_28 = arith.constant 0 : index
    %c0_29 = arith.constant 0 : index
    %c0_30 = arith.constant 0 : index
    %114 = vector.load %arg9[%c0_28, %c0_29, %c0_30] : memref<2x1x128xf32, #tpu.memory_space<vmem>>, vector<1x1x128xf32>
    %115 = vector.shape_cast %114 : vector<1x1x128xf32> to vector<1x128xf32>
    %c0_31 = arith.constant 0 : index
    %c0_32 = arith.constant 0 : index
    %c0_33 = arith.constant 0 : index
    %116 = vector.load %arg10[%c0_31, %c0_32, %c0_33] : memref<2x1x128xf32, #tpu.memory_space<vmem>>, vector<1x1x128xf32>
    %117 = vector.shape_cast %116 : vector<1x1x128xf32> to vector<1x128xf32>
    %cst_34 = arith.constant dense<0.000000e+00> : vector<16xf32>
    %118 = vector.multi_reduction <add>, %113, %cst_34 [1] : vector<16x128xf32> to vector<16xf32>
    %119 = vector.shape_cast %118 : vector<16xf32> to vector<16x1xf32>
    %cst_35 = arith.constant 1.280000e+02 : f32
    %120 = vector.broadcast %cst_35 : f32 to vector<16x1xf32>
    %121 = arith.divf %119, %120 : vector<16x1xf32>
    %122 = vector.broadcast %121 : vector<16x1xf32> to vector<16x128xf32>
    %123 = arith.subf %113, %122 : vector<16x128xf32>
    %124 = arith.mulf %123, %123 : vector<16x128xf32>
    %cst_36 = arith.constant dense<0.000000e+00> : vector<16xf32>
    %125 = vector.multi_reduction <add>, %124, %cst_36 [1] : vector<16x128xf32> to vector<16xf32>
    %126 = vector.shape_cast %125 : vector<16xf32> to vector<16x1xf32>
    %cst_37 = arith.constant 1.280000e+02 : f32
    %127 = vector.broadcast %cst_37 : f32 to vector<16x1xf32>
    %128 = arith.divf %126, %127 : vector<16x1xf32>
    %129 = vector.broadcast %121 : vector<16x1xf32> to vector<16x128xf32>
    %130 = arith.subf %113, %129 : vector<16x128xf32>
    %cst_38 = arith.constant 9.99999974E-6 : f32
    %131 = vector.broadcast %cst_38 : f32 to vector<16x1xf32>
    %132 = arith.addf %128, %131 : vector<16x1xf32>
    %133 = math.rsqrt %132 : vector<16x1xf32>
    %134 = vector.broadcast %133 : vector<16x1xf32> to vector<16x128xf32>
    %135 = arith.mulf %130, %134 : vector<16x128xf32>
    %136 = vector.broadcast %115 : vector<1x128xf32> to vector<16x128xf32>
    %137 = arith.mulf %135, %136 : vector<16x128xf32>
    %138 = vector.broadcast %117 : vector<1x128xf32> to vector<16x128xf32>
    %139 = arith.addf %137, %138 : vector<16x128xf32>
    %140 = arith.truncf %139 : vector<16x128xf32> to vector<16x128xbf16>
    %c0_39 = arith.constant 0 : index
    %c0_40 = arith.constant 0 : index
    %c0_41 = arith.constant 0 : index
    %141 = vector.load %arg11[%c0_39, %c0_40, %c0_41] : memref<2x128x512xbf16, #tpu.memory_space<vmem>>, vector<1x128x512xbf16>
    %142 = vector.shape_cast %141 : vector<1x128x512xbf16> to vector<128x512xbf16>
    %cst_42 = arith.constant dense<0.000000e+00> : vector<16x512xf32>
    %143 = tpu.matmul %140, %142, %cst_42 {dimension_numbers = #tpu.dot_dimension_numbers<[1], [0], [0], [1], [0, 0, 1, 1], [], []>} : vector<16x128xbf16>, vector<128x512xbf16>, vector<16x512xf32> -> vector<16x512xf32>
    %c0_43 = arith.constant 0 : index
    %c0_44 = arith.constant 0 : index
    %c0_45 = arith.constant 0 : index
    %144 = vector.load %arg12[%c0_43, %c0_44, %c0_45] : memref<2x1x512xf32, #tpu.memory_space<vmem>>, vector<1x1x512xf32>
    %145 = vector.shape_cast %144 : vector<1x1x512xf32> to vector<1x512xf32>
    %146 = vector.broadcast %145 : vector<1x512xf32> to vector<16x512xf32>
    %147 = arith.addf %143, %146 : vector<16x512xf32>
    %cst_46 = arith.constant 0.000000e+00 : f32
    %148 = vector.broadcast %cst_46 : f32 to vector<16x512xf32>
    %149 = arith.maximumf %147, %148 : vector<16x512xf32>
    %150 = arith.truncf %149 : vector<16x512xf32> to vector<16x512xbf16>
    %c0_47 = arith.constant 0 : index
    %c0_48 = arith.constant 0 : index
    %c0_49 = arith.constant 0 : index
    %151 = vector.load %arg13[%c0_47, %c0_48, %c0_49] : memref<2x512x128xbf16, #tpu.memory_space<vmem>>, vector<1x512x128xbf16>
    %152 = vector.shape_cast %151 : vector<1x512x128xbf16> to vector<512x128xbf16>
    %cst_50 = arith.constant dense<0.000000e+00> : vector<16x128xf32>
    %153 = tpu.matmul %150, %152, %cst_50 {dimension_numbers = #tpu.dot_dimension_numbers<[1], [0], [0], [1], [0, 0, 1, 1], [], []>} : vector<16x512xbf16>, vector<512x128xbf16>, vector<16x128xf32> -> vector<16x128xf32>
    %c0_51 = arith.constant 0 : index
    %c0_52 = arith.constant 0 : index
    %c0_53 = arith.constant 0 : index
    %154 = vector.load %arg14[%c0_51, %c0_52, %c0_53] : memref<2x1x128xf32, #tpu.memory_space<vmem>>, vector<1x1x128xf32>
    %155 = vector.shape_cast %154 : vector<1x1x128xf32> to vector<1x128xf32>
    %156 = vector.broadcast %155 : vector<1x128xf32> to vector<16x128xf32>
    %157 = arith.addf %153, %156 : vector<16x128xf32>
    %158 = arith.addf %139, %157 : vector<16x128xf32>
    %c0_54 = arith.constant 0 : index
    %c0_55 = arith.constant 0 : index
    %c0_56 = arith.constant 0 : index
    %159 = vector.load %arg15[%c0_54, %c0_55, %c0_56] : memref<2x1x128xf32, #tpu.memory_space<vmem>>, vector<1x1x128xf32>
    %160 = vector.shape_cast %159 : vector<1x1x128xf32> to vector<1x128xf32>
    %c0_57 = arith.constant 0 : index
    %c0_58 = arith.constant 0 : index
    %c0_59 = arith.constant 0 : index
    %161 = vector.load %arg16[%c0_57, %c0_58, %c0_59] : memref<2x1x128xf32, #tpu.memory_space<vmem>>, vector<1x1x128xf32>
    %162 = vector.shape_cast %161 : vector<1x1x128xf32> to vector<1x128xf32>
    %cst_60 = arith.constant dense<0.000000e+00> : vector<16xf32>
    %163 = vector.multi_reduction <add>, %158, %cst_60 [1] : vector<16x128xf32> to vector<16xf32>
    %164 = vector.shape_cast %163 : vector<16xf32> to vector<16x1xf32>
    %cst_61 = arith.constant 1.280000e+02 : f32
    %165 = vector.broadcast %cst_61 : f32 to vector<16x1xf32>
    %166 = arith.divf %164, %165 : vector<16x1xf32>
    %167 = vector.broadcast %166 : vector<16x1xf32> to vector<16x128xf32>
    %168 = arith.subf %158, %167 : vector<16x128xf32>
    %169 = arith.mulf %168, %168 : vector<16x128xf32>
    %cst_62 = arith.constant dense<0.000000e+00> : vector<16xf32>
    %170 = vector.multi_reduction <add>, %169, %cst_62 [1] : vector<16x128xf32> to vector<16xf32>
    %171 = vector.shape_cast %170 : vector<16xf32> to vector<16x1xf32>
    %cst_63 = arith.constant 1.280000e+02 : f32
    %172 = vector.broadcast %cst_63 : f32 to vector<16x1xf32>
    %173 = arith.divf %171, %172 : vector<16x1xf32>
    %174 = vector.broadcast %166 : vector<16x1xf32> to vector<16x128xf32>
    %175 = arith.subf %158, %174 : vector<16x128xf32>
    %cst_64 = arith.constant 9.99999974E-6 : f32
    %176 = vector.broadcast %cst_64 : f32 to vector<16x1xf32>
    %177 = arith.addf %173, %176 : vector<16x1xf32>
    %178 = math.rsqrt %177 : vector<16x1xf32>
    %179 = vector.broadcast %178 : vector<16x1xf32> to vector<16x128xf32>
    %180 = arith.mulf %175, %179 : vector<16x128xf32>
    %181 = vector.broadcast %160 : vector<1x128xf32> to vector<16x128xf32>
    %182 = arith.mulf %180, %181 : vector<16x128xf32>
    %183 = vector.broadcast %162 : vector<1x128xf32> to vector<16x128xf32>
    %184 = arith.addf %182, %183 : vector<16x128xf32>
    %185 = arith.truncf %184 : vector<16x128xf32> to vector<16x128xbf16>
    %c1 = arith.constant 1 : index
    %c0_65 = arith.constant 0 : index
    %c0_66 = arith.constant 0 : index
    %186 = vector.load %arg5[%c1, %c0_65, %c0_66] : memref<2x128x384xbf16, #tpu.memory_space<vmem>>, vector<1x128x384xbf16>
    %187 = vector.shape_cast %186 : vector<1x128x384xbf16> to vector<128x384xbf16>
    %cst_67 = arith.constant dense<0.000000e+00> : vector<16x384xf32>
    %188 = tpu.matmul %185, %187, %cst_67 {dimension_numbers = #tpu.dot_dimension_numbers<[1], [0], [0], [1], [0, 0, 1, 1], [], []>} : vector<16x128xbf16>, vector<128x384xbf16>, vector<16x384xf32> -> vector<16x384xf32>
    %c1_68 = arith.constant 1 : index
    %c0_69 = arith.constant 0 : index
    %c0_70 = arith.constant 0 : index
    %189 = vector.load %arg6[%c1_68, %c0_69, %c0_70] : memref<2x1x384xf32, #tpu.memory_space<vmem>>, vector<1x1x384xf32>
    %190 = vector.shape_cast %189 : vector<1x1x384xf32> to vector<1x384xf32>
    %191 = vector.broadcast %190 : vector<1x384xf32> to vector<16x384xf32>
    %192 = arith.addf %188, %191 : vector<16x384xf32>
    %193 = vector.extract_strided_slice %192 {offsets = [0, 0], sizes = [16, 16], strides = [1, 1]} : vector<16x384xf32> to vector<16x16xf32>
    %194 = vector.extract_strided_slice %192 {offsets = [0, 16], sizes = [16, 16], strides = [1, 1]} : vector<16x384xf32> to vector<16x16xf32>
    %195 = vector.extract_strided_slice %192 {offsets = [0, 32], sizes = [16, 16], strides = [1, 1]} : vector<16x384xf32> to vector<16x16xf32>
    %196 = vector.extract_strided_slice %192 {offsets = [0, 48], sizes = [16, 16], strides = [1, 1]} : vector<16x384xf32> to vector<16x16xf32>
    %197 = vector.extract_strided_slice %192 {offsets = [0, 64], sizes = [16, 16], strides = [1, 1]} : vector<16x384xf32> to vector<16x16xf32>
    %198 = vector.extract_strided_slice %192 {offsets = [0, 80], sizes = [16, 16], strides = [1, 1]} : vector<16x384xf32> to vector<16x16xf32>
    %199 = vector.extract_strided_slice %192 {offsets = [0, 96], sizes = [16, 16], strides = [1, 1]} : vector<16x384xf32> to vector<16x16xf32>
    %200 = vector.extract_strided_slice %192 {offsets = [0, 112], sizes = [16, 16], strides = [1, 1]} : vector<16x384xf32> to vector<16x16xf32>
    %201 = vector.shape_cast %193 : vector<16x16xf32> to vector<1x16x16xf32>
    %202 = vector.shape_cast %194 : vector<16x16xf32> to vector<1x16x16xf32>
    %203 = vector.shape_cast %195 : vector<16x16xf32> to vector<1x16x16xf32>
    %204 = vector.shape_cast %196 : vector<16x16xf32> to vector<1x16x16xf32>
    %205 = vector.shape_cast %197 : vector<16x16xf32> to vector<1x16x16xf32>
    %206 = vector.shape_cast %198 : vector<16x16xf32> to vector<1x16x16xf32>
    %207 = vector.shape_cast %199 : vector<16x16xf32> to vector<1x16x16xf32>
    %208 = vector.shape_cast %200 : vector<16x16xf32> to vector<1x16x16xf32>
    %209 = tpu.concatenate %201, %202, %203, %204, %205, %206, %207, %208 in 0 : vector<1x16x16xf32>, vector<1x16x16xf32>, vector<1x16x16xf32>, vector<1x16x16xf32>, vector<1x16x16xf32>, vector<1x16x16xf32>, vector<1x16x16xf32>, vector<1x16x16xf32> -> vector<8x16x16xf32>
    %210 = arith.truncf %209 : vector<8x16x16xf32> to vector<8x16x16xbf16>
    %211 = vector.extract_strided_slice %192 {offsets = [0, 128], sizes = [16, 16], strides = [1, 1]} : vector<16x384xf32> to vector<16x16xf32>
    %212 = vector.extract_strided_slice %192 {offsets = [0, 144], sizes = [16, 16], strides = [1, 1]} : vector<16x384xf32> to vector<16x16xf32>
    %213 = vector.extract_strided_slice %192 {offsets = [0, 160], sizes = [16, 16], strides = [1, 1]} : vector<16x384xf32> to vector<16x16xf32>
    %214 = vector.extract_strided_slice %192 {offsets = [0, 176], sizes = [16, 16], strides = [1, 1]} : vector<16x384xf32> to vector<16x16xf32>
    %215 = vector.extract_strided_slice %192 {offsets = [0, 192], sizes = [16, 16], strides = [1, 1]} : vector<16x384xf32> to vector<16x16xf32>
    %216 = vector.extract_strided_slice %192 {offsets = [0, 208], sizes = [16, 16], strides = [1, 1]} : vector<16x384xf32> to vector<16x16xf32>
    %217 = vector.extract_strided_slice %192 {offsets = [0, 224], sizes = [16, 16], strides = [1, 1]} : vector<16x384xf32> to vector<16x16xf32>
    %218 = vector.extract_strided_slice %192 {offsets = [0, 240], sizes = [16, 16], strides = [1, 1]} : vector<16x384xf32> to vector<16x16xf32>
    %219 = vector.shape_cast %211 : vector<16x16xf32> to vector<1x16x16xf32>
    %220 = vector.shape_cast %212 : vector<16x16xf32> to vector<1x16x16xf32>
    %221 = vector.shape_cast %213 : vector<16x16xf32> to vector<1x16x16xf32>
    %222 = vector.shape_cast %214 : vector<16x16xf32> to vector<1x16x16xf32>
    %223 = vector.shape_cast %215 : vector<16x16xf32> to vector<1x16x16xf32>
    %224 = vector.shape_cast %216 : vector<16x16xf32> to vector<1x16x16xf32>
    %225 = vector.shape_cast %217 : vector<16x16xf32> to vector<1x16x16xf32>
    %226 = vector.shape_cast %218 : vector<16x16xf32> to vector<1x16x16xf32>
    %227 = tpu.concatenate %219, %220, %221, %222, %223, %224, %225, %226 in 0 : vector<1x16x16xf32>, vector<1x16x16xf32>, vector<1x16x16xf32>, vector<1x16x16xf32>, vector<1x16x16xf32>, vector<1x16x16xf32>, vector<1x16x16xf32>, vector<1x16x16xf32> -> vector<8x16x16xf32>
    %228 = arith.truncf %227 : vector<8x16x16xf32> to vector<8x16x16xbf16>
    %229 = vector.extract_strided_slice %192 {offsets = [0, 256], sizes = [16, 16], strides = [1, 1]} : vector<16x384xf32> to vector<16x16xf32>
    %230 = vector.extract_strided_slice %192 {offsets = [0, 272], sizes = [16, 16], strides = [1, 1]} : vector<16x384xf32> to vector<16x16xf32>
    %231 = vector.extract_strided_slice %192 {offsets = [0, 288], sizes = [16, 16], strides = [1, 1]} : vector<16x384xf32> to vector<16x16xf32>
    %232 = vector.extract_strided_slice %192 {offsets = [0, 304], sizes = [16, 16], strides = [1, 1]} : vector<16x384xf32> to vector<16x16xf32>
    %233 = vector.extract_strided_slice %192 {offsets = [0, 320], sizes = [16, 16], strides = [1, 1]} : vector<16x384xf32> to vector<16x16xf32>
    %234 = vector.extract_strided_slice %192 {offsets = [0, 336], sizes = [16, 16], strides = [1, 1]} : vector<16x384xf32> to vector<16x16xf32>
    %235 = vector.extract_strided_slice %192 {offsets = [0, 352], sizes = [16, 16], strides = [1, 1]} : vector<16x384xf32> to vector<16x16xf32>
    %236 = vector.extract_strided_slice %192 {offsets = [0, 368], sizes = [16, 16], strides = [1, 1]} : vector<16x384xf32> to vector<16x16xf32>
    %237 = vector.shape_cast %229 : vector<16x16xf32> to vector<1x16x16xf32>
    %238 = vector.shape_cast %230 : vector<16x16xf32> to vector<1x16x16xf32>
    %239 = vector.shape_cast %231 : vector<16x16xf32> to vector<1x16x16xf32>
    %240 = vector.shape_cast %232 : vector<16x16xf32> to vector<1x16x16xf32>
    %241 = vector.shape_cast %233 : vector<16x16xf32> to vector<1x16x16xf32>
    %242 = vector.shape_cast %234 : vector<16x16xf32> to vector<1x16x16xf32>
    %243 = vector.shape_cast %235 : vector<16x16xf32> to vector<1x16x16xf32>
    %244 = vector.shape_cast %236 : vector<16x16xf32> to vector<1x16x16xf32>
    %245 = tpu.concatenate %237, %238, %239, %240, %241, %242, %243, %244 in 0 : vector<1x16x16xf32>, vector<1x16x16xf32>, vector<1x16x16xf32>, vector<1x16x16xf32>, vector<1x16x16xf32>, vector<1x16x16xf32>, vector<1x16x16xf32>, vector<1x16x16xf32> -> vector<8x16x16xf32>
    %246 = arith.truncf %245 : vector<8x16x16xf32> to vector<8x16x16xbf16>
    "tpu.trace_start"() <{level = 10 : i32, message = "hqe,hke->hqk"}> : () -> ()
    %cst_71 = arith.constant dense<0.000000e+00> : vector<8x16x16xf32>
    %247 = tpu.matmul %210, %228, %cst_71 {dimension_numbers = #tpu.dot_dimension_numbers<[2], [2], [1], [1], [0, 0, 0, 1, 1, 1], [0], [0]>} : vector<8x16x16xbf16>, vector<8x16x16xbf16>, vector<8x16x16xf32> -> vector<8x16x16xf32>
    "tpu.trace_stop"() : () -> ()
    %cst_72 = arith.constant 2.500000e-01 : f32
    %248 = vector.broadcast %cst_72 : f32 to vector<8x16x16xf32>
    %249 = arith.mulf %247, %248 : vector<8x16x16xf32>
    %cst_73 = arith.constant dense<0xFF800000> : vector<8x16xf32>
    %250 = vector.multi_reduction <maximumf>, %249, %cst_73 [2] : vector<8x16x16xf32> to vector<8x16xf32>
    %251 = vector.shape_cast %250 : vector<8x16xf32> to vector<8x16x1xf32>
    %252 = vector.broadcast %251 : vector<8x16x1xf32> to vector<8x16x16xf32>
    %253 = arith.subf %249, %252 : vector<8x16x16xf32>
    %254 = math.exp %253 : vector<8x16x16xf32>
    %cst_74 = arith.constant dense<0.000000e+00> : vector<8x16xf32>
    %255 = vector.multi_reduction <add>, %254, %cst_74 [2] : vector<8x16x16xf32> to vector<8x16xf32>
    %256 = vector.shape_cast %255 : vector<8x16xf32> to vector<8x16x1xf32>
    %257 = tpu.reciprocal %256 {approx = true} : vector<8x16x1xf32> -> vector<8x16x1xf32>
    %258 = vector.broadcast %257 : vector<8x16x1xf32> to vector<8x16x16xf32>
    %259 = arith.mulf %254, %258 : vector<8x16x16xf32>
    %260 = arith.truncf %259 : vector<8x16x16xf32> to vector<8x16x16xbf16>
    "tpu.trace_start"() <{level = 10 : i32, message = "hqk,hke->hqe"}> : () -> ()
    %cst_75 = arith.constant dense<0.000000e+00> : vector<8x16x16xf32>
    %261 = tpu.matmul %260, %246, %cst_75 {dimension_numbers = #tpu.dot_dimension_numbers<[2], [1], [1], [2], [0, 0, 0, 1, 1, 2], [0], [0]>} : vector<8x16x16xbf16>, vector<8x16x16xbf16>, vector<8x16x16xf32> -> vector<8x16x16xf32>
    "tpu.trace_stop"() : () -> ()
    %262 = vector.extract_strided_slice %261 {offsets = [0, 0, 0], sizes = [1, 16, 16], strides = [1, 1, 1]} : vector<8x16x16xf32> to vector<1x16x16xf32>
    %263 = vector.shape_cast %262 : vector<1x16x16xf32> to vector<16x16xf32>
    %264 = vector.extract_strided_slice %261 {offsets = [1, 0, 0], sizes = [1, 16, 16], strides = [1, 1, 1]} : vector<8x16x16xf32> to vector<1x16x16xf32>
    %265 = vector.shape_cast %264 : vector<1x16x16xf32> to vector<16x16xf32>
    %266 = vector.extract_strided_slice %261 {offsets = [2, 0, 0], sizes = [1, 16, 16], strides = [1, 1, 1]} : vector<8x16x16xf32> to vector<1x16x16xf32>
    %267 = vector.shape_cast %266 : vector<1x16x16xf32> to vector<16x16xf32>
    %268 = vector.extract_strided_slice %261 {offsets = [3, 0, 0], sizes = [1, 16, 16], strides = [1, 1, 1]} : vector<8x16x16xf32> to vector<1x16x16xf32>
    %269 = vector.shape_cast %268 : vector<1x16x16xf32> to vector<16x16xf32>
    %270 = vector.extract_strided_slice %261 {offsets = [4, 0, 0], sizes = [1, 16, 16], strides = [1, 1, 1]} : vector<8x16x16xf32> to vector<1x16x16xf32>
    %271 = vector.shape_cast %270 : vector<1x16x16xf32> to vector<16x16xf32>
    %272 = vector.extract_strided_slice %261 {offsets = [5, 0, 0], sizes = [1, 16, 16], strides = [1, 1, 1]} : vector<8x16x16xf32> to vector<1x16x16xf32>
    %273 = vector.shape_cast %272 : vector<1x16x16xf32> to vector<16x16xf32>
    %274 = vector.extract_strided_slice %261 {offsets = [6, 0, 0], sizes = [1, 16, 16], strides = [1, 1, 1]} : vector<8x16x16xf32> to vector<1x16x16xf32>
    %275 = vector.shape_cast %274 : vector<1x16x16xf32> to vector<16x16xf32>
    %276 = vector.extract_strided_slice %261 {offsets = [7, 0, 0], sizes = [1, 16, 16], strides = [1, 1, 1]} : vector<8x16x16xf32> to vector<1x16x16xf32>
    %277 = vector.shape_cast %276 : vector<1x16x16xf32> to vector<16x16xf32>
    %278 = tpu.concatenate %263, %265, %267, %269, %271, %273, %275, %277 in 1 : vector<16x16xf32>, vector<16x16xf32>, vector<16x16xf32>, vector<16x16xf32>, vector<16x16xf32>, vector<16x16xf32>, vector<16x16xf32>, vector<16x16xf32> -> vector<16x128xf32>
    %279 = arith.truncf %278 : vector<16x128xf32> to vector<16x128xbf16>
    %c1_76 = arith.constant 1 : index
    %c0_77 = arith.constant 0 : index
    %c0_78 = arith.constant 0 : index
    %280 = vector.load %arg7[%c1_76, %c0_77, %c0_78] : memref<2x128x128xbf16, #tpu.memory_space<vmem>>, vector<1x128x128xbf16>
    %281 = vector.shape_cast %280 : vector<1x128x128xbf16> to vector<128x128xbf16>
    %cst_79 = arith.constant dense<0.000000e+00> : vector<16x128xf32>
    %282 = tpu.matmul %279, %281, %cst_79 {dimension_numbers = #tpu.dot_dimension_numbers<[1], [0], [0], [1], [0, 0, 1, 1], [], []>} : vector<16x128xbf16>, vector<128x128xbf16>, vector<16x128xf32> -> vector<16x128xf32>
    %c1_80 = arith.constant 1 : index
    %c0_81 = arith.constant 0 : index
    %c0_82 = arith.constant 0 : index
    %283 = vector.load %arg8[%c1_80, %c0_81, %c0_82] : memref<2x1x128xf32, #tpu.memory_space<vmem>>, vector<1x1x128xf32>
    %284 = vector.shape_cast %283 : vector<1x1x128xf32> to vector<1x128xf32>
    %285 = vector.broadcast %284 : vector<1x128xf32> to vector<16x128xf32>
    %286 = arith.addf %282, %285 : vector<16x128xf32>
    %287 = arith.addf %184, %286 : vector<16x128xf32>
    %c1_83 = arith.constant 1 : index
    %c0_84 = arith.constant 0 : index
    %c0_85 = arith.constant 0 : index
    %288 = vector.load %arg9[%c1_83, %c0_84, %c0_85] : memref<2x1x128xf32, #tpu.memory_space<vmem>>, vector<1x1x128xf32>
    %289 = vector.shape_cast %288 : vector<1x1x128xf32> to vector<1x128xf32>
    %c1_86 = arith.constant 1 : index
    %c0_87 = arith.constant 0 : index
    %c0_88 = arith.constant 0 : index
    %290 = vector.load %arg10[%c1_86, %c0_87, %c0_88] : memref<2x1x128xf32, #tpu.memory_space<vmem>>, vector<1x1x128xf32>
    %291 = vector.shape_cast %290 : vector<1x1x128xf32> to vector<1x128xf32>
    %cst_89 = arith.constant dense<0.000000e+00> : vector<16xf32>
    %292 = vector.multi_reduction <add>, %287, %cst_89 [1] : vector<16x128xf32> to vector<16xf32>
    %293 = vector.shape_cast %292 : vector<16xf32> to vector<16x1xf32>
    %cst_90 = arith.constant 1.280000e+02 : f32
    %294 = vector.broadcast %cst_90 : f32 to vector<16x1xf32>
    %295 = arith.divf %293, %294 : vector<16x1xf32>
    %296 = vector.broadcast %295 : vector<16x1xf32> to vector<16x128xf32>
    %297 = arith.subf %287, %296 : vector<16x128xf32>
    %298 = arith.mulf %297, %297 : vector<16x128xf32>
    %cst_91 = arith.constant dense<0.000000e+00> : vector<16xf32>
    %299 = vector.multi_reduction <add>, %298, %cst_91 [1] : vector<16x128xf32> to vector<16xf32>
    %300 = vector.shape_cast %299 : vector<16xf32> to vector<16x1xf32>
    %cst_92 = arith.constant 1.280000e+02 : f32
    %301 = vector.broadcast %cst_92 : f32 to vector<16x1xf32>
    %302 = arith.divf %300, %301 : vector<16x1xf32>
    %303 = vector.broadcast %295 : vector<16x1xf32> to vector<16x128xf32>
    %304 = arith.subf %287, %303 : vector<16x128xf32>
    %cst_93 = arith.constant 9.99999974E-6 : f32
    %305 = vector.broadcast %cst_93 : f32 to vector<16x1xf32>
    %306 = arith.addf %302, %305 : vector<16x1xf32>
    %307 = math.rsqrt %306 : vector<16x1xf32>
    %308 = vector.broadcast %307 : vector<16x1xf32> to vector<16x128xf32>
    %309 = arith.mulf %304, %308 : vector<16x128xf32>
    %310 = vector.broadcast %289 : vector<1x128xf32> to vector<16x128xf32>
    %311 = arith.mulf %309, %310 : vector<16x128xf32>
    %312 = vector.broadcast %291 : vector<1x128xf32> to vector<16x128xf32>
    %313 = arith.addf %311, %312 : vector<16x128xf32>
    %314 = arith.truncf %313 : vector<16x128xf32> to vector<16x128xbf16>
    %c1_94 = arith.constant 1 : index
    %c0_95 = arith.constant 0 : index
    %c0_96 = arith.constant 0 : index
    %315 = vector.load %arg11[%c1_94, %c0_95, %c0_96] : memref<2x128x512xbf16, #tpu.memory_space<vmem>>, vector<1x128x512xbf16>
    %316 = vector.shape_cast %315 : vector<1x128x512xbf16> to vector<128x512xbf16>
    %cst_97 = arith.constant dense<0.000000e+00> : vector<16x512xf32>
    %317 = tpu.matmul %314, %316, %cst_97 {dimension_numbers = #tpu.dot_dimension_numbers<[1], [0], [0], [1], [0, 0, 1, 1], [], []>} : vector<16x128xbf16>, vector<128x512xbf16>, vector<16x512xf32> -> vector<16x512xf32>
    %c1_98 = arith.constant 1 : index
    %c0_99 = arith.constant 0 : index
    %c0_100 = arith.constant 0 : index
    %318 = vector.load %arg12[%c1_98, %c0_99, %c0_100] : memref<2x1x512xf32, #tpu.memory_space<vmem>>, vector<1x1x512xf32>
    %319 = vector.shape_cast %318 : vector<1x1x512xf32> to vector<1x512xf32>
    %320 = vector.broadcast %319 : vector<1x512xf32> to vector<16x512xf32>
    %321 = arith.addf %317, %320 : vector<16x512xf32>
    %cst_101 = arith.constant 0.000000e+00 : f32
    %322 = vector.broadcast %cst_101 : f32 to vector<16x512xf32>
    %323 = arith.maximumf %321, %322 : vector<16x512xf32>
    %324 = arith.truncf %323 : vector<16x512xf32> to vector<16x512xbf16>
    %c1_102 = arith.constant 1 : index
    %c0_103 = arith.constant 0 : index
    %c0_104 = arith.constant 0 : index
    %325 = vector.load %arg13[%c1_102, %c0_103, %c0_104] : memref<2x512x128xbf16, #tpu.memory_space<vmem>>, vector<1x512x128xbf16>
    %326 = vector.shape_cast %325 : vector<1x512x128xbf16> to vector<512x128xbf16>
    %cst_105 = arith.constant dense<0.000000e+00> : vector<16x128xf32>
    %327 = tpu.matmul %324, %326, %cst_105 {dimension_numbers = #tpu.dot_dimension_numbers<[1], [0], [0], [1], [0, 0, 1, 1], [], []>} : vector<16x512xbf16>, vector<512x128xbf16>, vector<16x128xf32> -> vector<16x128xf32>
    %c1_106 = arith.constant 1 : index
    %c0_107 = arith.constant 0 : index
    %c0_108 = arith.constant 0 : index
    %328 = vector.load %arg14[%c1_106, %c0_107, %c0_108] : memref<2x1x128xf32, #tpu.memory_space<vmem>>, vector<1x1x128xf32>
    %329 = vector.shape_cast %328 : vector<1x1x128xf32> to vector<1x128xf32>
    %330 = vector.broadcast %329 : vector<1x128xf32> to vector<16x128xf32>
    %331 = arith.addf %327, %330 : vector<16x128xf32>
    %332 = arith.addf %313, %331 : vector<16x128xf32>
    %c1_109 = arith.constant 1 : index
    %c0_110 = arith.constant 0 : index
    %c0_111 = arith.constant 0 : index
    %333 = vector.load %arg15[%c1_109, %c0_110, %c0_111] : memref<2x1x128xf32, #tpu.memory_space<vmem>>, vector<1x1x128xf32>
    %334 = vector.shape_cast %333 : vector<1x1x128xf32> to vector<1x128xf32>
    %c1_112 = arith.constant 1 : index
    %c0_113 = arith.constant 0 : index
    %c0_114 = arith.constant 0 : index
    %335 = vector.load %arg16[%c1_112, %c0_113, %c0_114] : memref<2x1x128xf32, #tpu.memory_space<vmem>>, vector<1x1x128xf32>
    %336 = vector.shape_cast %335 : vector<1x1x128xf32> to vector<1x128xf32>
    %cst_115 = arith.constant dense<0.000000e+00> : vector<16xf32>
    %337 = vector.multi_reduction <add>, %332, %cst_115 [1] : vector<16x128xf32> to vector<16xf32>
    %338 = vector.shape_cast %337 : vector<16xf32> to vector<16x1xf32>
    %cst_116 = arith.constant 1.280000e+02 : f32
    %339 = vector.broadcast %cst_116 : f32 to vector<16x1xf32>
    %340 = arith.divf %338, %339 : vector<16x1xf32>
    %341 = vector.broadcast %340 : vector<16x1xf32> to vector<16x128xf32>
    %342 = arith.subf %332, %341 : vector<16x128xf32>
    %343 = arith.mulf %342, %342 : vector<16x128xf32>
    %cst_117 = arith.constant dense<0.000000e+00> : vector<16xf32>
    %344 = vector.multi_reduction <add>, %343, %cst_117 [1] : vector<16x128xf32> to vector<16xf32>
    %345 = vector.shape_cast %344 : vector<16xf32> to vector<16x1xf32>
    %cst_118 = arith.constant 1.280000e+02 : f32
    %346 = vector.broadcast %cst_118 : f32 to vector<16x1xf32>
    %347 = arith.divf %345, %346 : vector<16x1xf32>
    %348 = vector.broadcast %340 : vector<16x1xf32> to vector<16x128xf32>
    %349 = arith.subf %332, %348 : vector<16x128xf32>
    %cst_119 = arith.constant 9.99999974E-6 : f32
    %350 = vector.broadcast %cst_119 : f32 to vector<16x1xf32>
    %351 = arith.addf %347, %350 : vector<16x1xf32>
    %352 = math.rsqrt %351 : vector<16x1xf32>
    %353 = vector.broadcast %352 : vector<16x1xf32> to vector<16x128xf32>
    %354 = arith.mulf %349, %353 : vector<16x128xf32>
    %355 = vector.broadcast %334 : vector<1x128xf32> to vector<16x128xf32>
    %356 = arith.mulf %354, %355 : vector<16x128xf32>
    %357 = vector.broadcast %336 : vector<1x128xf32> to vector<16x128xf32>
    %358 = arith.addf %356, %357 : vector<16x128xf32>
    %359 = vector.extract_strided_slice %358 {offsets = [0, 0], sizes = [1, 128], strides = [1, 1]} : vector<16x128xf32> to vector<1x128xf32>
    %c0_120 = arith.constant 0 : index
    %c0_121 = arith.constant 0 : index
    %360 = vector.load %arg17[%c0_120, %c0_121] : memref<1x128xf32, #tpu.memory_space<vmem>>, vector<1x128xf32>
    %361 = arith.mulf %359, %360 : vector<1x128xf32>
    %cst_122 = arith.constant dense<0.000000e+00> : vector<1xf32>
    %362 = vector.multi_reduction <add>, %361, %cst_122 [1] : vector<1x128xf32> to vector<1xf32>
    %363 = vector.shape_cast %362 : vector<1xf32> to vector<1x1xf32>
    %c0_123 = arith.constant 0 : index
    %c0_124 = arith.constant 0 : index
    %364 = vector.load %arg18[%c0_123, %c0_124] : memref<1x1xf32, #tpu.memory_space<vmem>>, vector<1x1xf32>
    %365 = arith.addf %363, %364 : vector<1x1xf32>
    %366 = vector.shape_cast %365 : vector<1x1xf32> to vector<1x1x1xf32>
    %c0_125 = arith.constant 0 : index
    %c0_126 = arith.constant 0 : index
    %c0_127 = arith.constant 0 : index
    %367 = vector.load %arg19[%c0_125, %c0_126, %c0_127] : memref<1x1x1xf32, #tpu.memory_space<vmem>>, vector<1x1x1xf32>
    tpu.vector_store %arg19[%c0_125, %c0_126, %c0_127], %366 {strides = array<i32>} : memref<1x1x1xf32, #tpu.memory_space<vmem>>, vector<1x1x1xf32>,
    return
  }
  func.func @transform_0(%arg0: i32) -> (i32, i32, i32) {
    %c0_i32 = arith.constant 0 : i32
    %c0_i32_0 = arith.constant 0 : i32
    %c0_i32_1 = arith.constant 0 : i32
    return %arg0, %c0_i32, %c0_i32_0 : i32, i32, i32
  }
  func.func @transform_1(%arg0: i32) -> (i32, i32, i32) {
    %c0_i32 = arith.constant 0 : i32
    %c0_i32_0 = arith.constant 0 : i32
    %c0_i32_1 = arith.constant 0 : i32
    return %arg0, %c0_i32, %c0_i32_0 : i32, i32, i32
  }
  func.func @transform_2(%arg0: i32) -> (i32, i32) {
    %c0_i32 = arith.constant 0 : i32
    %c0_i32_0 = arith.constant 0 : i32
    %c0_i32_1 = arith.constant 0 : i32
    return %c0_i32, %c0_i32_0 : i32, i32
  }
  func.func @transform_3(%arg0: i32) -> (i32, i32) {
    %c0_i32 = arith.constant 0 : i32
    %c0_i32_0 = arith.constant 0 : i32
    %c0_i32_1 = arith.constant 0 : i32
    return %c0_i32, %c0_i32_0 : i32, i32
  }
  func.func @transform_4(%arg0: i32) -> (i32, i32, i32) {
    %c0_i32 = arith.constant 0 : i32
    %c0_i32_0 = arith.constant 0 : i32
    %c0_i32_1 = arith.constant 0 : i32
    %c0_i32_2 = arith.constant 0 : i32
    return %c0_i32, %c0_i32_0, %c0_i32_1 : i32, i32, i32
  }
  func.func @transform_5(%arg0: i32) -> (i32, i32, i32) {
    %c0_i32 = arith.constant 0 : i32
    %c0_i32_0 = arith.constant 0 : i32
    %c0_i32_1 = arith.constant 0 : i32
    %c0_i32_2 = arith.constant 0 : i32
    return %c0_i32, %c0_i32_0, %c0_i32_1 : i32, i32, i32
  }
  func.func @transform_6(%arg0: i32) -> (i32, i32, i32) {
    %c0_i32 = arith.constant 0 : i32
    %c0_i32_0 = arith.constant 0 : i32
    %c0_i32_1 = arith.constant 0 : i32
    %c0_i32_2 = arith.constant 0 : i32
    return %c0_i32, %c0_i32_0, %c0_i32_1 : i32, i32, i32
  }
  func.func @transform_7(%arg0: i32) -> (i32, i32, i32) {
    %c0_i32 = arith.constant 0 : i32
    %c0_i32_0 = arith.constant 0 : i32
    %c0_i32_1 = arith.constant 0 : i32
    %c0_i32_2 = arith.constant 0 : i32
    return %c0_i32, %c0_i32_0, %c0_i32_1 : i32, i32, i32
  }
  func.func @transform_8(%arg0: i32) -> (i32, i32, i32) {
    %c0_i32 = arith.constant 0 : i32
    %c0_i32_0 = arith.constant 0 : i32
    %c0_i32_1 = arith.constant 0 : i32
    %c0_i32_2 = arith.constant 0 : i32
    return %c0_i32, %c0_i32_0, %c0_i32_1 : i32, i32, i32
  }
  func.func @transform_9(%arg0: i32) -> (i32, i32, i32) {
    %c0_i32 = arith.constant 0 : i32
    %c0_i32_0 = arith.constant 0 : i32
    %c0_i32_1 = arith.constant 0 : i32
    %c0_i32_2 = arith.constant 0 : i32
    return %c0_i32, %c0_i32_0, %c0_i32_1 : i32, i32, i32
  }
  func.func @transform_10(%arg0: i32) -> (i32, i32, i32) {
    %c0_i32 = arith.constant 0 : i32
    %c0_i32_0 = arith.constant 0 : i32
    %c0_i32_1 = arith.constant 0 : i32
    %c0_i32_2 = arith.constant 0 : i32
    return %c0_i32, %c0_i32_0, %c0_i32_1 : i32, i32, i32
  }
  func.func @transform_11(%arg0: i32) -> (i32, i32, i32) {
    %c0_i32 = arith.constant 0 : i32
    %c0_i32_0 = arith.constant 0 : i32
    %c0_i32_1 = arith.constant 0 : i32
    %c0_i32_2 = arith.constant 0 : i32
    return %c0_i32, %c0_i32_0, %c0_i32_1 : i32, i32, i32
  }
  func.func @transform_12(%arg0: i32) -> (i32, i32, i32) {
    %c0_i32 = arith.constant 0 : i32
    %c0_i32_0 = arith.constant 0 : i32
    %c0_i32_1 = arith.constant 0 : i32
    %c0_i32_2 = arith.constant 0 : i32
    return %c0_i32, %c0_i32_0, %c0_i32_1 : i32, i32, i32
  }
  func.func @transform_13(%arg0: i32) -> (i32, i32, i32) {
    %c0_i32 = arith.constant 0 : i32
    %c0_i32_0 = arith.constant 0 : i32
    %c0_i32_1 = arith.constant 0 : i32
    %c0_i32_2 = arith.constant 0 : i32
    return %c0_i32, %c0_i32_0, %c0_i32_1 : i32, i32, i32
  }
  func.func @transform_14(%arg0: i32) -> (i32, i32, i32) {
    %c0_i32 = arith.constant 0 : i32
    %c0_i32_0 = arith.constant 0 : i32
    %c0_i32_1 = arith.constant 0 : i32
    %c0_i32_2 = arith.constant 0 : i32
    return %c0_i32, %c0_i32_0, %c0_i32_1 : i32, i32, i32
  }
  func.func @transform_15(%arg0: i32) -> (i32, i32, i32) {
    %c0_i32 = arith.constant 0 : i32
    %c0_i32_0 = arith.constant 0 : i32
    %c0_i32_1 = arith.constant 0 : i32
    %c0_i32_2 = arith.constant 0 : i32
    return %c0_i32, %c0_i32_0, %c0_i32_1 : i32, i32, i32
  }
  func.func @transform_16(%arg0: i32) -> (i32, i32) {
    %c0_i32 = arith.constant 0 : i32
    %c0_i32_0 = arith.constant 0 : i32
    %c0_i32_1 = arith.constant 0 : i32
    return %c0_i32, %c0_i32_0 : i32, i32
  }
  func.func @transform_17(%arg0: i32) -> (i32, i32) {
    %c0_i32 = arith.constant 0 : i32
    %c0_i32_0 = arith.constant 0 : i32
    %c0_i32_1 = arith.constant 0 : i32
    return %c0_i32, %c0_i32_0 : i32, i32
  }
  func.func @transform_18(%arg0: i32) -> (i32, i32, i32) {
    %c0_i32 = arith.constant 0 : i32
    %c0_i32_0 = arith.constant 0 : i32
    %c0_i32_1 = arith.constant 0 : i32
    return %arg0, %c0_i32, %c0_i32_0 : i32, i32, i32
  }
}

</mosaic_0001>

<llo_original>
// kernel: cross_modal_reranker.1
$region0: #{cross_modal_reranker.1}
  #allocation0 [shape = 'u32[]', space=smem, size = 0x4, offset = 0x4, fixed_abs, tag = 'smem constant byte address 0x4 - core index']
  #allocation1 [shape = 'u32[72,128]{1,0:T(1,128)}', space=vmem, size = 0x9000, scoped, tag = 'internal scratch']
  #allocation2 [shape = 'f32[1,1]{1,0:T(1,128)S(1)}', space=vmem, size = 0x200, scoped, tag = 'scoped memory for cross_modal_reranker.1']
  %s0 = inlined_call_operand.vmem [shape: f32[2,8,128], index: 0, kind: input, shape index: {}]
  %s1 = inlined_call_operand.vmem [shape: f32[2,8,64], index: 1, kind: input, shape index: {}]
  %s2 = inlined_call_operand.vmem [shape: bf16[64,128], index: 2, kind: input, shape index: {}]
  %s3 = inlined_call_operand.vmem [shape: f32[1,128], index: 3, kind: input, shape index: {}]
  %s4 = inlined_call_operand.vmem [shape: bf16[2,128,384], index: 4, kind: input, shape index: {}]
  %s5 = inlined_call_operand.vmem [shape: f32[2,1,384], index: 5, kind: input, shape index: {}]
  %s6 = inlined_call_operand.vmem [shape: bf16[2,128,128], index: 6, kind: input, shape index: {}]
  %s7 = inlined_call_operand.vmem [shape: f32[2,1,128], index: 7, kind: input, shape index: {}]
  %s8 = inlined_call_operand.vmem [shape: f32[2,1,128], index: 8, kind: input, shape index: {}]
  %s9 = inlined_call_operand.vmem [shape: f32[2,1,128], index: 9, kind: input, shape index: {}]
  %s10 = inlined_call_operand.vmem [shape: bf16[2,128,512], index: 10, kind: input, shape index: {}]
  %s11 = inlined_call_operand.vmem [shape: f32[2,1,512], index: 11, kind: input, shape index: {}]
  %s12 = inlined_call_operand.vmem [shape: bf16[2,512,128], index: 12, kind: input, shape index: {}]
  %s13 = inlined_call_operand.vmem [shape: f32[2,1,128], index: 13, kind: input, shape index: {}]
  %s14 = inlined_call_operand.vmem [shape: f32[2,1,128], index: 14, kind: input, shape index: {}]
  %s15 = inlined_call_operand.vmem [shape: f32[2,1,128], index: 15, kind: input, shape index: {}]
  %s16 = inlined_call_operand.vmem [shape: f32[1,128], index: 16, kind: input, shape index: {}]
  %s17 = inlined_call_operand.<no memory space> [shape: f32[1,1], index: 17, kind: input, shape index: {}]
  %s18 = inlined_call_operand.vmem [shape: f32[2,1,1], index: 18, kind: output, shape index: {}]
  %s19 = sld [smem:[#allocation0]]
  $region105: #{cross_modal_reranker.1} parent=0
    _
  %s21 = ssub.s32 1, %s19
  %s22 = scalar_select 0, %s21, %s19
  %v23 = vstv %s17
  %24 = vst [vmem:[#allocation2] sm:$0x1] %v23
  loop: start=0, step=1, limit=4
  $region2: #{cross_modal_reranker.1} parent=0 // loop_pre_header
    _
  $region3: #{cross_modal_reranker.1} parent=0 // loop_header
    %s26 = sphi 0, %s30
    %p27 = scmp.ge.s32.totalorder %s26, 4
    %s36 = sphi 0, %s38
    %s39 = sphi 0, %s36
    %s40 = sphi 0, %s39
    %s56 = sphi 0, %s40
    %s62 = sphi 0, %s64
    %s65 = sphi 0, %s62
    %s66 = sphi 0, %s65
    %s82 = sphi 0, %s66
    %s86 = sphi 0, %s86
    %s88 = sphi 0, %s86
    %s89 = sphi 0, %s88
    %s103 = sphi 0, %s89
    %s107 = sphi 0, %s107
    %s109 = sphi 0, %s107
    %s110 = sphi 0, %s109
    %s124 = sphi 0, %s110
    %s128 = sphi 0, %s128
    %s130 = sphi 0, %s128
    %s131 = sphi 0, %s130
    %s145 = sphi 0, %s131
    %s149 = sphi 0, %s149
    %s151 = sphi 0, %s149
    %s152 = sphi 0, %s151
    %s166 = sphi 0, %s152
    %s170 = sphi 0, %s170
    %s172 = sphi 0, %s170
    %s173 = sphi 0, %s172
    %s187 = sphi 0, %s173
    %s191 = sphi 0, %s191
    %s193 = sphi 0, %s191
    %s194 = sphi 0, %s193
    %s208 = sphi 0, %s194
    %s212 = sphi 0, %s212
    %s214 = sphi 0, %s212
    %s215 = sphi 0, %s214
    %s229 = sphi 0, %s215
    %s233 = sphi 0, %s233
    %s235 = sphi 0, %s233
    %s236 = sphi 0, %s235
    %s250 = sphi 0, %s236
    %s254 = sphi 0, %s254
    %s256 = sphi 0, %s254
    %s257 = sphi 0, %s256
    %s271 = sphi 0, %s257
    %s275 = sphi 0, %s275
    %s277 = sphi 0, %s275
    %s278 = sphi 0, %s277
    %s292 = sphi 0, %s278
    %s296 = sphi 0, %s296
    %s298 = sphi 0, %s296
    %s299 = sphi 0, %s298
    %s313 = sphi 0, %s299
    %s317 = sphi 0, %s317
    %s319 = sphi 0, %s317
    %s320 = sphi 0, %s319
    %s334 = sphi 0, %s320
    %s338 = sphi 0, %s338
    %s340 = sphi 0, %s338
    %s341 = sphi 0, %s340
    %s355 = sphi 0, %s341
    %s359 = sphi 0, %s359
    %s361 = sphi 0, %s359
    %s362 = sphi 0, %s361
    %s376 = sphi 0, %s362
    %s380 = sphi 0, %s380
    %s382 = sphi 0, %s380
    %s383 = sphi 0, %s382
    %s397 = sphi 0, %s383
    %s401 = sphi 0, %s401
    %s403 = sphi 0, %s401
    %s404 = sphi 0, %s403
    %s418 = sphi 0, %s404
    %s424 = sphi 0, %s426
    %s427 = sphi 0, %s424
    %s428 = sphi 0, %s427
    %s444 = sphi 0, %s428
  $region4: #{cross_modal_reranker.1} parent=0 // loop_header_branch
    %29 = sbr.rel (%p27) target = $region8
  $region5: #{cross_modal_reranker.1} parent=0 // loop_body
    %s31 = ssub.s32 %s26, 1
    %s32 = ssub.s32 %s26, 2
    %s33 = sadd.s32 %s26, 1
    %s34 = ssub.s32 %s26, %s33
    %p35 = scmp.eq.s32.totalorder %s34, 0
    %s37 = sadd.s32 %s36, 1
    %s38 = scalar_select %p35, %s36, %s37
    %p41 = pneg %p35
    %p42 = scmp.eq.s32.totalorder %s26, 1
    %p43 = por %p41, %p42
    %p44 = scmp.ne.s32.totalorder %s36, %s39
    %p45 = scmp.eq.s32.totalorder %s26, 0
    %p46 = por %p44, %p45
    %p47 = scmp.ne.s32.totalorder %s36, %s39
    %p48 = scmp.eq.s32.totalorder %s31, 1
    %p49 = por %p47, %p48
    %p50 = scmp.ne.s32.totalorder %s39, %s40
    %p51 = scmp.eq.s32.totalorder %s31, 0
    %p52 = por %p50, %p51
    %p53 = scmp.ne.s32.totalorder %s39, %s40
    %p54 = scmp.eq.s32.totalorder %s32, 1
    %p55 = por %p53, %p54
    %p57 = scmp.ne.s32.totalorder %s40, %s56
    %p58 = scmp.eq.s32.totalorder %s32, 0
    %p59 = por %p57, %p58
    %s60 = ssub.s32 %s26, %s33
    %p61 = scmp.eq.s32.totalorder %s60, 0
    %s63 = sadd.s32 %s62, 1
    %s64 = scalar_select %p61, %s62, %s63
    %p67 = pneg %p61
    %p68 = scmp.eq.s32.totalorder %s26, 1
    %p69 = por %p67, %p68
    %p70 = scmp.ne.s32.totalorder %s62, %s65
    %p71 = scmp.eq.s32.totalorder %s26, 0
    %p72 = por %p70, %p71
    %p73 = scmp.ne.s32.totalorder %s62, %s65
    %p74 = scmp.eq.s32.totalorder %s31, 1
    %p75 = por %p73, %p74
    %p76 = scmp.ne.s32.totalorder %s65, %s66
    %p77 = scmp.eq.s32.totalorder %s31, 0
    %p78 = por %p76, %p77
    %p79 = scmp.ne.s32.totalorder %s65, %s66
    %p80 = scmp.eq.s32.totalorder %s32, 1
    %p81 = por %p79, %p80
    %p83 = scmp.ne.s32.totalorder %s66, %s82
    %p84 = scmp.eq.s32.totalorder %s32, 0
    %p85 = por %p83, %p84
    %s87 = sadd.s32 %s86, 1
    %p90 = scmp.eq.s32.totalorder %s26, 1
    %p91 = scmp.ne.s32.totalorder %s86, %s88
    %p92 = scmp.eq.s32.totalorder %s26, 0
    %p93 = por %p91, %p92
    %p94 = scmp.ne.s32.totalorder %s86, %s88
    %p95 = scmp.eq.s32.totalorder %s31, 1
    %p96 = por %p94, %p95
    %p97 = scmp.ne.s32.totalorder %s88, %s89
    %p98 = scmp.eq.s32.totalorder %s31, 0
    %p99 = por %p97, %p98
    %p100 = scmp.ne.s32.totalorder %s88, %s89
    %p101 = scmp.eq.s32.totalorder %s32, 1
    %p102 = por %p100, %p101
    %p104 = scmp.ne.s32.totalorder %s89, %s103
    %p105 = scmp.eq.s32.totalorder %s32, 0
    %p106 = por %p104, %p105
    %s108 = sadd.s32 %s107, 1
    %p111 = scmp.eq.s32.totalorder %s26, 1
    %p112 = scmp.ne.s32.totalorder %s107, %s109
    %p113 = scmp.eq.s32.totalorder %s26, 0
    %p114 = por %p112, %p113
    %p115 = scmp.ne.s32.totalorder %s107, %s109
    %p116 = scmp.eq.s32.totalorder %s31, 1
    %p117 = por %p115, %p116
    %p118 = scmp.ne.s32.totalorder %s109, %s110
    %p119 = scmp.eq.s32.totalorder %s31, 0
    %p120 = por %p118, %p119
    %p121 = scmp.ne.s32.totalorder %s109, %s110
    %p122 = scmp.eq.s32.totalorder %s32, 1
    %p123 = por %p121, %p122
    %p125 = scmp.ne.s32.totalorder %s110, %s124
    %p126 = scmp.eq.s32.totalorder %s32, 0
    %p127 = por %p125, %p126
    %s129 = sadd.s32 %s128, 1
    %p132 = scmp.eq.s32.totalorder %s26, 1
    %p133 = scmp.ne.s32.totalorder %s128, %s130
    %p134 = scmp.eq.s32.totalorder %s26, 0
    %p135 = por %p133, %p134
    %p136 = scmp.ne.s32.totalorder %s128, %s130
    %p137 = scmp.eq.s32.totalorder %s31, 1
    %p138 = por %p136, %p137
    %p139 = scmp.ne.s32.totalorder %s130, %s131
    %p140 = scmp.eq.s32.totalorder %s31, 0
    %p141 = por %p139, %p140
    %p142 = scmp.ne.s32.totalorder %s130, %s131
    %p143 = scmp.eq.s32.totalorder %s32, 1
    %p144 = por %p142, %p143
    %p146 = scmp.ne.s32.totalorder %s131, %s145
    %p147 = scmp.eq.s32.totalorder %s32, 0
    %p148 = por %p146, %p147
    %s150 = sadd.s32 %s149, 1
    %p153 = scmp.eq.s32.totalorder %s26, 1
    %p154 = scmp.ne.s32.totalorder %s149, %s151
    %p155 = scmp.eq.s32.totalorder %s26, 0
    %p156 = por %p154, %p155
    %p157 = scmp.ne.s32.totalorder %s149, %s151
    %p158 = scmp.eq.s32.totalorder %s31, 1
    %p159 = por %p157, %p158
    %p160 = scmp.ne.s32.totalorder %s151, %s152
    %p161 = scmp.eq.s32.totalorder %s31, 0
    %p162 = por %p160, %p161
    %p163 = scmp.ne.s32.totalorder %s151, %s152
    %p164 = scmp.eq.s32.totalorder %s32, 1
    %p165 = por %p163, %p164
    %p167 = scmp.ne.s32.totalorder %s152, %s166
    %p168 = scmp.eq.s32.totalorder %s32, 0
    %p169 = por %p167, %p168
    %s171 = sadd.s32 %s170, 1
    %p174 = scmp.eq.s32.totalorder %s26, 1
    %p175 = scmp.ne.s32.totalorder %s170, %s172
    %p176 = scmp.eq.s32.totalorder %s26, 0
    %p177 = por %p175, %p176
    %p178 = scmp.ne.s32.totalorder %s170, %s172
    %p179 = scmp.eq.s32.totalorder %s31, 1
    %p180 = por %p178, %p179
    %p181 = scmp.ne.s32.totalorder %s172, %s173
    %p182 = scmp.eq.s32.totalorder %s31, 0
    %p183 = por %p181, %p182
    %p184 = scmp.ne.s32.totalorder %s172, %s173
    %p185 = scmp.eq.s32.totalorder %s32, 1
    %p186 = por %p184, %p185
    %p188 = scmp.ne.s32.totalorder %s173, %s187
    %p189 = scmp.eq.s32.totalorder %s32, 0
    %p190 = por %p188, %p189
    %s192 = sadd.s32 %s191, 1
    %p195 = scmp.eq.s32.totalorder %s26, 1
    %p196 = scmp.ne.s32.totalorder %s191, %s193
    %p197 = scmp.eq.s32.totalorder %s26, 0
    %p198 = por %p196, %p197
    %p199 = scmp.ne.s32.totalorder %s191, %s193
    %p200 = scmp.eq.s32.totalorder %s31, 1
    %p201 = por %p199, %p200
    %p202 = scmp.ne.s32.totalorder %s193, %s194
    %p203 = scmp.eq.s32.totalorder %s31, 0
    %p204 = por %p202, %p203
    %p205 = scmp.ne.s32.totalorder %s193, %s194
    %p206 = scmp.eq.s32.totalorder %s32, 1
    %p207 = por %p205, %p206
    %p209 = scmp.ne.s32.totalorder %s194, %s208
    %p210 = scmp.eq.s32.totalorder %s32, 0
    %p211 = por %p209, %p210
    %s213 = sadd.s32 %s212, 1
    %p216 = scmp.eq.s32.totalorder %s26, 1
    %p217 = scmp.ne.s32.totalorder %s212, %s214
    %p218 = scmp.eq.s32.totalorder %s26, 0
    %p219 = por %p217, %p218
    %p220 = scmp.ne.s32.totalorder %s212, %s214
    %p221 = scmp.eq.s32.totalorder %s31, 1
    %p222 = por %p220, %p221
    %p223 = scmp.ne.s32.totalorder %s214, %s215
    %p224 = scmp.eq.s32.totalorder %s31, 0
    %p225 = por %p223, %p224
    %p226 = scmp.ne.s32.totalorder %s214, %s215
    %p227 = scmp.eq.s32.totalorder %s32, 1
    %p228 = por %p226, %p227
    %p230 = scmp.ne.s32.totalorder %s215, %s229
    %p231 = scmp.eq.s32.totalorder %s32, 0
    %p232 = por %p230, %p231
    %s234 = sadd.s32 %s233, 1
    %p237 = scmp.eq.s32.totalorder %s26, 1
    %p238 = scmp.ne.s32.totalorder %s233, %s235
    %p239 = scmp.eq.s32.totalorder %s26, 0
    %p240 = por %p238, %p239
    %p241 = scmp.ne.s32.totalorder %s233, %s235
    %p242 = scmp.eq.s32.totalorder %s31, 1
    %p243 = por %p241, %p242
    %p244 = scmp.ne.s32.totalorder %s235, %s236
    %p245 = scmp.eq.s32.totalorder %s31, 0
    %p246 = por %p244, %p245
    %p247 = scmp.ne.s32.totalorder %s235, %s236
    %p248 = scmp.eq.s32.totalorder %s32, 1
    %p249 = por %p247, %p248
    %p251 = scmp.ne.s32.totalorder %s236, %s250
    %p252 = scmp.eq.s32.totalorder %s32, 0
    %p253 = por %p251, %p252
    %s255 = sadd.s32 %s254, 1
    %p258 = scmp.eq.s32.totalorder %s26, 1
    %p259 = scmp.ne.s32.totalorder %s254, %s256
    %p260 = scmp.eq.s32.totalorder %s26, 0
    %p261 = por %p259, %p260
    %p262 = scmp.ne.s32.totalorder %s254, %s256
    %p263 = scmp.eq.s32.totalorder %s31, 1
    %p264 = por %p262, %p263
    %p265 = scmp.ne.s32.totalorder %s256, %s257
    %p266 = scmp.eq.s32.totalorder %s31, 0
    %p267 = por %p265, %p266
    %p268 = scmp.ne.s32.totalorder %s256, %s257
    %p269 = scmp.eq.s32.totalorder %s32, 1
    %p270 = por %p268, %p269
    %p272 = scmp.ne.s32.totalorder %s257, %s271
    %p273 = scmp.eq.s32.totalorder %s32, 0
    %p274 = por %p272, %p273
    %s276 = sadd.s32 %s275, 1
    %p279 = scmp.eq.s32.totalorder %s26, 1
    %p280 = scmp.ne.s32.totalorder %s275, %s277
    %p281 = scmp.eq.s32.totalorder %s26, 0
    %p282 = por %p280, %p281
    %p283 = scmp.ne.s32.totalorder %s275, %s277
    %p284 = scmp.eq.s32.totalorder %s31, 1
    %p285 = por %p283, %p284
    %p286 = scmp.ne.s32.totalorder %s277, %s278
    %p287 = scmp.eq.s32.totalorder %s31, 0
    %p288 = por %p286, %p287
    %p289 = scmp.ne.s32.totalorder %s277, %s278
    %p290 = scmp.eq.s32.totalorder %s32, 1
    %p291 = por %p289, %p290
    %p293 = scmp.ne.s32.totalorder %s278, %s292
    %p294 = scmp.eq.s32.totalorder %s32, 0
    %p295 = por %p293, %p294
    %s297 = sadd.s32 %s296, 1
    %p300 = scmp.eq.s32.totalorder %s26, 1
    %p301 = scmp.ne.s32.totalorder %s296, %s298
    %p302 = scmp.eq.s32.totalorder %s26, 0
    %p303 = por %p301, %p302
    %p304 = scmp.ne.s32.totalorder %s296, %s298
    %p305 = scmp.eq.s32.totalorder %s31, 1
    %p306 = por %p304, %p305
    %p307 = scmp.ne.s32.totalorder %s298, %s299
    %p308 = scmp.eq.s32.totalorder %s31, 0
    %p309 = por %p307, %p308
    %p310 = scmp.ne.s32.totalorder %s298, %s299
    %p311 = scmp.eq.s32.totalorder %s32, 1
    %p312 = por %p310, %p311
    %p314 = scmp.ne.s32.totalorder %s299, %s313
    %p315 = scmp.eq.s32.totalorder %s32, 0
    %p316 = por %p314, %p315
    %s318 = sadd.s32 %s317, 1
    %p321 = scmp.eq.s32.totalorder %s26, 1
    %p322 = scmp.ne.s32.totalorder %s317, %s319
    %p323 = scmp.eq.s32.totalorder %s26, 0
    %p324 = por %p322, %p323
    %p325 = scmp.ne.s32.totalorder %s317, %s319
    %p326 = scmp.eq.s32.totalorder %s31, 1
    %p327 = por %p325, %p326
    %p328 = scmp.ne.s32.totalorder %s319, %s320
    %p329 = scmp.eq.s32.totalorder %s31, 0
    %p330 = por %p328, %p329
    %p331 = scmp.ne.s32.totalorder %s319, %s320
    %p332 = scmp.eq.s32.totalorder %s32, 1
    %p333 = por %p331, %p332
    %p335 = scmp.ne.s32.totalorder %s320, %s334
    %p336 = scmp.eq.s32.totalorder %s32, 0
    %p337 = por %p335, %p336
    %s339 = sadd.s32 %s338, 1
    %p342 = scmp.eq.s32.totalorder %s26, 1
    %p343 = scmp.ne.s32.totalorder %s338, %s340
    %p344 = scmp.eq.s32.totalorder %s26, 0
    %p345 = por %p343, %p344
    %p346 = scmp.ne.s32.totalorder %s338, %s340
    %p347 = scmp.eq.s32.totalorder %s31, 1
    %p348 = por %p346, %p347
    %p349 = scmp.ne.s32.totalorder %s340, %s341
    %p350 = scmp.eq.s32.totalorder %s31, 0
    %p351 = por %p349, %p350
    %p352 = scmp.ne.s32.totalorder %s340, %s341
    %p353 = scmp.eq.s32.totalorder %s32, 1
    %p354 = por %p352, %p353
    %p356 = scmp.ne.s32.totalorder %s341, %s355
    %p357 = scmp.eq.s32.totalorder %s32, 0
    %p358 = por %p356, %p357
    %s360 = sadd.s32 %s359, 1
    %p363 = scmp.eq.s32.totalorder %s26, 1
    %p364 = scmp.ne.s32.totalorder %s359, %s361
    %p365 = scmp.eq.s32.totalorder %s26, 0
    %p366 = por %p364, %p365
    %p367 = scmp.ne.s32.totalorder %s359, %s361
    %p368 = scmp.eq.s32.totalorder %s31, 1
    %p369 = por %p367, %p368
    %p370 = scmp.ne.s32.totalorder %s361, %s362
    %p371 = scmp.eq.s32.totalorder %s31, 0
    %p372 = por %p370, %p371
    %p373 = scmp.ne.s32.totalorder %s361, %s362
    %p374 = scmp.eq.s32.totalorder %s32, 1
    %p375 = por %p373, %p374
    %p377 = scmp.ne.s32.totalorder %s362, %s376
    %p378 = scmp.eq.s32.totalorder %s32, 0
    %p379 = por %p377, %p378
    %s381 = sadd.s32 %s380, 1
    %p384 = scmp.eq.s32.totalorder %s26, 1
    %p385 = scmp.ne.s32.totalorder %s380, %s382
    %p386 = scmp.eq.s32.totalorder %s26, 0
    %p387 = por %p385, %p386
    %p388 = scmp.ne.s32.totalorder %s380, %s382
    %p389 = scmp.eq.s32.totalorder %s31, 1
    %p390 = por %p388, %p389
    %p391 = scmp.ne.s32.totalorder %s382, %s383
    %p392 = scmp.eq.s32.totalorder %s31, 0
    %p393 = por %p391, %p392
    %p394 = scmp.ne.s32.totalorder %s382, %s383
    %p395 = scmp.eq.s32.totalorder %s32, 1
    %p396 = por %p394, %p395
    %p398 = scmp.ne.s32.totalorder %s383, %s397
    %p399 = scmp.eq.s32.totalorder %s32, 0
    %p400 = por %p398, %p399
    %s402 = sadd.s32 %s401, 1
    %p405 = scmp.eq.s32.totalorder %s26, 1
    %p406 = scmp.ne.s32.totalorder %s401, %s403
    %p407 = scmp.eq.s32.totalorder %s26, 0
    %p408 = por %p406, %p407
    %p409 = scmp.ne.s32.totalorder %s401, %s403
    %p410 = scmp.eq.s32.totalorder %s31, 1
    %p411 = por %p409, %p410
    %p412 = scmp.ne.s32.totalorder %s403, %s404
    %p413 = scmp.eq.s32.totalorder %s31, 0
    %p414 = por %p412, %p413
    %p415 = scmp.ne.s32.totalorder %s403, %s404
    %p416 = scmp.eq.s32.totalorder %s32, 1
    %p417 = por %p415, %p416
    %p419 = scmp.ne.s32.totalorder %s404, %s418
    %p420 = scmp.eq.s32.totalorder %s32, 0
    %p421 = por %p419, %p420
    %s422 = ssub.s32 %s26, %s33
    %p423 = scmp.eq.s32.totalorder %s422, 0
    %s425 = sadd.s32 %s424, 1
    %s426 = scalar_select %p423, %s424, %s425
    %p429 = pneg %p423
    %p430 = scmp.eq.s32.totalorder %s26, 1
    %p431 = por %p429, %p430
    %p432 = scmp.ne.s32.totalorder %s424, %s427
    %p433 = scmp.eq.s32.totalorder %s26, 0
    %p434 = por %p432, %p433
    %p435 = scmp.ne.s32.totalorder %s424, %s427
    %p436 = scmp.eq.s32.totalorder %s31, 1
    %p437 = por %p435, %p436
    %p438 = scmp.ne.s32.totalorder %s427, %s428
    %p439 = scmp.eq.s32.totalorder %s31, 0
    %p440 = por %p438, %p439
    %p441 = scmp.ne.s32.totalorder %s427, %s428
    %p442 = scmp.eq.s32.totalorder %s32, 1
    %p443 = por %p441, %p442
    %p445 = scmp.ne.s32.totalorder %s428, %s444
    %p446 = scmp.eq.s32.totalorder %s32, 0
    %p447 = por %p445, %p446
    %p448 = scmp.le.s32.totalorder 1, %s26
    %p449 = scmp.lt.s32.totalorder %s26, 3
    %p450 = pnand %p448, %p449
    %p451 = pneg %p450
    // Predicated region
    $region9: #{cross_modal_reranker.1} parent=5 // pred_check
      _
    $region10: #{cross_modal_reranker.1} parent=5 // pred_check_branch
      %453 = sbr.rel (%p450) target = $region12
    $region11: #{cross_modal_reranker.1} parent=5 // pred_region
      %s454 = ssub.s32 %s26, 1
      // Predicated region
      $region13: #{cross_modal_reranker.1} parent=11 // pred_check
        %p455 = pneg %p99
      $region14: #{cross_modal_reranker.1} parent=11 // pred_check_branch
        %457 = sbr.rel (%p455) target = $region16
      $region15: #{cross_modal_reranker.1} parent=11 // pred_region
        _
      $region16: #{cross_modal_reranker.1} parent=11 // pred_fallthru
        _
      // Predicated region
      $region17: #{cross_modal_reranker.1} parent=11 // pred_check
        %p458 = pneg %p120
      $region18: #{cross_modal_reranker.1} parent=11 // pred_check_branch
        %460 = sbr.rel (%p458) target = $region20
      $region19: #{cross_modal_reranker.1} parent=11 // pred_region
        _
      $region20: #{cross_modal_reranker.1} parent=11 // pred_fallthru
        _
      // Predicated region
      $region21: #{cross_modal_reranker.1} parent=11 // pred_check
        %p461 = pneg %p141
      $region22: #{cross_modal_reranker.1} parent=11 // pred_check_branch
        %463 = sbr.rel (%p461) target = $region24
      $region23: #{cross_modal_reranker.1} parent=11 // pred_region
        _
      $region24: #{cross_modal_reranker.1} parent=11 // pred_fallthru
        _
      // Predicated region
      $region25: #{cross_modal_reranker.1} parent=11 // pred_check
        %p464 = pneg %p162
      $region26: #{cross_modal_reranker.1} parent=11 // pred_check_branch
        %466 = sbr.rel (%p464) target = $region28
      $region27: #{cross_modal_reranker.1} parent=11 // pred_region
        _
      $region28: #{cross_modal_reranker.1} parent=11 // pred_fallthru
        _
      // Predicated region
      $region29: #{cross_modal_reranker.1} parent=11 // pred_check
        %p467 = pneg %p183
      $region30: #{cross_modal_reranker.1} parent=11 // pred_check_branch
        %469 = sbr.rel (%p467) target = $region32
      $region31: #{cross_modal_reranker.1} parent=11 // pred_region
        _
      $region32: #{cross_modal_reranker.1} parent=11 // pred_fallthru
        _
      // Predicated region
      $region33: #{cross_modal_reranker.1} parent=11 // pred_check
        %p470 = pneg %p204
      $region34: #{cross_modal_reranker.1} parent=11 // pred_check_branch
        %472 = sbr.rel (%p470) target = $region36
      $region35: #{cross_modal_reranker.1} parent=11 // pred_region
        _
      $region36: #{cross_modal_reranker.1} parent=11 // pred_fallthru
        _
      // Predicated region
      $region37: #{cross_modal_reranker.1} parent=11 // pred_check
        %p473 = pneg %p225
      $region38: #{cross_modal_reranker.1} parent=11 // pred_check_branch
        %475 = sbr.rel (%p473) target = $region40
      $region39: #{cross_modal_reranker.1} parent=11 // pred_region
        _
      $region40: #{cross_modal_reranker.1} parent=11 // pred_fallthru
        _
      // Predicated region
      $region41: #{cross_modal_reranker.1} parent=11 // pred_check
        %p476 = pneg %p246
      $region42: #{cross_modal_reranker.1} parent=11 // pred_check_branch
        %478 = sbr.rel (%p476) target = $region44
      $region43: #{cross_modal_reranker.1} parent=11 // pred_region
        _
      $region44: #{cross_modal_reranker.1} parent=11 // pred_fallthru
        _
      // Predicated region
      $region45: #{cross_modal_reranker.1} parent=11 // pred_check
        %p479 = pneg %p267
      $region46: #{cross_modal_reranker.1} parent=11 // pred_check_branch
        %481 = sbr.rel (%p479) target = $region48
      $region47: #{cross_modal_reranker.1} parent=11 // pred_region
        _
      $region48: #{cross_modal_reranker.1} parent=11 // pred_fallthru
        _
      // Predicated region
      $region49: #{cross_modal_reranker.1} parent=11 // pred_check
        %p482 = pneg %p288
      $region50: #{cross_modal_reranker.1} parent=11 // pred_check_branch
        %484 = sbr.rel (%p482) target = $region52
      $region51: #{cross_modal_reranker.1} parent=11 // pred_region
        _
      $region52: #{cross_modal_reranker.1} parent=11 // pred_fallthru
        _
      // Predicated region
      $region53: #{cross_modal_reranker.1} parent=11 // pred_check
        %p485 = pneg %p309
      $region54: #{cross_modal_reranker.1} parent=11 // pred_check_branch
        %487 = sbr.rel (%p485) target = $region56
      $region55: #{cross_modal_reranker.1} parent=11 // pred_region
        _
      $region56: #{cross_modal_reranker.1} parent=11 // pred_fallthru
        _
      // Predicated region
      $region57: #{cross_modal_reranker.1} parent=11 // pred_check
        %p488 = pneg %p330
      $region58: #{cross_modal_reranker.1} parent=11 // pred_check_branch
        %490 = sbr.rel (%p488) target = $region60
      $region59: #{cross_modal_reranker.1} parent=11 // pred_region
        _
      $region60: #{cross_modal_reranker.1} parent=11 // pred_fallthru
        _
      // Predicated region
      $region61: #{cross_modal_reranker.1} parent=11 // pred_check
        %p491 = pneg %p351
      $region62: #{cross_modal_reranker.1} parent=11 // pred_check_branch
        %493 = sbr.rel (%p491) target = $region64
      $region63: #{cross_modal_reranker.1} parent=11 // pred_region
        _
      $region64: #{cross_modal_reranker.1} parent=11 // pred_fallthru
        _
      // Predicated region
      $region65: #{cross_modal_reranker.1} parent=11 // pred_check
        %p494 = pneg %p372
      $region66: #{cross_modal_reranker.1} parent=11 // pred_check_branch
        %496 = sbr.rel (%p494) target = $region68
      $region67: #{cross_modal_reranker.1} parent=11 // pred_region
        _
      $region68: #{cross_modal_reranker.1} parent=11 // pred_fallthru
        _
      // Predicated region
      $region69: #{cross_modal_reranker.1} parent=11 // pred_check
        %p497 = pneg %p393
      $region70: #{cross_modal_reranker.1} parent=11 // pred_check_branch
        %499 = sbr.rel (%p497) target = $region72
      $region71: #{cross_modal_reranker.1} parent=11 // pred_region
        _
      $region72: #{cross_modal_reranker.1} parent=11 // pred_fallthru
        _
      // Predicated region
      $region73: #{cross_modal_reranker.1} parent=11 // pred_check
        %p500 = pneg %p414
      $region74: #{cross_modal_reranker.1} parent=11 // pred_check_branch
        %502 = sbr.rel (%p500) target = $region76
      $region75: #{cross_modal_reranker.1} parent=11 // pred_region
        _
      $region76: #{cross_modal_reranker.1} parent=11 // pred_fallthru
        _
    $region12: #{cross_modal_reranker.1} parent=5 // pred_fallthru
      _
    %p503 = scmp.lt.s32.totalorder %s26, 2
    // Predicated region
    $region77: #{cross_modal_reranker.1} parent=5 // pred_check
      %p504 = pneg %p503
    $region78: #{cross_modal_reranker.1} parent=5 // pred_check_branch
      %506 = sbr.rel (%p504) target = $region80
    $region79: #{cross_modal_reranker.1} parent=5 // pred_region
      // Predicated region
      $region81: #{cross_modal_reranker.1} parent=79 // pred_check
        %p507 = pneg %p46
      $region82: #{cross_modal_reranker.1} parent=79 // pred_check_branch
        %509 = sbr.rel (%p507) target = $region84
      $region83: #{cross_modal_reranker.1} parent=79 // pred_region
        %p510 = scmp.lt.s32.totalorder %s26, 1
        %s511 = scalar_select %p510, %s26, 1
        %s512 = smul.addr %s511, 8
        %s513 = scalar_lea.vmem %s0, %s512
      $region84: #{cross_modal_reranker.1} parent=79 // pred_fallthru
        _
      // Predicated region
      $region85: #{cross_modal_reranker.1} parent=79 // pred_check
        %p514 = pneg %p72
      $region86: #{cross_modal_reranker.1} parent=79 // pred_check_branch
        %516 = sbr.rel (%p514) target = $region88
      $region87: #{cross_modal_reranker.1} parent=79 // pred_region
        %p517 = scmp.lt.s32.totalorder %s26, 1
        %s518 = scalar_select %p517, %s26, 1
        %s519 = smul.addr %s518, 8
        %s520 = scalar_lea.vmem %s1, %s519
      $region88: #{cross_modal_reranker.1} parent=79 // pred_fallthru
        _
    $region80: #{cross_modal_reranker.1} parent=5 // pred_fallthru
      _
    %p521 = scmp.le.s32.totalorder 1, %s26
    %p522 = scmp.lt.s32.totalorder %s26, 3
    %p523 = pnand %p521, %p522
    %p524 = pneg %p523
    // Predicated region
    $region89: #{cross_modal_reranker.1} parent=5 // pred_check
      _
    $region90: #{cross_modal_reranker.1} parent=5 // pred_check_branch
      %526 = sbr.rel (%p523) target = $region92
    $region91: #{cross_modal_reranker.1} parent=5 // pred_region
      %s527 = ssub.s32 %s26, 1
      %p528 = scmp.lt.s32.totalorder %s31, 1
      %s529 = scalar_select %p528, %s31, 1
      %s530 = smul.addr %s529, 8
      %s531 = scalar_lea.vmem %s0, %s530
      %p532 = pneg %p52
      %p533 = pneg %p49
      %p534 = scmp.lt.s32.totalorder %s31, 1
      %s535 = scalar_select %p534, %s31, 1
      %s536 = smul.addr %s535, 8
      %s537 = scalar_lea.vmem %s1, %s536
      %p538 = pneg %p78
      %p539 = pneg %p75
      %p540 = pneg %p99
      %p541 = pneg %p96
      %p542 = pneg %p120
      %p543 = pneg %p117
      %p544 = pneg %p141
      %p545 = pneg %p138
      %p546 = pneg %p162
      %p547 = pneg %p159
      %p548 = pneg %p183
      %p549 = pneg %p180
      %p550 = pneg %p204
      %p551 = pneg %p201
      %p552 = pneg %p225
      %p553 = pneg %p222
      %p554 = pneg %p246
      %p555 = pneg %p243
      %p556 = pneg %p267
      %p557 = pneg %p264
      %p558 = pneg %p288
      %p559 = pneg %p285
      %p560 = pneg %p309
      %p561 = pneg %p306
      %p562 = pneg %p330
      %p563 = pneg %p327
      %p564 = pneg %p351
      %p565 = pneg %p348
      %p566 = pneg %p372
      %p567 = pneg %p369
      %p568 = pneg %p393
      %p569 = pneg %p390
      %p570 = pneg %p414
      %p571 = pneg %p411
      %p572 = pneg %p440
      %p573 = pneg %p437
      %p574 = scmp.lt.s32.totalorder %s31, 1
      %s575 = scalar_select %p574, %s31, 1
      %s576 = scalar_lea.vmem %s18, %s575
      %p577 = scmp.lt.s32.totalorder %s31, 1
      %s578 = scalar_select %p577, %s31, 1
      %s579 = smul.addr %s578, 8
      %s580 = scalar_lea.vmem %s0, %s579
      %p581 = scmp.lt.s32.totalorder %s31, 1
      %s582 = scalar_select %p581, %s31, 1
      %s583 = smul.addr %s582, 8
      %s584 = scalar_lea.vmem %s1, %s583
      %p585 = scmp.lt.s32.totalorder %s31, 1
      %s586 = scalar_select %p585, %s31, 1
      %s587 = scalar_lea.vmem %s18, %s586
      %v589 = vld [vmem:[%s584] sm:$0xff]
      %v590 = vpack.c.bf16 %v589, %v589
      %v591 = vld [vmem:[%s2] sm:$0xf]
      %v592 = vld [vmem:[%s2 + $0x4] sm:$0xf]
      %v593 = vld [vmem:[%s2 + $0x8] sm:$0xf]
      %v594 = vld [vmem:[%s2 + $0xc] sm:$0xf]
      %v595 = vld [vmem:[%s2 + $0x10] sm:$0xf]
      %v596 = vld [vmem:[%s2 + $0x14] sm:$0xf]
      %v597 = vld [vmem:[%s2 + $0x18] sm:$0xf]
      %v598 = vld [vmem:[%s2 + $0x1c] sm:$0xf]
      %v599 = vld [vmem:[%s3] sm:$0x1]
      %v601 = vperm.slane %v599, 0
      %v611 = vunpack.c.l.b16 %v591
      %v612 = vunpack.c.l.b16 %v592
      %v613 = vunpack.c.l.b16 %v593
      %v614 = vunpack.c.l.b16 %v594
      %v615 = vunpack.c.l.b16 %v595
      %v616 = vunpack.c.l.b16 %v596
      %v617 = vunpack.c.l.b16 %v597
      %v618 = vunpack.c.l.b16 %v598
      %v619 = vpack.c.b16 %v612, %v611
      %v620 = vpack.c.b16 %v614, %v613
      %v621 = vpack.c.b16 %v616, %v615
      %v622 = vpack.c.b16 %v618, %v617
      %vm627 = vcmask 523264
      %v629 = vsel %vm627, %v590, 0
      %631 = vmatpush.bf16.msra.mxu0 0
      %632 = vmatpush.bf16.msra.mxu0 0
      %633 = vmatpush.bf16.msra.mxu0 0
      %634 = vmatpush.bf16.msra.mxu0 0
      %635 = vmatpush.bf16.msra.mxu0 %v622
      %636 = vmatpush.bf16.msra.mxu0 %v621
      %637 = vmatpush.bf16.msra.mxu0 %v620
      %638 = vmatpush.bf16.msra.mxu0 %v619
      %639 = vmatmul.bf16.gmra.mxu0 %v629
      %v640 = vpop.f32.mrf.mxu0
      %v641 = vadd.f32 %v601, %v640
      %v642 = vpop.f32.mrf.mxu0
      %643 = vdwg.mxu0
      %v644 = vld [vmem:[%s580] sm:$0xff]
      %v645 = vpack.c.bf16 %v641, %v644
      %v646 = vld [vmem:[%s4] sm:$0xff]
      %v647 = vld [vmem:[%s4 + $0x8] sm:$0xf]
      %v648 = vld [vmem:[%s4 + $0xc] sm:$0xff]
      %v649 = vld [vmem:[%s4 + $0x14] sm:$0xf]
      %v650 = vld [vmem:[%s4 + $0x18] sm:$0xff]
      %v651 = vld [vmem:[%s4 + $0x20] sm:$0xf]
      %v652 = vld [vmem:[%s4 + $0x24] sm:$0xff]
      %v653 = vld [vmem:[%s4 + $0x2c] sm:$0xf]
      %v654 = vld [vmem:[%s4 + $0x30] sm:$0xff]
      %v655 = vld [vmem:[%s4 + $0x38] sm:$0xf]
      %v656 = vld [vmem:[%s4 + $0x3c] sm:$0xff]
      %v657 = vld [vmem:[%s4 + $0x44] sm:$0xf]
      %v658 = vld [vmem:[%s4 + $0x48] sm:$0xff]
      %v659 = vld [vmem:[%s4 + $0x50] sm:$0xf]
      %v660 = vld [vmem:[%s4 + $0x54] sm:$0xff]
      %v661 = vld [vmem:[%s4 + $0x5c] sm:$0xf]
      %v662 = vld [vmem:[%s4 + $0x60] sm:$0xff]
      %v663 = vld [vmem:[%s4 + $0x68] sm:$0xf]
      %v664 = vld [vmem:[%s4 + $0x6c] sm:$0xff]
      %v665 = vld [vmem:[%s4 + $0x74] sm:$0xf]
      %v666 = vld [vmem:[%s4 + $0x78] sm:$0xff]
      %v667 = vld [vmem:[%s4 + $0x80] sm:$0xf]
      %v668 = vld [vmem:[%s4 + $0x84] sm:$0xff]
      %v669 = vld [vmem:[%s4 + $0x8c] sm:$0xf]
      %v670 = vld [vmem:[%s4 + $0x90] sm:$0xff]
      %v671 = vld [vmem:[%s4 + $0x98] sm:$0xf]
      %v672 = vld [vmem:[%s4 + $0x9c] sm:$0xff]
      %v673 = vld [vmem:[%s4 + $0xa4] sm:$0xf]
      %v674 = vld [vmem:[%s4 + $0xa8] sm:$0xff]
      %v675 = vld [vmem:[%s4 + $0xb0] sm:$0xf]
      %v676 = vld [vmem:[%s4 + $0xb4] sm:$0xff]
      %v677 = vld [vmem:[%s4 + $0xbc] sm:$0xf]
      %v678 = vld [vmem:[%s5] sm:$0x7]
      %v680 = vperm.slane %v678, 0
      %v681 = vperm.slane %v678, 1
      %v682 = vperm.slane %v678, 2
      %v718 = vunpack.c.l.b16 %v646
      %v719 = vunpack.c.h.b16 %v646
      %v720 = vunpack.c.l.b16 %v647
      %v721 = vunpack.c.l.b16 %v648
      %v722 = vunpack.c.h.b16 %v648
      %v723 = vunpack.c.l.b16 %v649
      %v724 = vunpack.c.l.b16 %v650
      %v725 = vunpack.c.h.b16 %v650
      %v726 = vunpack.c.l.b16 %v651
      %v727 = vunpack.c.l.b16 %v652
      %v728 = vunpack.c.h.b16 %v652
      %v729 = vunpack.c.l.b16 %v653
      %v730 = vunpack.c.l.b16 %v654
      %v731 = vunpack.c.h.b16 %v654
      %v732 = vunpack.c.l.b16 %v655
      %v733 = vunpack.c.l.b16 %v656
      %v734 = vunpack.c.h.b16 %v656
      %v735 = vunpack.c.l.b16 %v657
      %v736 = vunpack.c.l.b16 %v658
      %v737 = vunpack.c.h.b16 %v658
      %v738 = vunpack.c.l.b16 %v659
      %v739 = vunpack.c.l.b16 %v660
      %v740 = vunpack.c.h.b16 %v660
      %v741 = vunpack.c.l.b16 %v661
      %v742 = vunpack.c.l.b16 %v662
      %v743 = vunpack.c.h.b16 %v662
      %v744 = vunpack.c.l.b16 %v663
      %v745 = vunpack.c.l.b16 %v664
      %v746 = vunpack.c.h.b16 %v664
      %v747 = vunpack.c.l.b16 %v665
      %v748 = vunpack.c.l.b16 %v666
      %v749 = vunpack.c.h.b16 %v666
      %v750 = vunpack.c.l.b16 %v667
      %v751 = vunpack.c.l.b16 %v668
      %v752 = vunpack.c.h.b16 %v668
      %v753 = vunpack.c.l.b16 %v669
      %v754 = vunpack.c.l.b16 %v670
      %v755 = vunpack.c.h.b16 %v670
      %v756 = vunpack.c.l.b16 %v671
      %v757 = vunpack.c.l.b16 %v672
      %v758 = vunpack.c.h.b16 %v672
      %v759 = vunpack.c.l.b16 %v673
      %v760 = vunpack.c.l.b16 %v674
      %v761 = vunpack.c.h.b16 %v674
      %v762 = vunpack.c.l.b16 %v675
      %v763 = vunpack.c.l.b16 %v676
      %v764 = vunpack.c.h.b16 %v676
      %v765 = vunpack.c.l.b16 %v677
      %v766 = vpack.c.b16 %v721, %v718
      %v767 = vpack.c.b16 %v722, %v719
      %v768 = vpack.c.b16 %v723, %v720
      %v769 = vpack.c.b16 %v727, %v724
      %v770 = vpack.c.b16 %v728, %v725
      %v771 = vpack.c.b16 %v729, %v726
      %v772 = vpack.c.b16 %v733, %v730
      %v773 = vpack.c.b16 %v734, %v731
      %v774 = vpack.c.b16 %v735, %v732
      %v775 = vpack.c.b16 %v739, %v736
      %v776 = vpack.c.b16 %v740, %v737
      %v777 = vpack.c.b16 %v741, %v738
      %v778 = vpack.c.b16 %v745, %v742
      %v779 = vpack.c.b16 %v746, %v743
      %v780 = vpack.c.b16 %v747, %v744
      %v781 = vpack.c.b16 %v751, %v748
      %v782 = vpack.c.b16 %v752, %v749
      %v783 = vpack.c.b16 %v753, %v750
      %v784 = vpack.c.b16 %v757, %v754
      %v785 = vpack.c.b16 %v758, %v755
      %v786 = vpack.c.b16 %v759, %v756
      %v787 = vpack.c.b16 %v763, %v760
      %v788 = vpack.c.b16 %v764, %v761
      %v789 = vpack.c.b16 %v765, %v762
      %814 = vmatpush.bf16.msra.mxu0 %v787
      %815 = vmatpush.bf16.msra.mxu0 %v784
      %816 = vmatpush.bf16.msra.mxu0 %v781
      %817 = vmatpush.bf16.msra.mxu0 %v778
      %818 = vmatpush.bf16.msra.mxu0 %v775
      %819 = vmatpush.bf16.msra.mxu0 %v772
      %820 = vmatpush.bf16.msra.mxu0 %v769
      %821 = vmatpush.bf16.msra.mxu0 %v766
      %822 = vmatmul.bf16.gmra.mxu0 %v645
      %v823 = vpop.f32.mrf.mxu0
      %v824 = vadd.f32 %v680, %v823
      %v825 = vpop.f32.mrf.mxu0
      %v826 = vadd.f32 %v680, %v825
      %827 = vdwg.mxu0
      %828 = vmatpush.bf16.msra.mxu0 %v788
      %829 = vmatpush.bf16.msra.mxu0 %v785
      %830 = vmatpush.bf16.msra.mxu0 %v782
      %831 = vmatpush.bf16.msra.mxu0 %v779
      %832 = vmatpush.bf16.msra.mxu0 %v776
      %833 = vmatpush.bf16.msra.mxu0 %v773
      %834 = vmatpush.bf16.msra.mxu0 %v770
      %835 = vmatpush.bf16.msra.mxu0 %v767
      %836 = vmatmul.bf16.gmra.mxu0 %v645
      %v837 = vpop.f32.mrf.mxu0
      %v838 = vadd.f32 %v681, %v837
      %v839 = vpop.f32.mrf.mxu0
      %v840 = vadd.f32 %v681, %v839
      %841 = vdwg.mxu0
      %842 = vmatpush.bf16.msra.mxu0 %v789
      %843 = vmatpush.bf16.msra.mxu0 %v786
      %844 = vmatpush.bf16.msra.mxu0 %v783
      %845 = vmatpush.bf16.msra.mxu0 %v780
      %846 = vmatpush.bf16.msra.mxu0 %v777
      %847 = vmatpush.bf16.msra.mxu0 %v774
      %848 = vmatpush.bf16.msra.mxu0 %v771
      %849 = vmatpush.bf16.msra.mxu0 %v768
      %850 = vmatmul.bf16.gmra.mxu0 %v645
      %v851 = vpop.f32.mrf.mxu0
      %v852 = vadd.f32 %v682, %v851
      %v853 = vpop.f32.mrf.mxu0
      %v854 = vadd.f32 %v682, %v853
      %855 = vdwg.mxu0
      %858 = vrot.lane.b32.xlu0 %v824, 112
      %v859 = vpop.permute.xlu0 %858
      %860 = vrot.lane.b32.xlu0 %v826, 112
      %v861 = vpop.permute.xlu0 %860
      %864 = vrot.lane.b32.xlu0 %v824, 96
      %v865 = vpop.permute.xlu0 %864
      %866 = vrot.lane.b32.xlu0 %v826, 96
      %v867 = vpop.permute.xlu0 %866
      %870 = vrot.lane.b32.xlu0 %v824, 80
      %v871 = vpop.permute.xlu0 %870
      %872 = vrot.lane.b32.xlu0 %v826, 80
      %v873 = vpop.permute.xlu0 %872
      %876 = vrot.lane.b32.xlu0 %v824, 64
      %v877 = vpop.permute.xlu0 %876
      %878 = vrot.lane.b32.xlu0 %v826, 64
      %v879 = vpop.permute.xlu0 %878
      %882 = vrot.lane.b32.xlu0 %v824, 48
      %v883 = vpop.permute.xlu0 %882
      %884 = vrot.lane.b32.xlu0 %v826, 48
      %v885 = vpop.permute.xlu0 %884
      %888 = vrot.lane.b32.xlu0 %v824, 32
      %v889 = vpop.permute.xlu0 %888
      %890 = vrot.lane.b32.xlu0 %v826, 32
      %v891 = vpop.permute.xlu0 %890
      %894 = vrot.lane.b32.xlu0 %v824, 16
      %v895 = vpop.permute.xlu0 %894
      %896 = vrot.lane.b32.xlu0 %v826, 16
      %v897 = vpop.permute.xlu0 %896
      %v900 = vpack.c.bf16 %v824, %v824
      %v901 = vpack.c.bf16 %v826, %v826
      %v902 = vpack.c.bf16 %v859, %v859
      %v903 = vpack.c.bf16 %v861, %v861
      %v904 = vpack.c.bf16 %v865, %v865
      %v905 = vpack.c.bf16 %v867, %v867
      %v906 = vpack.c.bf16 %v871, %v871
      %v907 = vpack.c.bf16 %v873, %v873
      %v908 = vpack.c.bf16 %v877, %v877
      %v909 = vpack.c.bf16 %v879, %v879
      %v910 = vpack.c.bf16 %v883, %v883
      %v911 = vpack.c.bf16 %v885, %v885
      %v912 = vpack.c.bf16 %v889, %v889
      %v913 = vpack.c.bf16 %v891, %v891
      %v914 = vpack.c.bf16 %v895, %v895
      %v915 = vpack.c.bf16 %v897, %v897
      %918 = vrot.lane.b32.xlu0 %v838, 112
      %v919 = vpop.permute.xlu0 %918
      %920 = vrot.lane.b32.xlu0 %v840, 112
      %v921 = vpop.permute.xlu0 %920
      %924 = vrot.lane.b32.xlu0 %v838, 96
      %v925 = vpop.permute.xlu0 %924
      %926 = vrot.lane.b32.xlu0 %v840, 96
      %v927 = vpop.permute.xlu0 %926
      %930 = vrot.lane.b32.xlu0 %v838, 80
      %v931 = vpop.permute.xlu0 %930
      %932 = vrot.lane.b32.xlu0 %v840, 80
      %v933 = vpop.permute.xlu0 %932
      %936 = vrot.lane.b32.xlu0 %v838, 64
      %v937 = vpop.permute.xlu0 %936
      %938 = vrot.lane.b32.xlu0 %v840, 64
      %v939 = vpop.permute.xlu0 %938
      %942 = vrot.lane.b32.xlu0 %v838, 48
      %v943 = vpop.permute.xlu0 %942
      %944 = vrot.lane.b32.xlu0 %v840, 48
      %v945 = vpop.permute.xlu0 %944
      %948 = vrot.lane.b32.xlu0 %v838, 32
      %v949 = vpop.permute.xlu0 %948
      %950 = vrot.lane.b32.xlu0 %v840, 32
      %v951 = vpop.permute.xlu0 %950
      %954 = vrot.lane.b32.xlu0 %v838, 16
      %v955 = vpop.permute.xlu0 %954
      %956 = vrot.lane.b32.xlu0 %v840, 16
      %v957 = vpop.permute.xlu0 %956
      %v960 = vpack.c.bf16 %v838, %v838
      %v961 = vpack.c.bf16 %v840, %v840
      %v962 = vpack.c.bf16 %v919, %v919
      %v963 = vpack.c.bf16 %v921, %v921
      %v964 = vpack.c.bf16 %v925, %v925
      %v965 = vpack.c.bf16 %v927, %v927
      %v966 = vpack.c.bf16 %v931, %v931
      %v967 = vpack.c.bf16 %v933, %v933
      %v968 = vpack.c.bf16 %v937, %v937
      %v969 = vpack.c.bf16 %v939, %v939
      %v970 = vpack.c.bf16 %v943, %v943
      %v971 = vpack.c.bf16 %v945, %v945
      %v972 = vpack.c.bf16 %v949, %v949
      %v973 = vpack.c.bf16 %v951, %v951
      %v974 = vpack.c.bf16 %v955, %v955
      %v975 = vpack.c.bf16 %v957, %v957
      %978 = vrot.lane.b32.xlu0 %v852, 112
      %v979 = vpop.permute.xlu0 %978
      %980 = vrot.lane.b32.xlu0 %v854, 112
      %v981 = vpop.permute.xlu0 %980
      %984 = vrot.lane.b32.xlu0 %v852, 96
      %v985 = vpop.permute.xlu0 %984
      %986 = vrot.lane.b32.xlu0 %v854, 96
      %v987 = vpop.permute.xlu0 %986
      %990 = vrot.lane.b32.xlu0 %v852, 80
      %v991 = vpop.permute.xlu0 %990
      %992 = vrot.lane.b32.xlu0 %v854, 80
      %v993 = vpop.permute.xlu0 %992
      %996 = vrot.lane.b32.xlu0 %v852, 64
      %v997 = vpop.permute.xlu0 %996
      %998 = vrot.lane.b32.xlu0 %v854, 64
      %v999 = vpop.permute.xlu0 %998
      %1002 = vrot.lane.b32.xlu0 %v852, 48
      %v1003 = vpop.permute.xlu0 %1002
      %1004 = vrot.lane.b32.xlu0 %v854, 48
      %v1005 = vpop.permute.xlu0 %1004
      %1008 = vrot.lane.b32.xlu0 %v852, 32
      %v1009 = vpop.permute.xlu0 %1008
      %1010 = vrot.lane.b32.xlu0 %v854, 32
      %v1011 = vpop.permute.xlu0 %1010
      %1014 = vrot.lane.b32.xlu0 %v852, 16
      %v1015 = vpop.permute.xlu0 %1014
      %1016 = vrot.lane.b32.xlu0 %v854, 16
      %v1017 = vpop.permute.xlu0 %1016
      %v1020 = vpack.c.bf16 %v852, %v852
      %v1021 = vpack.c.bf16 %v854, %v854
      %v1022 = vpack.c.bf16 %v979, %v979
      %v1023 = vpack.c.bf16 %v981, %v981
      %v1024 = vpack.c.bf16 %v985, %v985
      %v1025 = vpack.c.bf16 %v987, %v987
      %v1026 = vpack.c.bf16 %v991, %v991
      %v1027 = vpack.c.bf16 %v993, %v993
      %v1028 = vpack.c.bf16 %v997, %v997
      %v1029 = vpack.c.bf16 %v999, %v999
      %v1030 = vpack.c.bf16 %v1003, %v1003
      %v1031 = vpack.c.bf16 %v1005, %v1005
      %v1032 = vpack.c.bf16 %v1009, %v1009
      %v1033 = vpack.c.bf16 %v1011, %v1011
      %v1034 = vpack.c.bf16 %v1015, %v1015
      %v1035 = vpack.c.bf16 %v1017, %v1017
      %v1038 = vunpack.c.l.b16 %v900
      %v1039 = vunpack.c.l.b16 %v901
      %v1040 = vpack.c.b16 %v1039, %v1038
      %v1043 = vunpack.c.l.b16 %v960
      %v1044 = vunpack.c.l.b16 %v961
      %v1045 = vpack.c.b16 %v1044, %v1043
      %vm1046 = vcmask 130048
      %v1048 = vsel %vm1046, %v1040, 0
      %v1051 = vsel %vm1046, %v1045, 0
      %1053 = vmatpush.bf16.xpose.msra.mxu0 0
      %1054 = vmatpush.bf16.xpose.msra.mxu0 0
      %1055 = vmatpush.bf16.xpose.msra.mxu0 0
      %1056 = vmatpush.bf16.xpose.msra.mxu0 0
      %1057 = vmatpush.bf16.xpose.msra.mxu0 0
      %1058 = vmatpush.bf16.xpose.msra.mxu0 0
      %1059 = vmatpush.bf16.xpose.msra.mxu0 0
      %1060 = vmatpush.bf16.xpose.msra.mxu0 %v1051
      %1061 = vmatmul.bf16.gmra.mxu0 %v1048
      %v1062 = vpop.f32.mrf.mxu0
      %v1063 = vadd.f32 0.0, %v1062
      %v1064 = vpop.f32.mrf.mxu0
      %v1065 = vadd.f32 0.0, %v1064
      %1066 = vdwg.mxu0
      %v1069 = vunpack.c.l.b16 %v902
      %v1070 = vunpack.c.l.b16 %v903
      %v1071 = vpack.c.b16 %v1070, %v1069
      %v1074 = vunpack.c.l.b16 %v962
      %v1075 = vunpack.c.l.b16 %v963
      %v1076 = vpack.c.b16 %v1075, %v1074
      %v1078 = vsel %vm1046, %v1071, 0
      %v1081 = vsel %vm1046, %v1076, 0
      %1083 = vmatpush.bf16.xpose.msra.mxu0 0
      %1084 = vmatpush.bf16.xpose.msra.mxu0 0
      %1085 = vmatpush.bf16.xpose.msra.mxu0 0
      %1086 = vmatpush.bf16.xpose.msra.mxu0 0
      %1087 = vmatpush.bf16.xpose.msra.mxu0 0
      %1088 = vmatpush.bf16.xpose.msra.mxu0 0
      %1089 = vmatpush.bf16.xpose.msra.mxu0 0
      %1090 = vmatpush.bf16.xpose.msra.mxu0 %v1081
      %1091 = vmatmul.bf16.gmra.mxu0 %v1078
      %v1092 = vpop.f32.mrf.mxu0
      %v1093 = vadd.f32 0.0, %v1092
      %v1094 = vpop.f32.mrf.mxu0
      %v1095 = vadd.f32 0.0, %v1094
      %1096 = vdwg.mxu0
      %v1099 = vunpack.c.l.b16 %v904
      %v1100 = vunpack.c.l.b16 %v905
      %v1101 = vpack.c.b16 %v1100, %v1099
      %v1104 = vunpack.c.l.b16 %v964
      %v1105 = vunpack.c.l.b16 %v965
      %v1106 = vpack.c.b16 %v1105, %v1104
      %v1108 = vsel %vm1046, %v1101, 0
      %v1111 = vsel %vm1046, %v1106, 0
      %1113 = vmatpush.bf16.xpose.msra.mxu0 0
      %1114 = vmatpush.bf16.xpose.msra.mxu0 0
      %1115 = vmatpush.bf16.xpose.msra.mxu0 0
      %1116 = vmatpush.bf16.xpose.msra.mxu0 0
      %1117 = vmatpush.bf16.xpose.msra.mxu0 0
      %1118 = vmatpush.bf16.xpose.msra.mxu0 0
      %1119 = vmatpush.bf16.xpose.msra.mxu0 0
      %1120 = vmatpush.bf16.xpose.msra.mxu0 %v1111
      %1121 = vmatmul.bf16.gmra.mxu0 %v1108
      %v1122 = vpop.f32.mrf.mxu0
      %v1123 = vadd.f32 0.0, %v1122
      %v1124 = vpop.f32.mrf.mxu0
      %v1125 = vadd.f32 0.0, %v1124
      %1126 = vdwg.mxu0
      %v1129 = vunpack.c.l.b16 %v906
      %v1130 = vunpack.c.l.b16 %v907
      %v1131 = vpack.c.b16 %v1130, %v1129
      %v1134 = vunpack.c.l.b16 %v966
      %v1135 = vunpack.c.l.b16 %v967
      %v1136 = vpack.c.b16 %v1135, %v1134
      %v1138 = vsel %vm1046, %v1131, 0
      %v1141 = vsel %vm1046, %v1136, 0
      %1143 = vmatpush.bf16.xpose.msra.mxu0 0
      %1144 = vmatpush.bf16.xpose.msra.mxu0 0
      %1145 = vmatpush.bf16.xpose.msra.mxu0 0
      %1146 = vmatpush.bf16.xpose.msra.mxu0 0
      %1147 = vmatpush.bf16.xpose.msra.mxu0 0
      %1148 = vmatpush.bf16.xpose.msra.mxu0 0
      %1149 = vmatpush.bf16.xpose.msra.mxu0 0
      %1150 = vmatpush.bf16.xpose.msra.mxu0 %v1141
      %1151 = vmatmul.bf16.gmra.mxu0 %v1138
      %v1152 = vpop.f32.mrf.mxu0
      %v1153 = vadd.f32 0.0, %v1152
      %v1154 = vpop.f32.mrf.mxu0
      %v1155 = vadd.f32 0.0, %v1154
      %1156 = vdwg.mxu0
      %v1159 = vunpack.c.l.b16 %v908
      %v1160 = vunpack.c.l.b16 %v909
      %v1161 = vpack.c.b16 %v1160, %v1159
      %v1164 = vunpack.c.l.b16 %v968
      %v1165 = vunpack.c.l.b16 %v969
      %v1166 = vpack.c.b16 %v1165, %v1164
      %v1168 = vsel %vm1046, %v1161, 0
      %v1171 = vsel %vm1046, %v1166, 0
      %1173 = vmatpush.bf16.xpose.msra.mxu0 0
      %1174 = vmatpush.bf16.xpose.msra.mxu0 0
      %1175 = vmatpush.bf16.xpose.msra.mxu0 0
      %1176 = vmatpush.bf16.xpose.msra.mxu0 0
      %1177 = vmatpush.bf16.xpose.msra.mxu0 0
      %1178 = vmatpush.bf16.xpose.msra.mxu0 0
      %1179 = vmatpush.bf16.xpose.msra.mxu0 0
      %1180 = vmatpush.bf16.xpose.msra.mxu0 %v1171
      %1181 = vmatmul.bf16.gmra.mxu0 %v1168
      %v1182 = vpop.f32.mrf.mxu0
      %v1183 = vadd.f32 0.0, %v1182
      %v1184 = vpop.f32.mrf.mxu0
      %v1185 = vadd.f32 0.0, %v1184
      %1186 = vdwg.mxu0
      %v1189 = vunpack.c.l.b16 %v910
      %v1190 = vunpack.c.l.b16 %v911
      %v1191 = vpack.c.b16 %v1190, %v1189
      %v1194 = vunpack.c.l.b16 %v970
      %v1195 = vunpack.c.l.b16 %v971
      %v1196 = vpack.c.b16 %v1195, %v1194
      %v1198 = vsel %vm1046, %v1191, 0
      %v1201 = vsel %vm1046, %v1196, 0
      %1203 = vmatpush.bf16.xpose.msra.mxu0 0
      %1204 = vmatpush.bf16.xpose.msra.mxu0 0
      %1205 = vmatpush.bf16.xpose.msra.mxu0 0
      %1206 = vmatpush.bf16.xpose.msra.mxu0 0
      %1207 = vmatpush.bf16.xpose.msra.mxu0 0
      %1208 = vmatpush.bf16.xpose.msra.mxu0 0
      %1209 = vmatpush.bf16.xpose.msra.mxu0 0
      %1210 = vmatpush.bf16.xpose.msra.mxu0 %v1201
      %1211 = vmatmul.bf16.gmra.mxu0 %v1198
      %v1212 = vpop.f32.mrf.mxu0
      %v1213 = vadd.f32 0.0, %v1212
      %v1214 = vpop.f32.mrf.mxu0
      %v1215 = vadd.f32 0.0, %v1214
      %1216 = vdwg.mxu0
      %v1219 = vunpack.c.l.b16 %v912
      %v1220 = vunpack.c.l.b16 %v913
      %v1221 = vpack.c.b16 %v1220, %v1219
      %v1224 = vunpack.c.l.b16 %v972
      %v1225 = vunpack.c.l.b16 %v973
      %v1226 = vpack.c.b16 %v1225, %v1224
      %v1228 = vsel %vm1046, %v1221, 0
      %v1231 = vsel %vm1046, %v1226, 0
      %1233 = vmatpush.bf16.xpose.msra.mxu0 0
      %1234 = vmatpush.bf16.xpose.msra.mxu0 0
      %1235 = vmatpush.bf16.xpose.msra.mxu0 0
      %1236 = vmatpush.bf16.xpose.msra.mxu0 0
      %1237 = vmatpush.bf16.xpose.msra.mxu0 0
      %1238 = vmatpush.bf16.xpose.msra.mxu0 0
      %1239 = vmatpush.bf16.xpose.msra.mxu0 0
      %1240 = vmatpush.bf16.xpose.msra.mxu0 %v1231
      %1241 = vmatmul.bf16.gmra.mxu0 %v1228
      %v1242 = vpop.f32.mrf.mxu0
      %v1243 = vadd.f32 0.0, %v1242
      %v1244 = vpop.f32.mrf.mxu0
      %v1245 = vadd.f32 0.0, %v1244
      %1246 = vdwg.mxu0
      %v1249 = vunpack.c.l.b16 %v914
      %v1250 = vunpack.c.l.b16 %v915
      %v1251 = vpack.c.b16 %v1250, %v1249
      %v1254 = vunpack.c.l.b16 %v974
      %v1255 = vunpack.c.l.b16 %v975
      %v1256 = vpack.c.b16 %v1255, %v1254
      %v1258 = vsel %vm1046, %v1251, 0
      %v1261 = vsel %vm1046, %v1256, 0
      %1263 = vmatpush.bf16.xpose.msra.mxu0 0
      %1264 = vmatpush.bf16.xpose.msra.mxu0 0
      %1265 = vmatpush.bf16.xpose.msra.mxu0 0
      %1266 = vmatpush.bf16.xpose.msra.mxu0 0
      %1267 = vmatpush.bf16.xpose.msra.mxu0 0
      %1268 = vmatpush.bf16.xpose.msra.mxu0 0
      %1269 = vmatpush.bf16.xpose.msra.mxu0 0
      %1270 = vmatpush.bf16.xpose.msra.mxu0 %v1261
      %1271 = vmatmul.bf16.gmra.mxu0 %v1258
      %v1272 = vpop.f32.mrf.mxu0
      %v1273 = vadd.f32 0.0, %v1272
      %v1274 = vpop.f32.mrf.mxu0
      %v1275 = vadd.f32 0.0, %v1274
      %1276 = vdwg.mxu0
      %v1277 = vmul.f32 %v1063, 0.25
      %v1278 = vmul.f32 %v1065, 0.25
      %v1279 = vmul.f32 %v1093, 0.25
      %v1280 = vmul.f32 %v1095, 0.25
      %v1281 = vmul.f32 %v1123, 0.25
      %v1282 = vmul.f32 %v1125, 0.25
      %v1283 = vmul.f32 %v1153, 0.25
      %v1284 = vmul.f32 %v1155, 0.25
      %v1285 = vmul.f32 %v1183, 0.25
      %v1286 = vmul.f32 %v1185, 0.25
      %v1287 = vmul.f32 %v1213, 0.25
      %v1288 = vmul.f32 %v1215, 0.25
      %v1289 = vmul.f32 %v1243, 0.25
      %v1290 = vmul.f32 %v1245, 0.25
      %v1291 = vmul.f32 %v1273, 0.25
      %v1292 = vmul.f32 %v1275, 0.25
      %v1293 = vsel %vm1046, %v1277, -inf
      %1294 = vmax.xlane.f32.xlu0 %v1293
      %v1295 = vpop.xlane.xlu0 %1294
      %v1296 = vsel %vm1046, %v1278, -inf
      %1297 = vmax.xlane.f32.xlu0 %v1296
      %v1298 = vpop.xlane.xlu0 %1297
      %v1299 = vsel %vm1046, %v1279, -inf
      %1300 = vmax.xlane.f32.xlu0 %v1299
      %v1301 = vpop.xlane.xlu0 %1300
      %v1302 = vsel %vm1046, %v1280, -inf
      %1303 = vmax.xlane.f32.xlu0 %v1302
      %v1304 = vpop.xlane.xlu0 %1303
      %v1305 = vsel %vm1046, %v1281, -inf
      %1306 = vmax.xlane.f32.xlu0 %v1305
      %v1307 = vpop.xlane.xlu0 %1306
      %v1308 = vsel %vm1046, %v1282, -inf
      %1309 = vmax.xlane.f32.xlu0 %v1308
      %v1310 = vpop.xlane.xlu0 %1309
      %v1311 = vsel %vm1046, %v1283, -inf
      %1312 = vmax.xlane.f32.xlu0 %v1311
      %v1313 = vpop.xlane.xlu0 %1312
      %v1314 = vsel %vm1046, %v1284, -inf
      %1315 = vmax.xlane.f32.xlu0 %v1314
      %v1316 = vpop.xlane.xlu0 %1315
      %v1317 = vsel %vm1046, %v1285, -inf
      %1318 = vmax.xlane.f32.xlu0 %v1317
      %v1319 = vpop.xlane.xlu0 %1318
      %v1320 = vsel %vm1046, %v1286, -inf
      %1321 = vmax.xlane.f32.xlu0 %v1320
      %v1322 = vpop.xlane.xlu0 %1321
      %v1323 = vsel %vm1046, %v1287, -inf
      %1324 = vmax.xlane.f32.xlu0 %v1323
      %v1325 = vpop.xlane.xlu0 %1324
      %v1326 = vsel %vm1046, %v1288, -inf
      %1327 = vmax.xlane.f32.xlu0 %v1326
      %v1328 = vpop.xlane.xlu0 %1327
      %v1329 = vsel %vm1046, %v1289, -inf
      %1330 = vmax.xlane.f32.xlu0 %v1329
      %v1331 = vpop.xlane.xlu0 %1330
      %v1332 = vsel %vm1046, %v1290, -inf
      %1333 = vmax.xlane.f32.xlu0 %v1332
      %v1334 = vpop.xlane.xlu0 %1333
      %v1335 = vsel %vm1046, %v1291, -inf
      %1336 = vmax.xlane.f32.xlu0 %v1335
      %v1337 = vpop.xlane.xlu0 %1336
      %v1338 = vsel %vm1046, %v1292, -inf
      %1339 = vmax.xlane.f32.xlu0 %v1338
      %v1340 = vpop.xlane.xlu0 %1339
      %v1341 = vsub.f32 %v1277, %v1295
      %v1342 = vsub.f32 %v1278, %v1298
      %v1343 = vsub.f32 %v1279, %v1301
      %v1344 = vsub.f32 %v1280, %v1304
      %v1345 = vsub.f32 %v1281, %v1307
      %v1346 = vsub.f32 %v1282, %v1310
      %v1347 = vsub.f32 %v1283, %v1313
      %v1348 = vsub.f32 %v1284, %v1316
      %v1349 = vsub.f32 %v1285, %v1319
      %v1350 = vsub.f32 %v1286, %v1322
      %v1351 = vsub.f32 %v1287, %v1325
      %v1352 = vsub.f32 %v1288, %v1328
      %v1353 = vsub.f32 %v1289, %v1331
      %v1354 = vsub.f32 %v1290, %v1334
      %v1355 = vsub.f32 %v1291, %v1337
      %v1356 = vsub.f32 %v1292, %v1340
      %v1357 = vmul.f32 %v1341, 1.442695
      %v1358 = vpow.pop %v1357
      %v1359 = vmul.f32 %v1342, 1.442695
      %v1360 = vpow.pop %v1359
      %v1361 = vmul.f32 %v1343, 1.442695
      %v1362 = vpow.pop %v1361
      %v1363 = vmul.f32 %v1344, 1.442695
      %v1364 = vpow.pop %v1363
      %v1365 = vmul.f32 %v1345, 1.442695
      %v1366 = vpow.pop %v1365
      %v1367 = vmul.f32 %v1346, 1.442695
      %v1368 = vpow.pop %v1367
      %v1369 = vmul.f32 %v1347, 1.442695
      %v1370 = vpow.pop %v1369
      %v1371 = vmul.f32 %v1348, 1.442695
      %v1372 = vpow.pop %v1371
      %v1373 = vmul.f32 %v1349, 1.442695
      %v1374 = vpow.pop %v1373
      %v1375 = vmul.f32 %v1350, 1.442695
      %v1376 = vpow.pop %v1375
      %v1377 = vmul.f32 %v1351, 1.442695
      %v1378 = vpow.pop %v1377
      %v1379 = vmul.f32 %v1352, 1.442695
      %v1380 = vpow.pop %v1379
      %v1381 = vmul.f32 %v1353, 1.442695
      %v1382 = vpow.pop %v1381
      %v1383 = vmul.f32 %v1354, 1.442695
      %v1384 = vpow.pop %v1383
      %v1385 = vmul.f32 %v1355, 1.442695
      %v1386 = vpow.pop %v1385
      %v1387 = vmul.f32 %v1356, 1.442695
      %v1388 = vpow.pop %v1387
      %v1389 = vsel %vm1046, %v1358, 0.0
      %1390 = vadd.xlane.f32.xlu0 %v1389
      %v1391 = vpop.xlane.xlu0 %1390
      %v1392 = vsel %vm1046, %v1360, 0.0
      %1393 = vadd.xlane.f32.xlu0 %v1392
      %v1394 = vpop.xlane.xlu0 %1393
      %v1395 = vsel %vm1046, %v1362, 0.0
      %1396 = vadd.xlane.f32.xlu0 %v1395
      %v1397 = vpop.xlane.xlu0 %1396
      %v1398 = vsel %vm1046, %v1364, 0.0
      %1399 = vadd.xlane.f32.xlu0 %v1398
      %v1400 = vpop.xlane.xlu0 %1399
      %v1401 = vsel %vm1046, %v1366, 0.0
      %1402 = vadd.xlane.f32.xlu0 %v1401
      %v1403 = vpop.xlane.xlu0 %1402
      %v1404 = vsel %vm1046, %v1368, 0.0
      %1405 = vadd.xlane.f32.xlu0 %v1404
      %v1406 = vpop.xlane.xlu0 %1405
      %v1407 = vsel %vm1046, %v1370, 0.0
      %1408 = vadd.xlane.f32.xlu0 %v1407
      %v1409 = vpop.xlane.xlu0 %1408
      %v1410 = vsel %vm1046, %v1372, 0.0
      %1411 = vadd.xlane.f32.xlu0 %v1410
      %v1412 = vpop.xlane.xlu0 %1411
      %v1413 = vsel %vm1046, %v1374, 0.0
      %1414 = vadd.xlane.f32.xlu0 %v1413
      %v1415 = vpop.xlane.xlu0 %1414
      %v1416 = vsel %vm1046, %v1376, 0.0
      %1417 = vadd.xlane.f32.xlu0 %v1416
      %v1418 = vpop.xlane.xlu0 %1417
      %v1419 = vsel %vm1046, %v1378, 0.0
      %1420 = vadd.xlane.f32.xlu0 %v1419
      %v1421 = vpop.xlane.xlu0 %1420
      %v1422 = vsel %vm1046, %v1380, 0.0
      %1423 = vadd.xlane.f32.xlu0 %v1422
      %v1424 = vpop.xlane.xlu0 %1423
      %v1425 = vsel %vm1046, %v1382, 0.0
      %1426 = vadd.xlane.f32.xlu0 %v1425
      %v1427 = vpop.xlane.xlu0 %1426
      %v1428 = vsel %vm1046, %v1384, 0.0
      %1429 = vadd.xlane.f32.xlu0 %v1428
      %v1430 = vpop.xlane.xlu0 %1429
      %v1431 = vsel %vm1046, %v1386, 0.0
      %1432 = vadd.xlane.f32.xlu0 %v1431
      %v1433 = vpop.xlane.xlu0 %1432
      %v1434 = vsel %vm1046, %v1388, 0.0
      %1435 = vadd.xlane.f32.xlu0 %v1434
      %v1436 = vpop.xlane.xlu0 %1435
      %v1437 = vrcp.pop %v1391
      %v1438 = vrcp.pop %v1394
      %v1439 = vrcp.pop %v1397
      %v1440 = vrcp.pop %v1400
      %v1441 = vrcp.pop %v1403
      %v1442 = vrcp.pop %v1406
      %v1443 = vrcp.pop %v1409
      %v1444 = vrcp.pop %v1412
      %v1445 = vrcp.pop %v1415
      %v1446 = vrcp.pop %v1418
      %v1447 = vrcp.pop %v1421
      %v1448 = vrcp.pop %v1424
      %v1449 = vrcp.pop %v1427
      %v1450 = vrcp.pop %v1430
      %v1451 = vrcp.pop %v1433
      %v1452 = vrcp.pop %v1436
      %v1453 = vmul.f32 %v1358, %v1437
      %v1454 = vmul.f32 %v1360, %v1438
      %v1455 = vmul.f32 %v1362, %v1439
      %v1456 = vmul.f32 %v1364, %v1440
      %v1457 = vmul.f32 %v1366, %v1441
      %v1458 = vmul.f32 %v1368, %v1442
      %v1459 = vmul.f32 %v1370, %v1443
      %v1460 = vmul.f32 %v1372, %v1444
      %v1461 = vmul.f32 %v1374, %v1445
      %v1462 = vmul.f32 %v1376, %v1446
      %v1463 = vmul.f32 %v1378, %v1447
      %v1464 = vmul.f32 %v1380, %v1448
      %v1465 = vmul.f32 %v1382, %v1449
      %v1466 = vmul.f32 %v1384, %v1450
      %v1467 = vmul.f32 %v1386, %v1451
      %v1468 = vmul.f32 %v1388, %v1452
      %v1469 = vpack.c.bf16 %v1453, %v1453
      %v1470 = vpack.c.bf16 %v1454, %v1454
      %v1471 = vpack.c.bf16 %v1455, %v1455
      %v1472 = vpack.c.bf16 %v1456, %v1456
      %v1473 = vpack.c.bf16 %v1457, %v1457
      %v1474 = vpack.c.bf16 %v1458, %v1458
      %v1475 = vpack.c.bf16 %v1459, %v1459
      %v1476 = vpack.c.bf16 %v1460, %v1460
      %v1477 = vpack.c.bf16 %v1461, %v1461
      %v1478 = vpack.c.bf16 %v1462, %v1462
      %v1479 = vpack.c.bf16 %v1463, %v1463
      %v1480 = vpack.c.bf16 %v1464, %v1464
      %v1481 = vpack.c.bf16 %v1465, %v1465
      %v1482 = vpack.c.bf16 %v1466, %v1466
      %v1483 = vpack.c.bf16 %v1467, %v1467
      %v1484 = vpack.c.bf16 %v1468, %v1468
      %v1487 = vunpack.c.l.b16 %v1469
      %v1488 = vunpack.c.l.b16 %v1470
      %v1489 = vpack.c.b16 %v1488, %v1487
      %v1492 = vunpack.c.l.b16 %v1020
      %v1493 = vunpack.c.l.b16 %v1021
      %v1494 = vpack.c.b16 %v1493, %v1492
      %v1497 = vsel %vm1046, %v1489, 0
      %1499 = vmatpush.bf16.msra.mxu0 0
      %1500 = vmatpush.bf16.msra.mxu0 0
      %1501 = vmatpush.bf16.msra.mxu0 0
      %1502 = vmatpush.bf16.msra.mxu0 0
      %1503 = vmatpush.bf16.msra.mxu0 0
      %1504 = vmatpush.bf16.msra.mxu0 0
      %1505 = vmatpush.bf16.msra.mxu0 0
      %1506 = vmatpush.bf16.msra.mxu0 %v1494
      %1507 = vmatmul.bf16.gmra.mxu0 %v1497
      %v1508 = vpop.f32.mrf.mxu0
      %v1509 = vadd.f32 0.0, %v1508
      %v1510 = vpop.f32.mrf.mxu0
      %v1511 = vadd.f32 0.0, %v1510
      %1512 = vdwg.mxu0
      %v1515 = vunpack.c.l.b16 %v1471
      %v1516 = vunpack.c.l.b16 %v1472
      %v1517 = vpack.c.b16 %v1516, %v1515
      %v1520 = vunpack.c.l.b16 %v1022
      %v1521 = vunpack.c.l.b16 %v1023
      %v1522 = vpack.c.b16 %v1521, %v1520
      %v1525 = vsel %vm1046, %v1517, 0
      %1527 = vmatpush.bf16.msra.mxu0 0
      %1528 = vmatpush.bf16.msra.mxu0 0
      %1529 = vmatpush.bf16.msra.mxu0 0
      %1530 = vmatpush.bf16.msra.mxu0 0
      %1531 = vmatpush.bf16.msra.mxu0 0
      %1532 = vmatpush.bf16.msra.mxu0 0
      %1533 = vmatpush.bf16.msra.mxu0 0
      %1534 = vmatpush.bf16.msra.mxu0 %v1522
      %1535 = vmatmul.bf16.gmra.mxu0 %v1525
      %v1536 = vpop.f32.mrf.mxu0
      %v1537 = vadd.f32 0.0, %v1536
      %v1538 = vpop.f32.mrf.mxu0
      %v1539 = vadd.f32 0.0, %v1538
      %1540 = vdwg.mxu0
      %v1543 = vunpack.c.l.b16 %v1473
      %v1544 = vunpack.c.l.b16 %v1474
      %v1545 = vpack.c.b16 %v1544, %v1543
      %v1548 = vunpack.c.l.b16 %v1024
      %v1549 = vunpack.c.l.b16 %v1025
      %v1550 = vpack.c.b16 %v1549, %v1548
      %v1553 = vsel %vm1046, %v1545, 0
      %1555 = vmatpush.bf16.msra.mxu0 0
      %1556 = vmatpush.bf16.msra.mxu0 0
      %1557 = vmatpush.bf16.msra.mxu0 0
      %1558 = vmatpush.bf16.msra.mxu0 0
      %1559 = vmatpush.bf16.msra.mxu0 0
      %1560 = vmatpush.bf16.msra.mxu0 0
      %1561 = vmatpush.bf16.msra.mxu0 0
      %1562 = vmatpush.bf16.msra.mxu0 %v1550
      %1563 = vmatmul.bf16.gmra.mxu0 %v1553
      %v1564 = vpop.f32.mrf.mxu0
      %v1565 = vadd.f32 0.0, %v1564
      %v1566 = vpop.f32.mrf.mxu0
      %v1567 = vadd.f32 0.0, %v1566
      %1568 = vdwg.mxu0
      %v1571 = vunpack.c.l.b16 %v1475
      %v1572 = vunpack.c.l.b16 %v1476
      %v1573 = vpack.c.b16 %v1572, %v1571
      %v1576 = vunpack.c.l.b16 %v1026
      %v1577 = vunpack.c.l.b16 %v1027
      %v1578 = vpack.c.b16 %v1577, %v1576
      %v1581 = vsel %vm1046, %v1573, 0
      %1583 = vmatpush.bf16.msra.mxu0 0
      %1584 = vmatpush.bf16.msra.mxu0 0
      %1585 = vmatpush.bf16.msra.mxu0 0
      %1586 = vmatpush.bf16.msra.mxu0 0
      %1587 = vmatpush.bf16.msra.mxu0 0
      %1588 = vmatpush.bf16.msra.mxu0 0
      %1589 = vmatpush.bf16.msra.mxu0 0
      %1590 = vmatpush.bf16.msra.mxu0 %v1578
      %1591 = vmatmul.bf16.gmra.mxu0 %v1581
      %v1592 = vpop.f32.mrf.mxu0
      %v1593 = vadd.f32 0.0, %v1592
      %v1594 = vpop.f32.mrf.mxu0
      %v1595 = vadd.f32 0.0, %v1594
      %1596 = vdwg.mxu0
      %v1599 = vunpack.c.l.b16 %v1477
      %v1600 = vunpack.c.l.b16 %v1478
      %v1601 = vpack.c.b16 %v1600, %v1599
      %v1604 = vunpack.c.l.b16 %v1028
      %v1605 = vunpack.c.l.b16 %v1029
      %v1606 = vpack.c.b16 %v1605, %v1604
      %v1609 = vsel %vm1046, %v1601, 0
      %1611 = vmatpush.bf16.msra.mxu0 0
      %1612 = vmatpush.bf16.msra.mxu0 0
      %1613 = vmatpush.bf16.msra.mxu0 0
      %1614 = vmatpush.bf16.msra.mxu0 0
      %1615 = vmatpush.bf16.msra.mxu0 0
      %1616 = vmatpush.bf16.msra.mxu0 0
      %1617 = vmatpush.bf16.msra.mxu0 0
      %1618 = vmatpush.bf16.msra.mxu0 %v1606
      %1619 = vmatmul.bf16.gmra.mxu0 %v1609
      %v1620 = vpop.f32.mrf.mxu0
      %v1621 = vadd.f32 0.0, %v1620
      %v1622 = vpop.f32.mrf.mxu0
      %v1623 = vadd.f32 0.0, %v1622
      %1624 = vdwg.mxu0
      %v1627 = vunpack.c.l.b16 %v1479
      %v1628 = vunpack.c.l.b16 %v1480
      %v1629 = vpack.c.b16 %v1628, %v1627
      %v1632 = vunpack.c.l.b16 %v1030
      %v1633 = vunpack.c.l.b16 %v1031
      %v1634 = vpack.c.b16 %v1633, %v1632
      %v1637 = vsel %vm1046, %v1629, 0
      %1639 = vmatpush.bf16.msra.mxu0 0
      %1640 = vmatpush.bf16.msra.mxu0 0
      %1641 = vmatpush.bf16.msra.mxu0 0
      %1642 = vmatpush.bf16.msra.mxu0 0
      %1643 = vmatpush.bf16.msra.mxu0 0
      %1644 = vmatpush.bf16.msra.mxu0 0
      %1645 = vmatpush.bf16.msra.mxu0 0
      %1646 = vmatpush.bf16.msra.mxu0 %v1634
      %1647 = vmatmul.bf16.gmra.mxu0 %v1637
      %v1648 = vpop.f32.mrf.mxu0
      %v1649 = vadd.f32 0.0, %v1648
      %v1650 = vpop.f32.mrf.mxu0
      %v1651 = vadd.f32 0.0, %v1650
      %1652 = vdwg.mxu0
      %v1655 = vunpack.c.l.b16 %v1481
      %v1656 = vunpack.c.l.b16 %v1482
      %v1657 = vpack.c.b16 %v1656, %v1655
      %v1660 = vunpack.c.l.b16 %v1032
      %v1661 = vunpack.c.l.b16 %v1033
      %v1662 = vpack.c.b16 %v1661, %v1660
      %v1665 = vsel %vm1046, %v1657, 0
      %1667 = vmatpush.bf16.msra.mxu0 0
      %1668 = vmatpush.bf16.msra.mxu0 0
      %1669 = vmatpush.bf16.msra.mxu0 0
      %1670 = vmatpush.bf16.msra.mxu0 0
      %1671 = vmatpush.bf16.msra.mxu0 0
      %1672 = vmatpush.bf16.msra.mxu0 0
      %1673 = vmatpush.bf16.msra.mxu0 0
      %1674 = vmatpush.bf16.msra.mxu0 %v1662
      %1675 = vmatmul.bf16.gmra.mxu0 %v1665
      %v1676 = vpop.f32.mrf.mxu0
      %v1677 = vadd.f32 0.0, %v1676
      %v1678 = vpop.f32.mrf.mxu0
      %v1679 = vadd.f32 0.0, %v1678
      %1680 = vdwg.mxu0
      %v1683 = vunpack.c.l.b16 %v1483
      %v1684 = vunpack.c.l.b16 %v1484
      %v1685 = vpack.c.b16 %v1684, %v1683
      %v1688 = vunpack.c.l.b16 %v1034
      %v1689 = vunpack.c.l.b16 %v1035
      %v1690 = vpack.c.b16 %v1689, %v1688
      %v1693 = vsel %vm1046, %v1685, 0
      %1695 = vmatpush.bf16.msra.mxu0 0
      %1696 = vmatpush.bf16.msra.mxu0 0
      %1697 = vmatpush.bf16.msra.mxu0 0
      %1698 = vmatpush.bf16.msra.mxu0 0
      %1699 = vmatpush.bf16.msra.mxu0 0
      %1700 = vmatpush.bf16.msra.mxu0 0
      %1701 = vmatpush.bf16.msra.mxu0 0
      %1702 = vmatpush.bf16.msra.mxu0 %v1690
      %1703 = vmatmul.bf16.gmra.mxu0 %v1693
      %v1704 = vpop.f32.mrf.mxu0
      %v1705 = vadd.f32 0.0, %v1704
      %v1706 = vpop.f32.mrf.mxu0
      %v1707 = vadd.f32 0.0, %v1706
      %1708 = vdwg.mxu0
      %1711 = vrot.lane.b32.xlu0 %v1537, 16
      %v1712 = vpop.permute.xlu0 %1711
      %1713 = vrot.lane.b32.xlu0 %v1539, 16
      %v1714 = vpop.permute.xlu0 %1713
      %1719 = vrot.lane.b32.xlu0 %v1565, 32
      %v1720 = vpop.permute.xlu0 %1719
      %1721 = vrot.lane.b32.xlu0 %v1567, 32
      %v1722 = vpop.permute.xlu0 %1721
      %1727 = vrot.lane.b32.xlu0 %v1593, 48
      %v1728 = vpop.permute.xlu0 %1727
      %1729 = vrot.lane.b32.xlu0 %v1595, 48
      %v1730 = vpop.permute.xlu0 %1729
      %1735 = vrot.lane.b32.xlu0 %v1621, 64
      %v1736 = vpop.permute.xlu0 %1735
      %1737 = vrot.lane.b32.xlu0 %v1623, 64
      %v1738 = vpop.permute.xlu0 %1737
      %1743 = vrot.lane.b32.xlu0 %v1649, 80
      %v1744 = vpop.permute.xlu0 %1743
      %1745 = vrot.lane.b32.xlu0 %v1651, 80
      %v1746 = vpop.permute.xlu0 %1745
      %1751 = vrot.lane.b32.xlu0 %v1677, 96
      %v1752 = vpop.permute.xlu0 %1751
      %1753 = vrot.lane.b32.xlu0 %v1679, 96
      %v1754 = vpop.permute.xlu0 %1753
      %1759 = vrot.lane.b32.xlu0 %v1705, 112
      %v1760 = vpop.permute.xlu0 %1759
      %1761 = vrot.lane.b32.xlu0 %v1707, 112
      %v1762 = vpop.permute.xlu0 %1761
      %v1765 = vsel %vm1046, %v1509, %v1712
      %v1766 = vsel %vm1046, %v1511, %v1714
      %vm1767 = vcmask 261120
      %v1768 = vsel %vm1767, %v1765, %v1720
      %v1769 = vsel %vm1767, %v1766, %v1722
      %vm1770 = vcmask 392192
      %v1771 = vsel %vm1770, %v1768, %v1728
      %v1772 = vsel %vm1770, %v1769, %v1730
      %v1773 = vsel %vm627, %v1771, %v1736
      %v1774 = vsel %vm627, %v1772, %v1738
      %vm1775 = vcmask 654336
      %v1776 = vsel %vm1775, %v1773, %v1744
      %v1777 = vsel %vm1775, %v1774, %v1746
      %vm1778 = vcmask 785408
      %v1779 = vsel %vm1778, %v1776, %v1752
      %v1780 = vsel %vm1778, %v1777, %v1754
      %vm1781 = vcmask 916480
      %v1782 = vsel %vm1781, %v1779, %v1760
      %v1783 = vsel %vm1781, %v1780, %v1762
      %v1784 = vpack.c.bf16 %v1783, %v1782
      %v1785 = vld [vmem:[%s6] sm:$0xf]
      %v1786 = vld [vmem:[%s6 + $0x4] sm:$0xf]
      %v1787 = vld [vmem:[%s6 + $0x8] sm:$0xf]
      %v1788 = vld [vmem:[%s6 + $0xc] sm:$0xf]
      %v1789 = vld [vmem:[%s6 + $0x10] sm:$0xf]
      %v1790 = vld [vmem:[%s6 + $0x14] sm:$0xf]
      %v1791 = vld [vmem:[%s6 + $0x18] sm:$0xf]
      %v1792 = vld [vmem:[%s6 + $0x1c] sm:$0xf]
      %v1793 = vld [vmem:[%s6 + $0x20] sm:$0xf]
      %v1794 = vld [vmem:[%s6 + $0x24] sm:$0xf]
      %v1795 = vld [vmem:[%s6 + $0x28] sm:$0xf]
      %v1796 = vld [vmem:[%s6 + $0x2c] sm:$0xf]
      %v1797 = vld [vmem:[%s6 + $0x30] sm:$0xf]
      %v1798 = vld [vmem:[%s6 + $0x34] sm:$0xf]
      %v1799 = vld [vmem:[%s6 + $0x38] sm:$0xf]
      %v1800 = vld [vmem:[%s6 + $0x3c] sm:$0xf]
      %v1801 = vld [vmem:[%s7] sm:$0x1]
      %v1803 = vperm.slane %v1801, 0
      %v1821 = vunpack.c.l.b16 %v1785
      %v1822 = vunpack.c.l.b16 %v1786
      %v1823 = vunpack.c.l.b16 %v1787
      %v1824 = vunpack.c.l.b16 %v1788
      %v1825 = vunpack.c.l.b16 %v1789
      %v1826 = vunpack.c.l.b16 %v1790
      %v1827 = vunpack.c.l.b16 %v1791
      %v1828 = vunpack.c.l.b16 %v1792
      %v1829 = vunpack.c.l.b16 %v1793
      %v1830 = vunpack.c.l.b16 %v1794
      %v1831 = vunpack.c.l.b16 %v1795
      %v1832 = vunpack.c.l.b16 %v1796
      %v1833 = vunpack.c.l.b16 %v1797
      %v1834 = vunpack.c.l.b16 %v1798
      %v1835 = vunpack.c.l.b16 %v1799
      %v1836 = vunpack.c.l.b16 %v1800
      %v1837 = vpack.c.b16 %v1822, %v1821
      %v1838 = vpack.c.b16 %v1824, %v1823
      %v1839 = vpack.c.b16 %v1826, %v1825
      %v1840 = vpack.c.b16 %v1828, %v1827
      %v1841 = vpack.c.b16 %v1830, %v1829
      %v1842 = vpack.c.b16 %v1832, %v1831
      %v1843 = vpack.c.b16 %v1834, %v1833
      %v1844 = vpack.c.b16 %v1836, %v1835
      %1853 = vmatpush.bf16.msra.mxu0 %v1844
      %1854 = vmatpush.bf16.msra.mxu0 %v1843
      %1855 = vmatpush.bf16.msra.mxu0 %v1842
      %1856 = vmatpush.bf16.msra.mxu0 %v1841
      %1857 = vmatpush.bf16.msra.mxu0 %v1840
      %1858 = vmatpush.bf16.msra.mxu0 %v1839
      %1859 = vmatpush.bf16.msra.mxu0 %v1838
      %1860 = vmatpush.bf16.msra.mxu0 %v1837
      %1861 = vmatmul.bf16.gmra.mxu0 %v1784
      %v1862 = vpop.f32.mrf.mxu0
      %v1863 = vadd.f32 %v1803, %v1862
      %v1864 = vpop.f32.mrf.mxu0
      %v1865 = vadd.f32 %v1803, %v1864
      %1866 = vdwg.mxu0
      %v1867 = vadd.f32 %v644, %v1863
      %v1868 = vadd.f32 %v641, %v1865
      %v1869 = vld [vmem:[%s8] sm:$0x1]
      %v1870 = vld [vmem:[%s9] sm:$0x1]
      %1871 = vadd.xlane.f32.xlu0 %v1867
      %v1872 = vpop.xlane.xlu0 %1871
      %1873 = vadd.xlane.f32.xlu0 %v1868
      %v1874 = vpop.xlane.xlu0 %1873
      %v1875 = vrcp.pop 128.0
      %v1876 = vmul.f32 128.0, %v1875
      %v1877 = vsub.f32 1.0, %v1876
      %v1878 = vmul.f32 %v1875, %v1877
      %v1879 = vadd.f32 %v1875, %v1878
      %vm1880 = vweird.f32 %v1875
      %v1881 = vsel %vm1880, %v1875, %v1879
      %v1882 = vmul.f32 %v1872, %v1881
      %v1883 = vmul.f32 %v1874, %v1881
      %v1884 = vsub.f32 %v1867, %v1882
      %v1885 = vsub.f32 %v1868, %v1883
      %v1886 = vmul.f32 %v1884, %v1884
      %v1887 = vmul.f32 %v1885, %v1885
      %1888 = vadd.xlane.f32.xlu0 %v1886
      %v1889 = vpop.xlane.xlu0 %1888
      %1890 = vadd.xlane.f32.xlu0 %v1887
      %v1891 = vpop.xlane.xlu0 %1890
      %v1892 = vmul.f32 %v1889, %v1881
      %v1893 = vmul.f32 %v1891, %v1881
      %v1894 = vadd.f32 %v1892, 1e-05
      %v1895 = vadd.f32 %v1893, 1e-05
      %v1896 = vrsqrt.pop %v1894
      %v1897 = vmul.f32 %v1896, %v1894
      %v1898 = vmul.f32 %v1897, %v1896
      %v1899 = vmul.f32 0.5, %v1898
      %v1900 = vsub.f32 1.5, %v1899
      %v1901 = vmul.f32 %v1896, %v1900
      %vm1902 = vweird.f32 %v1894
      %vm1903 = vweird.f32 %v1896
      %vm1904 = vmor %vm1902, %vm1903
      %v1905 = vsel %vm1904, %v1896, %v1901
      %v1906 = vrsqrt.pop %v1895
      %v1907 = vmul.f32 %v1906, %v1895
      %v1908 = vmul.f32 %v1907, %v1906
      %v1909 = vmul.f32 0.5, %v1908
      %v1910 = vsub.f32 1.5, %v1909
      %v1911 = vmul.f32 %v1906, %v1910
      %vm1912 = vweird.f32 %v1895
      %vm1913 = vweird.f32 %v1906
      %vm1914 = vmor %vm1912, %vm1913
      %v1915 = vsel %vm1914, %v1906, %v1911
      %v1916 = vmul.f32 %v1884, %v1905
      %v1917 = vmul.f32 %v1885, %v1915
      %v1919 = vperm.slane %v1869, 0
      %v1921 = vmul.f32 %v1916, %v1919
      %v1922 = vmul.f32 %v1917, %v1919
      %v1924 = vperm.slane %v1870, 0
      %v1926 = vadd.f32 %v1921, %v1924
      %v1927 = vadd.f32 %v1922, %v1924
      %v1928 = vpack.c.bf16 %v1927, %v1926
      %v1929 = vld [vmem:[%s10] sm:$0xff]
      %v1930 = vld [vmem:[%s10 + $0x8] sm:$0xff]
      %v1931 = vld [vmem:[%s10 + $0x10] sm:$0xff]
      %v1932 = vld [vmem:[%s10 + $0x18] sm:$0xff]
      %v1933 = vld [vmem:[%s10 + $0x20] sm:$0xff]
      %v1934 = vld [vmem:[%s10 + $0x28] sm:$0xff]
      %v1935 = vld [vmem:[%s10 + $0x30] sm:$0xff]
      %v1936 = vld [vmem:[%s10 + $0x38] sm:$0xff]
      %v1937 = vld [vmem:[%s10 + $0x40] sm:$0xff]
      %v1938 = vld [vmem:[%s10 + $0x48] sm:$0xff]
      %v1939 = vld [vmem:[%s10 + $0x50] sm:$0xff]
      %v1940 = vld [vmem:[%s10 + $0x58] sm:$0xff]
      %v1941 = vld [vmem:[%s10 + $0x60] sm:$0xff]
      %v1942 = vld [vmem:[%s10 + $0x68] sm:$0xff]
      %v1943 = vld [vmem:[%s10 + $0x70] sm:$0xff]
      %v1944 = vld [vmem:[%s10 + $0x78] sm:$0xff]
      %v1945 = vld [vmem:[%s10 + $0x80] sm:$0xff]
      %v1946 = vld [vmem:[%s10 + $0x88] sm:$0xff]
      %v1947 = vld [vmem:[%s10 + $0x90] sm:$0xff]
      %v1948 = vld [vmem:[%s10 + $0x98] sm:$0xff]
      %v1949 = vld [vmem:[%s10 + $0xa0] sm:$0xff]
      %v1950 = vld [vmem:[%s10 + $0xa8] sm:$0xff]
      %v1951 = vld [vmem:[%s10 + $0xb0] sm:$0xff]
      %v1952 = vld [vmem:[%s10 + $0xb8] sm:$0xff]
      %v1953 = vld [vmem:[%s10 + $0xc0] sm:$0xff]
      %v1954 = vld [vmem:[%s10 + $0xc8] sm:$0xff]
      %v1955 = vld [vmem:[%s10 + $0xd0] sm:$0xff]
      %v1956 = vld [vmem:[%s10 + $0xd8] sm:$0xff]
      %v1957 = vld [vmem:[%s10 + $0xe0] sm:$0xff]
      %v1958 = vld [vmem:[%s10 + $0xe8] sm:$0xff]
      %v1959 = vld [vmem:[%s10 + $0xf0] sm:$0xff]
      %v1960 = vld [vmem:[%s10 + $0xf8] sm:$0xff]
      %v1961 = vld [vmem:[%s11] sm:$0xf]
      %v1963 = vperm.slane %v1961, 0
      %v1964 = vperm.slane %v1961, 1
      %v1965 = vperm.slane %v1961, 2
      %v1966 = vperm.slane %v1961, 3
      %v2003 = vunpack.c.l.b16 %v1929
      %v2004 = vunpack.c.h.b16 %v1929
      %v2005 = vunpack.c.l.b16 %v1930
      %v2006 = vunpack.c.h.b16 %v1930
      %v2007 = vunpack.c.l.b16 %v1931
      %v2008 = vunpack.c.h.b16 %v1931
      %v2009 = vunpack.c.l.b16 %v1932
      %v2010 = vunpack.c.h.b16 %v1932
      %v2011 = vunpack.c.l.b16 %v1933
      %v2012 = vunpack.c.h.b16 %v1933
      %v2013 = vunpack.c.l.b16 %v1934
      %v2014 = vunpack.c.h.b16 %v1934
      %v2015 = vunpack.c.l.b16 %v1935
      %v2016 = vunpack.c.h.b16 %v1935
      %v2017 = vunpack.c.l.b16 %v1936
      %v2018 = vunpack.c.h.b16 %v1936
      %v2019 = vunpack.c.l.b16 %v1937
      %v2020 = vunpack.c.h.b16 %v1937
      %v2021 = vunpack.c.l.b16 %v1938
      %v2022 = vunpack.c.h.b16 %v1938
      %v2023 = vunpack.c.l.b16 %v1939
      %v2024 = vunpack.c.h.b16 %v1939
      %v2025 = vunpack.c.l.b16 %v1940
      %v2026 = vunpack.c.h.b16 %v1940
      %v2027 = vunpack.c.l.b16 %v1941
      %v2028 = vunpack.c.h.b16 %v1941
      %v2029 = vunpack.c.l.b16 %v1942
      %v2030 = vunpack.c.h.b16 %v1942
      %v2031 = vunpack.c.l.b16 %v1943
      %v2032 = vunpack.c.h.b16 %v1943
      %v2033 = vunpack.c.l.b16 %v1944
      %v2034 = vunpack.c.h.b16 %v1944
      %v2035 = vunpack.c.l.b16 %v1945
      %v2036 = vunpack.c.h.b16 %v1945
      %v2037 = vunpack.c.l.b16 %v1946
      %v2038 = vunpack.c.h.b16 %v1946
      %v2039 = vunpack.c.l.b16 %v1947
      %v2040 = vunpack.c.h.b16 %v1947
      %v2041 = vunpack.c.l.b16 %v1948
      %v2042 = vunpack.c.h.b16 %v1948
      %v2043 = vunpack.c.l.b16 %v1949
      %v2044 = vunpack.c.h.b16 %v1949
      %v2045 = vunpack.c.l.b16 %v1950
      %v2046 = vunpack.c.h.b16 %v1950
      %v2047 = vunpack.c.l.b16 %v1951
      %v2048 = vunpack.c.h.b16 %v1951
      %v2049 = vunpack.c.l.b16 %v1952
      %v2050 = vunpack.c.h.b16 %v1952
      %v2051 = vunpack.c.l.b16 %v1953
      %v2052 = vunpack.c.h.b16 %v1953
      %v2053 = vunpack.c.l.b16 %v1954
      %v2054 = vunpack.c.h.b16 %v1954
      %v2055 = vunpack.c.l.b16 %v1955
      %v2056 = vunpack.c.h.b16 %v1955
      %v2057 = vunpack.c.l.b16 %v1956
      %v2058 = vunpack.c.h.b16 %v1956
      %v2059 = vunpack.c.l.b16 %v1957
      %v2060 = vunpack.c.h.b16 %v1957
      %v2061 = vunpack.c.l.b16 %v1958
      %v2062 = vunpack.c.h.b16 %v1958
      %v2063 = vunpack.c.l.b16 %v1959
      %v2064 = vunpack.c.h.b16 %v1959
      %v2065 = vunpack.c.l.b16 %v1960
      %v2066 = vunpack.c.h.b16 %v1960
      %v2067 = vpack.c.b16 %v2007, %v2003
      %v2068 = vpack.c.b16 %v2008, %v2004
      %v2069 = vpack.c.b16 %v2009, %v2005
      %v2070 = vpack.c.b16 %v2010, %v2006
      %v2071 = vpack.c.b16 %v2015, %v2011
      %v2072 = vpack.c.b16 %v2016, %v2012
      %v2073 = vpack.c.b16 %v2017, %v2013
      %v2074 = vpack.c.b16 %v2018, %v2014
      %v2075 = vpack.c.b16 %v2023, %v2019
      %v2076 = vpack.c.b16 %v2024, %v2020
      %v2077 = vpack.c.b16 %v2025, %v2021
      %v2078 = vpack.c.b16 %v2026, %v2022
      %v2079 = vpack.c.b16 %v2031, %v2027
      %v2080 = vpack.c.b16 %v2032, %v2028
      %v2081 = vpack.c.b16 %v2033, %v2029
      %v2082 = vpack.c.b16 %v2034, %v2030
      %v2083 = vpack.c.b16 %v2039, %v2035
      %v2084 = vpack.c.b16 %v2040, %v2036
      %v2085 = vpack.c.b16 %v2041, %v2037
      %v2086 = vpack.c.b16 %v2042, %v2038
      %v2087 = vpack.c.b16 %v2047, %v2043
      %v2088 = vpack.c.b16 %v2048, %v2044
      %v2089 = vpack.c.b16 %v2049, %v2045
      %v2090 = vpack.c.b16 %v2050, %v2046
      %v2091 = vpack.c.b16 %v2055, %v2051
      %v2092 = vpack.c.b16 %v2056, %v2052
      %v2093 = vpack.c.b16 %v2057, %v2053
      %v2094 = vpack.c.b16 %v2058, %v2054
      %v2095 = vpack.c.b16 %v2063, %v2059
      %v2096 = vpack.c.b16 %v2064, %v2060
      %v2097 = vpack.c.b16 %v2065, %v2061
      %v2098 = vpack.c.b16 %v2066, %v2062
      %2131 = vmatpush.bf16.msra.mxu0 %v2095
      %2132 = vmatpush.bf16.msra.mxu0 %v2091
      %2133 = vmatpush.bf16.msra.mxu0 %v2087
      %2134 = vmatpush.bf16.msra.mxu0 %v2083
      %2135 = vmatpush.bf16.msra.mxu0 %v2079
      %2136 = vmatpush.bf16.msra.mxu0 %v2075
      %2137 = vmatpush.bf16.msra.mxu0 %v2071
      %2138 = vmatpush.bf16.msra.mxu0 %v2067
      %2139 = vmatmul.bf16.gmra.mxu0 %v1928
      %v2140 = vpop.f32.mrf.mxu0
      %v2141 = vadd.f32 %v1963, %v2140
      %v2142 = vpop.f32.mrf.mxu0
      %v2143 = vadd.f32 %v1963, %v2142
      %2144 = vdwg.mxu0
      %2145 = vmatpush.bf16.msra.mxu0 %v2096
      %2146 = vmatpush.bf16.msra.mxu0 %v2092
      %2147 = vmatpush.bf16.msra.mxu0 %v2088
      %2148 = vmatpush.bf16.msra.mxu0 %v2084
      %2149 = vmatpush.bf16.msra.mxu0 %v2080
      %2150 = vmatpush.bf16.msra.mxu0 %v2076
      %2151 = vmatpush.bf16.msra.mxu0 %v2072
      %2152 = vmatpush.bf16.msra.mxu0 %v2068
      %2153 = vmatmul.bf16.gmra.mxu0 %v1928
      %v2154 = vpop.f32.mrf.mxu0
      %v2155 = vadd.f32 %v1964, %v2154
      %v2156 = vpop.f32.mrf.mxu0
      %v2157 = vadd.f32 %v1964, %v2156
      %2158 = vdwg.mxu0
      %2159 = vmatpush.bf16.msra.mxu0 %v2097
      %2160 = vmatpush.bf16.msra.mxu0 %v2093
      %2161 = vmatpush.bf16.msra.mxu0 %v2089
      %2162 = vmatpush.bf16.msra.mxu0 %v2085
      %2163 = vmatpush.bf16.msra.mxu0 %v2081
      %2164 = vmatpush.bf16.msra.mxu0 %v2077
      %2165 = vmatpush.bf16.msra.mxu0 %v2073
      %2166 = vmatpush.bf16.msra.mxu0 %v2069
      %2167 = vmatmul.bf16.gmra.mxu0 %v1928
      %v2168 = vpop.f32.mrf.mxu0
      %v2169 = vadd.f32 %v1965, %v2168
      %v2170 = vpop.f32.mrf.mxu0
      %v2171 = vadd.f32 %v1965, %v2170
      %2172 = vdwg.mxu0
      %2173 = vmatpush.bf16.msra.mxu0 %v2098
      %2174 = vmatpush.bf16.msra.mxu0 %v2094
      %2175 = vmatpush.bf16.msra.mxu0 %v2090
      %2176 = vmatpush.bf16.msra.mxu0 %v2086
      %2177 = vmatpush.bf16.msra.mxu0 %v2082
      %2178 = vmatpush.bf16.msra.mxu0 %v2078
      %2179 = vmatpush.bf16.msra.mxu0 %v2074
      %2180 = vmatpush.bf16.msra.mxu0 %v2070
      %2181 = vmatmul.bf16.gmra.mxu0 %v1928
      %v2182 = vpop.f32.mrf.mxu0
      %v2183 = vadd.f32 %v1966, %v2182
      %v2184 = vpop.f32.mrf.mxu0
      %v2185 = vadd.f32 %v1966, %v2184
      %2186 = vdwg.mxu0
      %v2187 = vmax.f32 %v2141, 0.0
      %v2188 = vmax.f32 %v2155, 0.0
      %v2189 = vmax.f32 %v2169, 0.0
      %v2190 = vmax.f32 %v2183, 0.0
      %v2191 = vmax.f32 %v2143, 0.0
      %v2192 = vmax.f32 %v2157, 0.0
      %v2193 = vmax.f32 %v2171, 0.0
      %v2194 = vmax.f32 %v2185, 0.0
      %v2195 = vpack.c.bf16 %v2191, %v2187
      %v2196 = vpack.c.bf16 %v2192, %v2188
      %v2197 = vpack.c.bf16 %v2193, %v2189
      %v2198 = vpack.c.bf16 %v2194, %v2190
      %v2199 = vld [vmem:[%s12] sm:$0xf]
      %v2200 = vld [vmem:[%s12 + $0x4] sm:$0xf]
      %v2201 = vld [vmem:[%s12 + $0x8] sm:$0xf]
      %v2202 = vld [vmem:[%s12 + $0xc] sm:$0xf]
      %v2203 = vld [vmem:[%s12 + $0x10] sm:$0xf]
      %v2204 = vld [vmem:[%s12 + $0x14] sm:$0xf]
      %v2205 = vld [vmem:[%s12 + $0x18] sm:$0xf]
      %v2206 = vld [vmem:[%s12 + $0x1c] sm:$0xf]
      %v2207 = vld [vmem:[%s12 + $0x20] sm:$0xf]
      %v2208 = vld [vmem:[%s12 + $0x24] sm:$0xf]
      %v2209 = vld [vmem:[%s12 + $0x28] sm:$0xf]
      %v2210 = vld [vmem:[%s12 + $0x2c] sm:$0xf]
      %v2211 = vld [vmem:[%s12 + $0x30] sm:$0xf]
      %v2212 = vld [vmem:[%s12 + $0x34] sm:$0xf]
      %v2213 = vld [vmem:[%s12 + $0x38] sm:$0xf]
      %v2214 = vld [vmem:[%s12 + $0x3c] sm:$0xf]
      %v2215 = vld [vmem:[%s12 + $0x40] sm:$0xf]
      %v2216 = vld [vmem:[%s12 + $0x44] sm:$0xf]
      %v2217 = vld [vmem:[%s12 + $0x48] sm:$0xf]
      %v2218 = vld [vmem:[%s12 + $0x4c] sm:$0xf]
      %v2219 = vld [vmem:[%s12 + $0x50] sm:$0xf]
      %v2220 = vld [vmem:[%s12 + $0x54] sm:$0xf]
      %v2221 = vld [vmem:[%s12 + $0x58] sm:$0xf]
      %v2222 = vld [vmem:[%s12 + $0x5c] sm:$0xf]
      %v2223 = vld [vmem:[%s12 + $0x60] sm:$0xf]
      %v2224 = vld [vmem:[%s12 + $0x64] sm:$0xf]
      %v2225 = vld [vmem:[%s12 + $0x68] sm:$0xf]
      %v2226 = vld [vmem:[%s12 + $0x6c] sm:$0xf]
      %v2227 = vld [vmem:[%s12 + $0x70] sm:$0xf]
      %v2228 = vld [vmem:[%s12 + $0x74] sm:$0xf]
      %v2229 = vld [vmem:[%s12 + $0x78] sm:$0xf]
      %v2230 = vld [vmem:[%s12 + $0x7c] sm:$0xf]
      %v2231 = vld [vmem:[%s12 + $0x80] sm:$0xf]
      %v2232 = vld [vmem:[%s12 + $0x84] sm:$0xf]
      %v2233 = vld [vmem:[%s12 + $0x88] sm:$0xf]
      %v2234 = vld [vmem:[%s12 + $0x8c] sm:$0xf]
      %v2235 = vld [vmem:[%s12 + $0x90] sm:$0xf]
      %v2236 = vld [vmem:[%s12 + $0x94] sm:$0xf]
      %v2237 = vld [vmem:[%s12 + $0x98] sm:$0xf]
      %v2238 = vld [vmem:[%s12 + $0x9c] sm:$0xf]
      %v2239 = vld [vmem:[%s12 + $0xa0] sm:$0xf]
      %v2240 = vld [vmem:[%s12 + $0xa4] sm:$0xf]
      %v2241 = vld [vmem:[%s12 + $0xa8] sm:$0xf]
      %v2242 = vld [vmem:[%s12 + $0xac] sm:$0xf]
      %v2243 = vld [vmem:[%s12 + $0xb0] sm:$0xf]
      %v2244 = vld [vmem:[%s12 + $0xb4] sm:$0xf]
      %v2245 = vld [vmem:[%s12 + $0xb8] sm:$0xf]
      %v2246 = vld [vmem:[%s12 + $0xbc] sm:$0xf]
      %v2247 = vld [vmem:[%s12 + $0xc0] sm:$0xf]
      %v2248 = vld [vmem:[%s12 + $0xc4] sm:$0xf]
      %v2249 = vld [vmem:[%s12 + $0xc8] sm:$0xf]
      %v2250 = vld [vmem:[%s12 + $0xcc] sm:$0xf]
      %v2251 = vld [vmem:[%s12 + $0xd0] sm:$0xf]
      %v2252 = vld [vmem:[%s12 + $0xd4] sm:$0xf]
      %v2253 = vld [vmem:[%s12 + $0xd8] sm:$0xf]
      %v2254 = vld [vmem:[%s12 + $0xdc] sm:$0xf]
      %v2255 = vld [vmem:[%s12 + $0xe0] sm:$0xf]
      %v2256 = vld [vmem:[%s12 + $0xe4] sm:$0xf]
      %v2257 = vld [vmem:[%s12 + $0xe8] sm:$0xf]
      %v2258 = vld [vmem:[%s12 + $0xec] sm:$0xf]
      %v2259 = vld [vmem:[%s12 + $0xf0] sm:$0xf]
      %v2260 = vld [vmem:[%s12 + $0xf4] sm:$0xf]
      %v2261 = vld [vmem:[%s12 + $0xf8] sm:$0xf]
      %v2262 = vld [vmem:[%s12 + $0xfc] sm:$0xf]
      %v2263 = vld [vmem:[%s13] sm:$0x1]
      %v2265 = vperm.slane %v2263, 0
      %v2331 = vunpack.c.l.b16 %v2199
      %v2332 = vunpack.c.l.b16 %v2200
      %v2333 = vunpack.c.l.b16 %v2201
      %v2334 = vunpack.c.l.b16 %v2202
      %v2335 = vunpack.c.l.b16 %v2203
      %v2336 = vunpack.c.l.b16 %v2204
      %v2337 = vunpack.c.l.b16 %v2205
      %v2338 = vunpack.c.l.b16 %v2206
      %v2339 = vunpack.c.l.b16 %v2207
      %v2340 = vunpack.c.l.b16 %v2208
      %v2341 = vunpack.c.l.b16 %v2209
      %v2342 = vunpack.c.l.b16 %v2210
      %v2343 = vunpack.c.l.b16 %v2211
      %v2344 = vunpack.c.l.b16 %v2212
      %v2345 = vunpack.c.l.b16 %v2213
      %v2346 = vunpack.c.l.b16 %v2214
      %v2347 = vunpack.c.l.b16 %v2215
      %v2348 = vunpack.c.l.b16 %v2216
      %v2349 = vunpack.c.l.b16 %v2217
      %v2350 = vunpack.c.l.b16 %v2218
      %v2351 = vunpack.c.l.b16 %v2219
      %v2352 = vunpack.c.l.b16 %v2220
      %v2353 = vunpack.c.l.b16 %v2221
      %v2354 = vunpack.c.l.b16 %v2222
      %v2355 = vunpack.c.l.b16 %v2223
      %v2356 = vunpack.c.l.b16 %v2224
      %v2357 = vunpack.c.l.b16 %v2225
      %v2358 = vunpack.c.l.b16 %v2226
      %v2359 = vunpack.c.l.b16 %v2227
      %v2360 = vunpack.c.l.b16 %v2228
      %v2361 = vunpack.c.l.b16 %v2229
      %v2362 = vunpack.c.l.b16 %v2230
      %v2363 = vunpack.c.l.b16 %v2231
      %v2364 = vunpack.c.l.b16 %v2232
      %v2365 = vunpack.c.l.b16 %v2233
      %v2366 = vunpack.c.l.b16 %v2234
      %v2367 = vunpack.c.l.b16 %v2235
      %v2368 = vunpack.c.l.b16 %v2236
      %v2369 = vunpack.c.l.b16 %v2237
      %v2370 = vunpack.c.l.b16 %v2238
      %v2371 = vunpack.c.l.b16 %v2239
      %v2372 = vunpack.c.l.b16 %v2240
      %v2373 = vunpack.c.l.b16 %v2241
      %v2374 = vunpack.c.l.b16 %v2242
      %v2375 = vunpack.c.l.b16 %v2243
      %v2376 = vunpack.c.l.b16 %v2244
      %v2377 = vunpack.c.l.b16 %v2245
      %v2378 = vunpack.c.l.b16 %v2246
      %v2379 = vunpack.c.l.b16 %v2247
      %v2380 = vunpack.c.l.b16 %v2248
      %v2381 = vunpack.c.l.b16 %v2249
      %v2382 = vunpack.c.l.b16 %v2250
      %v2383 = vunpack.c.l.b16 %v2251
      %v2384 = vunpack.c.l.b16 %v2252
      %v2385 = vunpack.c.l.b16 %v2253
      %v2386 = vunpack.c.l.b16 %v2254
      %v2387 = vunpack.c.l.b16 %v2255
      %v2388 = vunpack.c.l.b16 %v2256
      %v2389 = vunpack.c.l.b16 %v2257
      %v2390 = vunpack.c.l.b16 %v2258
      %v2391 = vunpack.c.l.b16 %v2259
      %v2392 = vunpack.c.l.b16 %v2260
      %v2393 = vunpack.c.l.b16 %v2261
      %v2394 = vunpack.c.l.b16 %v2262
      %v2395 = vpack.c.b16 %v2332, %v2331
      %v2396 = vpack.c.b16 %v2334, %v2333
      %v2397 = vpack.c.b16 %v2336, %v2335
      %v2398 = vpack.c.b16 %v2338, %v2337
      %v2399 = vpack.c.b16 %v2340, %v2339
      %v2400 = vpack.c.b16 %v2342, %v2341
      %v2401 = vpack.c.b16 %v2344, %v2343
      %v2402 = vpack.c.b16 %v2346, %v2345
      %v2403 = vpack.c.b16 %v2348, %v2347
      %v2404 = vpack.c.b16 %v2350, %v2349
      %v2405 = vpack.c.b16 %v2352, %v2351
      %v2406 = vpack.c.b16 %v2354, %v2353
      %v2407 = vpack.c.b16 %v2356, %v2355
      %v2408 = vpack.c.b16 %v2358, %v2357
      %v2409 = vpack.c.b16 %v2360, %v2359
      %v2410 = vpack.c.b16 %v2362, %v2361
      %v2411 = vpack.c.b16 %v2364, %v2363
      %v2412 = vpack.c.b16 %v2366, %v2365
      %v2413 = vpack.c.b16 %v2368, %v2367
      %v2414 = vpack.c.b16 %v2370, %v2369
      %v2415 = vpack.c.b16 %v2372, %v2371
      %v2416 = vpack.c.b16 %v2374, %v2373
      %v2417 = vpack.c.b16 %v2376, %v2375
      %v2418 = vpack.c.b16 %v2378, %v2377
      %v2419 = vpack.c.b16 %v2380, %v2379
      %v2420 = vpack.c.b16 %v2382, %v2381
      %v2421 = vpack.c.b16 %v2384, %v2383
      %v2422 = vpack.c.b16 %v2386, %v2385
      %v2423 = vpack.c.b16 %v2388, %v2387
      %v2424 = vpack.c.b16 %v2390, %v2389
      %v2425 = vpack.c.b16 %v2392, %v2391
      %v2426 = vpack.c.b16 %v2394, %v2393
      %2459 = vmatpush.bf16.msra.mxu0 %v2402
      %2460 = vmatpush.bf16.msra.mxu0 %v2401
      %2461 = vmatpush.bf16.msra.mxu0 %v2400
      %2462 = vmatpush.bf16.msra.mxu0 %v2399
      %2463 = vmatpush.bf16.msra.mxu0 %v2398
      %2464 = vmatpush.bf16.msra.mxu0 %v2397
      %2465 = vmatpush.bf16.msra.mxu0 %v2396
      %2466 = vmatpush.bf16.msra.mxu0 %v2395
      %2467 = vmatmul.bf16.gmra.mxu0 %v2195
      %v2468 = vpop.f32.mrf.mxu0
      %v2469 = vadd.f32 %v2265, %v2468
      %v2470 = vpop.f32.mrf.mxu0
      %v2471 = vadd.f32 %v2265, %v2470
      %2472 = vdwg.mxu0
      %2473 = vmatpush.bf16.msra.mxu0 %v2410
      %2474 = vmatpush.bf16.msra.mxu0 %v2409
      %2475 = vmatpush.bf16.msra.mxu0 %v2408
      %2476 = vmatpush.bf16.msra.mxu0 %v2407
      %2477 = vmatpush.bf16.msra.mxu0 %v2406
      %2478 = vmatpush.bf16.msra.mxu0 %v2405
      %2479 = vmatpush.bf16.msra.mxu0 %v2404
      %2480 = vmatpush.bf16.msra.mxu0 %v2403
      %2481 = vmatmul.bf16.gmra.mxu0 %v2196
      %v2482 = vpop.f32.mrf.mxu0
      %v2483 = vadd.f32 %v2469, %v2482
      %v2484 = vpop.f32.mrf.mxu0
      %v2485 = vadd.f32 %v2471, %v2484
      %2486 = vdwg.mxu0
      %2487 = vmatpush.bf16.msra.mxu0 %v2418
      %2488 = vmatpush.bf16.msra.mxu0 %v2417
      %2489 = vmatpush.bf16.msra.mxu0 %v2416
      %2490 = vmatpush.bf16.msra.mxu0 %v2415
      %2491 = vmatpush.bf16.msra.mxu0 %v2414
      %2492 = vmatpush.bf16.msra.mxu0 %v2413
      %2493 = vmatpush.bf16.msra.mxu0 %v2412
      %2494 = vmatpush.bf16.msra.mxu0 %v2411
      %2495 = vmatmul.bf16.gmra.mxu0 %v2197
      %v2496 = vpop.f32.mrf.mxu0
      %v2497 = vadd.f32 %v2483, %v2496
      %v2498 = vpop.f32.mrf.mxu0
      %v2499 = vadd.f32 %v2485, %v2498
      %2500 = vdwg.mxu0
      %2501 = vmatpush.bf16.msra.mxu0 %v2426
      %2502 = vmatpush.bf16.msra.mxu0 %v2425
      %2503 = vmatpush.bf16.msra.mxu0 %v2424
      %2504 = vmatpush.bf16.msra.mxu0 %v2423
      %2505 = vmatpush.bf16.msra.mxu0 %v2422
      %2506 = vmatpush.bf16.msra.mxu0 %v2421
      %2507 = vmatpush.bf16.msra.mxu0 %v2420
      %2508 = vmatpush.bf16.msra.mxu0 %v2419
      %2509 = vmatmul.bf16.gmra.mxu0 %v2198
      %v2510 = vpop.f32.mrf.mxu0
      %v2511 = vadd.f32 %v2497, %v2510
      %v2512 = vpop.f32.mrf.mxu0
      %v2513 = vadd.f32 %v2499, %v2512
      %2514 = vdwg.mxu0
      %v2515 = vadd.f32 %v1926, %v2511
      %v2516 = vadd.f32 %v1927, %v2513
      %v2517 = vld [vmem:[%s14] sm:$0x1]
      %v2518 = vld [vmem:[%s15] sm:$0x1]
      %2519 = vadd.xlane.f32.xlu0 %v2515
      %v2520 = vpop.xlane.xlu0 %2519
      %2521 = vadd.xlane.f32.xlu0 %v2516
      %v2522 = vpop.xlane.xlu0 %2521
      %v2523 = vmul.f32 %v2520, %v1881
      %v2524 = vmul.f32 %v2522, %v1881
      %v2525 = vsub.f32 %v2515, %v2523
      %v2526 = vsub.f32 %v2516, %v2524
      %v2527 = vmul.f32 %v2525, %v2525
      %v2528 = vmul.f32 %v2526, %v2526
      %2529 = vadd.xlane.f32.xlu0 %v2527
      %v2530 = vpop.xlane.xlu0 %2529
      %2531 = vadd.xlane.f32.xlu0 %v2528
      %v2532 = vpop.xlane.xlu0 %2531
      %v2533 = vmul.f32 %v2530, %v1881
      %v2534 = vmul.f32 %v2532, %v1881
      %v2535 = vadd.f32 %v2533, 1e-05
      %v2536 = vadd.f32 %v2534, 1e-05
      %v2537 = vrsqrt.pop %v2535
      %v2538 = vmul.f32 %v2537, %v2535
      %v2539 = vmul.f32 %v2538, %v2537
      %v2540 = vmul.f32 0.5, %v2539
      %v2541 = vsub.f32 1.5, %v2540
      %v2542 = vmul.f32 %v2537, %v2541
      %vm2543 = vweird.f32 %v2535
      %vm2544 = vweird.f32 %v2537
      %vm2545 = vmor %vm2543, %vm2544
      %v2546 = vsel %vm2545, %v2537, %v2542
      %v2547 = vrsqrt.pop %v2536
      %v2548 = vmul.f32 %v2547, %v2536
      %v2549 = vmul.f32 %v2548, %v2547
      %v2550 = vmul.f32 0.5, %v2549
      %v2551 = vsub.f32 1.5, %v2550
      %v2552 = vmul.f32 %v2547, %v2551
      %vm2553 = vweird.f32 %v2536
      %vm2554 = vweird.f32 %v2547
      %vm2555 = vmor %vm2553, %vm2554
      %v2556 = vsel %vm2555, %v2547, %v2552
      %v2557 = vmul.f32 %v2525, %v2546
      %v2558 = vmul.f32 %v2526, %v2556
      %v2560 = vperm.slane %v2517, 0
      %v2562 = vmul.f32 %v2557, %v2560
      %v2563 = vmul.f32 %v2558, %v2560
      %v2565 = vperm.slane %v2518, 0
      %v2567 = vadd.f32 %v2562, %v2565
      %v2568 = vadd.f32 %v2563, %v2565
      %v2569 = vpack.c.bf16 %v2568, %v2567
      %s2570 = scalar_lea.vmem %s4, 192
      %v2571 = vld [vmem:[%s2570] sm:$0xff]
      %v2572 = vld [vmem:[%s2570 + $0x8] sm:$0xf]
      %v2573 = vld [vmem:[%s2570 + $0xc] sm:$0xff]
      %v2574 = vld [vmem:[%s2570 + $0x14] sm:$0xf]
      %v2575 = vld [vmem:[%s2570 + $0x18] sm:$0xff]
      %v2576 = vld [vmem:[%s2570 + $0x20] sm:$0xf]
      %v2577 = vld [vmem:[%s2570 + $0x24] sm:$0xff]
      %v2578 = vld [vmem:[%s2570 + $0x2c] sm:$0xf]
      %v2579 = vld [vmem:[%s2570 + $0x30] sm:$0xff]
      %v2580 = vld [vmem:[%s2570 + $0x38] sm:$0xf]
      %v2581 = vld [vmem:[%s2570 + $0x3c] sm:$0xff]
      %v2582 = vld [vmem:[%s2570 + $0x44] sm:$0xf]
      %v2583 = vld [vmem:[%s2570 + $0x48] sm:$0xff]
      %v2584 = vld [vmem:[%s2570 + $0x50] sm:$0xf]
      %v2585 = vld [vmem:[%s2570 + $0x54] sm:$0xff]
      %v2586 = vld [vmem:[%s2570 + $0x5c] sm:$0xf]
      %v2587 = vld [vmem:[%s2570 + $0x60] sm:$0xff]
      %v2588 = vld [vmem:[%s2570 + $0x68] sm:$0xf]
      %v2589 = vld [vmem:[%s2570 + $0x6c] sm:$0xff]
      %v2590 = vld [vmem:[%s2570 + $0x74] sm:$0xf]
      %v2591 = vld [vmem:[%s2570 + $0x78] sm:$0xff]
      %v2592 = vld [vmem:[%s2570 + $0x80] sm:$0xf]
      %v2593 = vld [vmem:[%s2570 + $0x84] sm:$0xff]
      %v2594 = vld [vmem:[%s2570 + $0x8c] sm:$0xf]
      %v2595 = vld [vmem:[%s2570 + $0x90] sm:$0xff]
      %v2596 = vld [vmem:[%s2570 + $0x98] sm:$0xf]
      %v2597 = vld [vmem:[%s2570 + $0x9c] sm:$0xff]
      %v2598 = vld [vmem:[%s2570 + $0xa4] sm:$0xf]
      %v2599 = vld [vmem:[%s2570 + $0xa8] sm:$0xff]
      %v2600 = vld [vmem:[%s2570 + $0xb0] sm:$0xf]
      %v2601 = vld [vmem:[%s2570 + $0xb4] sm:$0xff]
      %v2602 = vld [vmem:[%s2570 + $0xbc] sm:$0xf]
      %s2603 = scalar_lea.vmem %s5, 3
      %v2604 = vld [vmem:[%s2603] sm:$0x7]
      %v2606 = vperm.slane %v2604, 0
      %v2607 = vperm.slane %v2604, 1
      %v2608 = vperm.slane %v2604, 2
      %v2644 = vunpack.c.l.b16 %v2571
      %v2645 = vunpack.c.h.b16 %v2571
      %v2646 = vunpack.c.l.b16 %v2572
      %v2647 = vunpack.c.l.b16 %v2573
      %v2648 = vunpack.c.h.b16 %v2573
      %v2649 = vunpack.c.l.b16 %v2574
      %v2650 = vunpack.c.l.b16 %v2575
      %v2651 = vunpack.c.h.b16 %v2575
      %v2652 = vunpack.c.l.b16 %v2576
      %v2653 = vunpack.c.l.b16 %v2577
      %v2654 = vunpack.c.h.b16 %v2577
      %v2655 = vunpack.c.l.b16 %v2578
      %v2656 = vunpack.c.l.b16 %v2579
      %v2657 = vunpack.c.h.b16 %v2579
      %v2658 = vunpack.c.l.b16 %v2580
      %v2659 = vunpack.c.l.b16 %v2581
      %v2660 = vunpack.c.h.b16 %v2581
      %v2661 = vunpack.c.l.b16 %v2582
      %v2662 = vunpack.c.l.b16 %v2583
      %v2663 = vunpack.c.h.b16 %v2583
      %v2664 = vunpack.c.l.b16 %v2584
      %v2665 = vunpack.c.l.b16 %v2585
      %v2666 = vunpack.c.h.b16 %v2585
      %v2667 = vunpack.c.l.b16 %v2586
      %v2668 = vunpack.c.l.b16 %v2587
      %v2669 = vunpack.c.h.b16 %v2587
      %v2670 = vunpack.c.l.b16 %v2588
      %v2671 = vunpack.c.l.b16 %v2589
      %v2672 = vunpack.c.h.b16 %v2589
      %v2673 = vunpack.c.l.b16 %v2590
      %v2674 = vunpack.c.l.b16 %v2591
      %v2675 = vunpack.c.h.b16 %v2591
      %v2676 = vunpack.c.l.b16 %v2592
      %v2677 = vunpack.c.l.b16 %v2593
      %v2678 = vunpack.c.h.b16 %v2593
      %v2679 = vunpack.c.l.b16 %v2594
      %v2680 = vunpack.c.l.b16 %v2595
      %v2681 = vunpack.c.h.b16 %v2595
      %v2682 = vunpack.c.l.b16 %v2596
      %v2683 = vunpack.c.l.b16 %v2597
      %v2684 = vunpack.c.h.b16 %v2597
      %v2685 = vunpack.c.l.b16 %v2598
      %v2686 = vunpack.c.l.b16 %v2599
      %v2687 = vunpack.c.h.b16 %v2599
      %v2688 = vunpack.c.l.b16 %v2600
      %v2689 = vunpack.c.l.b16 %v2601
      %v2690 = vunpack.c.h.b16 %v2601
      %v2691 = vunpack.c.l.b16 %v2602
      %v2692 = vpack.c.b16 %v2647, %v2644
      %v2693 = vpack.c.b16 %v2648, %v2645
      %v2694 = vpack.c.b16 %v2649, %v2646
      %v2695 = vpack.c.b16 %v2653, %v2650
      %v2696 = vpack.c.b16 %v2654, %v2651
      %v2697 = vpack.c.b16 %v2655, %v2652
      %v2698 = vpack.c.b16 %v2659, %v2656
      %v2699 = vpack.c.b16 %v2660, %v2657
      %v2700 = vpack.c.b16 %v2661, %v2658
      %v2701 = vpack.c.b16 %v2665, %v2662
      %v2702 = vpack.c.b16 %v2666, %v2663
      %v2703 = vpack.c.b16 %v2667, %v2664
      %v2704 = vpack.c.b16 %v2671, %v2668
      %v2705 = vpack.c.b16 %v2672, %v2669
      %v2706 = vpack.c.b16 %v2673, %v2670
      %v2707 = vpack.c.b16 %v2677, %v2674
      %v2708 = vpack.c.b16 %v2678, %v2675
      %v2709 = vpack.c.b16 %v2679, %v2676
      %v2710 = vpack.c.b16 %v2683, %v2680
      %v2711 = vpack.c.b16 %v2684, %v2681
      %v2712 = vpack.c.b16 %v2685, %v2682
      %v2713 = vpack.c.b16 %v2689, %v2686
      %v2714 = vpack.c.b16 %v2690, %v2687
      %v2715 = vpack.c.b16 %v2691, %v2688
      %2740 = vmatpush.bf16.msra.mxu0 %v2713
      %2741 = vmatpush.bf16.msra.mxu0 %v2710
      %2742 = vmatpush.bf16.msra.mxu0 %v2707
      %2743 = vmatpush.bf16.msra.mxu0 %v2704
      %2744 = vmatpush.bf16.msra.mxu0 %v2701
      %2745 = vmatpush.bf16.msra.mxu0 %v2698
      %2746 = vmatpush.bf16.msra.mxu0 %v2695
      %2747 = vmatpush.bf16.msra.mxu0 %v2692
      %2748 = vmatmul.bf16.gmra.mxu0 %v2569
      %v2749 = vpop.f32.mrf.mxu0
      %v2750 = vadd.f32 %v2606, %v2749
      %v2751 = vpop.f32.mrf.mxu0
      %v2752 = vadd.f32 %v2606, %v2751
      %2753 = vdwg.mxu0
      %2754 = vmatpush.bf16.msra.mxu0 %v2714
      %2755 = vmatpush.bf16.msra.mxu0 %v2711
      %2756 = vmatpush.bf16.msra.mxu0 %v2708
      %2757 = vmatpush.bf16.msra.mxu0 %v2705
      %2758 = vmatpush.bf16.msra.mxu0 %v2702
      %2759 = vmatpush.bf16.msra.mxu0 %v2699
      %2760 = vmatpush.bf16.msra.mxu0 %v2696
      %2761 = vmatpush.bf16.msra.mxu0 %v2693
      %2762 = vmatmul.bf16.gmra.mxu0 %v2569
      %v2763 = vpop.f32.mrf.mxu0
      %v2764 = vadd.f32 %v2607, %v2763
      %v2765 = vpop.f32.mrf.mxu0
      %v2766 = vadd.f32 %v2607, %v2765
      %2767 = vdwg.mxu0
      %2768 = vmatpush.bf16.msra.mxu0 %v2715
      %2769 = vmatpush.bf16.msra.mxu0 %v2712
      %2770 = vmatpush.bf16.msra.mxu0 %v2709
      %2771 = vmatpush.bf16.msra.mxu0 %v2706
      %2772 = vmatpush.bf16.msra.mxu0 %v2703
      %2773 = vmatpush.bf16.msra.mxu0 %v2700
      %2774 = vmatpush.bf16.msra.mxu0 %v2697
      %2775 = vmatpush.bf16.msra.mxu0 %v2694
      %2776 = vmatmul.bf16.gmra.mxu0 %v2569
      %v2777 = vpop.f32.mrf.mxu0
      %v2778 = vadd.f32 %v2608, %v2777
      %v2779 = vpop.f32.mrf.mxu0
      %v2780 = vadd.f32 %v2608, %v2779
      %2781 = vdwg.mxu0
      %2784 = vrot.lane.b32.xlu0 %v2750, 112
      %v2785 = vpop.permute.xlu0 %2784
      %2786 = vrot.lane.b32.xlu0 %v2752, 112
      %v2787 = vpop.permute.xlu0 %2786
      %2790 = vrot.lane.b32.xlu0 %v2750, 96
      %v2791 = vpop.permute.xlu0 %2790
      %2792 = vrot.lane.b32.xlu0 %v2752, 96
      %v2793 = vpop.permute.xlu0 %2792
      %2796 = vrot.lane.b32.xlu0 %v2750, 80
      %v2797 = vpop.permute.xlu0 %2796
      %2798 = vrot.lane.b32.xlu0 %v2752, 80
      %v2799 = vpop.permute.xlu0 %2798
      %2802 = vrot.lane.b32.xlu0 %v2750, 64
      %v2803 = vpop.permute.xlu0 %2802
      %2804 = vrot.lane.b32.xlu0 %v2752, 64
      %v2805 = vpop.permute.xlu0 %2804
      %2808 = vrot.lane.b32.xlu0 %v2750, 48
      %v2809 = vpop.permute.xlu0 %2808
      %2810 = vrot.lane.b32.xlu0 %v2752, 48
      %v2811 = vpop.permute.xlu0 %2810
      %2814 = vrot.lane.b32.xlu0 %v2750, 32
      %v2815 = vpop.permute.xlu0 %2814
      %2816 = vrot.lane.b32.xlu0 %v2752, 32
      %v2817 = vpop.permute.xlu0 %2816
      %2820 = vrot.lane.b32.xlu0 %v2750, 16
      %v2821 = vpop.permute.xlu0 %2820
      %2822 = vrot.lane.b32.xlu0 %v2752, 16
      %v2823 = vpop.permute.xlu0 %2822
      %v2826 = vpack.c.bf16 %v2750, %v2750
      %v2827 = vpack.c.bf16 %v2752, %v2752
      %v2828 = vpack.c.bf16 %v2785, %v2785
      %v2829 = vpack.c.bf16 %v2787, %v2787
      %v2830 = vpack.c.bf16 %v2791, %v2791
      %v2831 = vpack.c.bf16 %v2793, %v2793
      %v2832 = vpack.c.bf16 %v2797, %v2797
      %v2833 = vpack.c.bf16 %v2799, %v2799
      %v2834 = vpack.c.bf16 %v2803, %v2803
      %v2835 = vpack.c.bf16 %v2805, %v2805
      %v2836 = vpack.c.bf16 %v2809, %v2809
      %v2837 = vpack.c.bf16 %v2811, %v2811
      %v2838 = vpack.c.bf16 %v2815, %v2815
      %v2839 = vpack.c.bf16 %v2817, %v2817
      %v2840 = vpack.c.bf16 %v2821, %v2821
      %v2841 = vpack.c.bf16 %v2823, %v2823
      %2844 = vrot.lane.b32.xlu0 %v2764, 112
      %v2845 = vpop.permute.xlu0 %2844
      %2846 = vrot.lane.b32.xlu0 %v2766, 112
      %v2847 = vpop.permute.xlu0 %2846
      %2850 = vrot.lane.b32.xlu0 %v2764, 96
      %v2851 = vpop.permute.xlu0 %2850
      %2852 = vrot.lane.b32.xlu0 %v2766, 96
      %v2853 = vpop.permute.xlu0 %2852
      %2856 = vrot.lane.b32.xlu0 %v2764, 80
      %v2857 = vpop.permute.xlu0 %2856
      %2858 = vrot.lane.b32.xlu0 %v2766, 80
      %v2859 = vpop.permute.xlu0 %2858
      %2862 = vrot.lane.b32.xlu0 %v2764, 64
      %v2863 = vpop.permute.xlu0 %2862
      %2864 = vrot.lane.b32.xlu0 %v2766, 64
      %v2865 = vpop.permute.xlu0 %2864
      %2868 = vrot.lane.b32.xlu0 %v2764, 48
      %v2869 = vpop.permute.xlu0 %2868
      %2870 = vrot.lane.b32.xlu0 %v2766, 48
      %v2871 = vpop.permute.xlu0 %2870
      %2874 = vrot.lane.b32.xlu0 %v2764, 32
      %v2875 = vpop.permute.xlu0 %2874
      %2876 = vrot.lane.b32.xlu0 %v2766, 32
      %v2877 = vpop.permute.xlu0 %2876
      %2880 = vrot.lane.b32.xlu0 %v2764, 16
      %v2881 = vpop.permute.xlu0 %2880
      %2882 = vrot.lane.b32.xlu0 %v2766, 16
      %v2883 = vpop.permute.xlu0 %2882
      %v2886 = vpack.c.bf16 %v2764, %v2764
      %v2887 = vpack.c.bf16 %v2766, %v2766
      %v2888 = vpack.c.bf16 %v2845, %v2845
      %v2889 = vpack.c.bf16 %v2847, %v2847
      %v2890 = vpack.c.bf16 %v2851, %v2851
      %v2891 = vpack.c.bf16 %v2853, %v2853
      %v2892 = vpack.c.bf16 %v2857, %v2857
      %v2893 = vpack.c.bf16 %v2859, %v2859
      %v2894 = vpack.c.bf16 %v2863, %v2863
      %v2895 = vpack.c.bf16 %v2865, %v2865
      %v2896 = vpack.c.bf16 %v2869, %v2869
      %v2897 = vpack.c.bf16 %v2871, %v2871
      %v2898 = vpack.c.bf16 %v2875, %v2875
      %v2899 = vpack.c.bf16 %v2877, %v2877
      %v2900 = vpack.c.bf16 %v2881, %v2881
      %v2901 = vpack.c.bf16 %v2883, %v2883
      %2904 = vrot.lane.b32.xlu0 %v2778, 112
      %v2905 = vpop.permute.xlu0 %2904
      %2906 = vrot.lane.b32.xlu0 %v2780, 112
      %v2907 = vpop.permute.xlu0 %2906
      %2910 = vrot.lane.b32.xlu0 %v2778, 96
      %v2911 = vpop.permute.xlu0 %2910
      %2912 = vrot.lane.b32.xlu0 %v2780, 96
      %v2913 = vpop.permute.xlu0 %2912
      %2916 = vrot.lane.b32.xlu0 %v2778, 80
      %v2917 = vpop.permute.xlu0 %2916
      %2918 = vrot.lane.b32.xlu0 %v2780, 80
      %v2919 = vpop.permute.xlu0 %2918
      %2922 = vrot.lane.b32.xlu0 %v2778, 64
      %v2923 = vpop.permute.xlu0 %2922
      %2924 = vrot.lane.b32.xlu0 %v2780, 64
      %v2925 = vpop.permute.xlu0 %2924
      %2928 = vrot.lane.b32.xlu0 %v2778, 48
      %v2929 = vpop.permute.xlu0 %2928
      %2930 = vrot.lane.b32.xlu0 %v2780, 48
      %v2931 = vpop.permute.xlu0 %2930
      %2934 = vrot.lane.b32.xlu0 %v2778, 32
      %v2935 = vpop.permute.xlu0 %2934
      %2936 = vrot.lane.b32.xlu0 %v2780, 32
      %v2937 = vpop.permute.xlu0 %2936
      %2940 = vrot.lane.b32.xlu0 %v2778, 16
      %v2941 = vpop.permute.xlu0 %2940
      %2942 = vrot.lane.b32.xlu0 %v2780, 16
      %v2943 = vpop.permute.xlu0 %2942
      %v2946 = vpack.c.bf16 %v2778, %v2778
      %v2947 = vpack.c.bf16 %v2780, %v2780
      %v2948 = vpack.c.bf16 %v2905, %v2905
      %v2949 = vpack.c.bf16 %v2907, %v2907
      %v2950 = vpack.c.bf16 %v2911, %v2911
      %v2951 = vpack.c.bf16 %v2913, %v2913
      %v2952 = vpack.c.bf16 %v2917, %v2917
      %v2953 = vpack.c.bf16 %v2919, %v2919
      %v2954 = vpack.c.bf16 %v2923, %v2923
      %v2955 = vpack.c.bf16 %v2925, %v2925
      %v2956 = vpack.c.bf16 %v2929, %v2929
      %v2957 = vpack.c.bf16 %v2931, %v2931
      %v2958 = vpack.c.bf16 %v2935, %v2935
      %v2959 = vpack.c.bf16 %v2937, %v2937
      %v2960 = vpack.c.bf16 %v2941, %v2941
      %v2961 = vpack.c.bf16 %v2943, %v2943
      %v2964 = vunpack.c.l.b16 %v2826
      %v2965 = vunpack.c.l.b16 %v2827
      %v2966 = vpack.c.b16 %v2965, %v2964
      %v2969 = vunpack.c.l.b16 %v2886
      %v2970 = vunpack.c.l.b16 %v2887
      %v2971 = vpack.c.b16 %v2970, %v2969
      %v2973 = vsel %vm1046, %v2966, 0
      %v2976 = vsel %vm1046, %v2971, 0
      %2978 = vmatpush.bf16.xpose.msra.mxu0 0
      %2979 = vmatpush.bf16.xpose.msra.mxu0 0
      %2980 = vmatpush.bf16.xpose.msra.mxu0 0
      %2981 = vmatpush.bf16.xpose.msra.mxu0 0
      %2982 = vmatpush.bf16.xpose.msra.mxu0 0
      %2983 = vmatpush.bf16.xpose.msra.mxu0 0
      %2984 = vmatpush.bf16.xpose.msra.mxu0 0
      %2985 = vmatpush.bf16.xpose.msra.mxu0 %v2976
      %2986 = vmatmul.bf16.gmra.mxu0 %v2973
      %v2987 = vpop.f32.mrf.mxu0
      %v2988 = vadd.f32 0.0, %v2987
      %v2989 = vpop.f32.mrf.mxu0
      %v2990 = vadd.f32 0.0, %v2989
      %2991 = vdwg.mxu0
      %v2994 = vunpack.c.l.b16 %v2828
      %v2995 = vunpack.c.l.b16 %v2829
      %v2996 = vpack.c.b16 %v2995, %v2994
      %v2999 = vunpack.c.l.b16 %v2888
      %v3000 = vunpack.c.l.b16 %v2889
      %v3001 = vpack.c.b16 %v3000, %v2999
      %v3003 = vsel %vm1046, %v2996, 0
      %v3006 = vsel %vm1046, %v3001, 0
      %3008 = vmatpush.bf16.xpose.msra.mxu0 0
      %3009 = vmatpush.bf16.xpose.msra.mxu0 0
      %3010 = vmatpush.bf16.xpose.msra.mxu0 0
      %3011 = vmatpush.bf16.xpose.msra.mxu0 0
      %3012 = vmatpush.bf16.xpose.msra.mxu0 0
      %3013 = vmatpush.bf16.xpose.msra.mxu0 0
      %3014 = vmatpush.bf16.xpose.msra.mxu0 0
      %3015 = vmatpush.bf16.xpose.msra.mxu0 %v3006
      %3016 = vmatmul.bf16.gmra.mxu0 %v3003
      %v3017 = vpop.f32.mrf.mxu0
      %v3018 = vadd.f32 0.0, %v3017
      %v3019 = vpop.f32.mrf.mxu0
      %v3020 = vadd.f32 0.0, %v3019
      %3021 = vdwg.mxu0
      %v3024 = vunpack.c.l.b16 %v2830
      %v3025 = vunpack.c.l.b16 %v2831
      %v3026 = vpack.c.b16 %v3025, %v3024
      %v3029 = vunpack.c.l.b16 %v2890
      %v3030 = vunpack.c.l.b16 %v2891
      %v3031 = vpack.c.b16 %v3030, %v3029
      %v3033 = vsel %vm1046, %v3026, 0
      %v3036 = vsel %vm1046, %v3031, 0
      %3038 = vmatpush.bf16.xpose.msra.mxu0 0
      %3039 = vmatpush.bf16.xpose.msra.mxu0 0
      %3040 = vmatpush.bf16.xpose.msra.mxu0 0
      %3041 = vmatpush.bf16.xpose.msra.mxu0 0
      %3042 = vmatpush.bf16.xpose.msra.mxu0 0
      %3043 = vmatpush.bf16.xpose.msra.mxu0 0
      %3044 = vmatpush.bf16.xpose.msra.mxu0 0
      %3045 = vmatpush.bf16.xpose.msra.mxu0 %v3036
      %3046 = vmatmul.bf16.gmra.mxu0 %v3033
      %v3047 = vpop.f32.mrf.mxu0
      %v3048 = vadd.f32 0.0, %v3047
      %v3049 = vpop.f32.mrf.mxu0
      %v3050 = vadd.f32 0.0, %v3049
      %3051 = vdwg.mxu0
      %v3054 = vunpack.c.l.b16 %v2832
      %v3055 = vunpack.c.l.b16 %v2833
      %v3056 = vpack.c.b16 %v3055, %v3054
      %v3059 = vunpack.c.l.b16 %v2892
      %v3060 = vunpack.c.l.b16 %v2893
      %v3061 = vpack.c.b16 %v3060, %v3059
      %v3063 = vsel %vm1046, %v3056, 0
      %v3066 = vsel %vm1046, %v3061, 0
      %3068 = vmatpush.bf16.xpose.msra.mxu0 0
      %3069 = vmatpush.bf16.xpose.msra.mxu0 0
      %3070 = vmatpush.bf16.xpose.msra.mxu0 0
      %3071 = vmatpush.bf16.xpose.msra.mxu0 0
      %3072 = vmatpush.bf16.xpose.msra.mxu0 0
      %3073 = vmatpush.bf16.xpose.msra.mxu0 0
      %3074 = vmatpush.bf16.xpose.msra.mxu0 0
      %3075 = vmatpush.bf16.xpose.msra.mxu0 %v3066
      %3076 = vmatmul.bf16.gmra.mxu0 %v3063
      %v3077 = vpop.f32.mrf.mxu0
      %v3078 = vadd.f32 0.0, %v3077
      %v3079 = vpop.f32.mrf.mxu0
      %v3080 = vadd.f32 0.0, %v3079
      %3081 = vdwg.mxu0
      %v3084 = vunpack.c.l.b16 %v2834
      %v3085 = vunpack.c.l.b16 %v2835
      %v3086 = vpack.c.b16 %v3085, %v3084
      %v3089 = vunpack.c.l.b16 %v2894
      %v3090 = vunpack.c.l.b16 %v2895
      %v3091 = vpack.c.b16 %v3090, %v3089
      %v3093 = vsel %vm1046, %v3086, 0
      %v3096 = vsel %vm1046, %v3091, 0
      %3098 = vmatpush.bf16.xpose.msra.mxu0 0
      %3099 = vmatpush.bf16.xpose.msra.mxu0 0
      %3100 = vmatpush.bf16.xpose.msra.mxu0 0
      %3101 = vmatpush.bf16.xpose.msra.mxu0 0
      %3102 = vmatpush.bf16.xpose.msra.mxu0 0
      %3103 = vmatpush.bf16.xpose.msra.mxu0 0
      %3104 = vmatpush.bf16.xpose.msra.mxu0 0
      %3105 = vmatpush.bf16.xpose.msra.mxu0 %v3096
      %3106 = vmatmul.bf16.gmra.mxu0 %v3093
      %v3107 = vpop.f32.mrf.mxu0
      %v3108 = vadd.f32 0.0, %v3107
      %v3109 = vpop.f32.mrf.mxu0
      %v3110 = vadd.f32 0.0, %v3109
      %3111 = vdwg.mxu0
      %v3114 = vunpack.c.l.b16 %v2836
      %v3115 = vunpack.c.l.b16 %v2837
      %v3116 = vpack.c.b16 %v3115, %v3114
      %v3119 = vunpack.c.l.b16 %v2896
      %v3120 = vunpack.c.l.b16 %v2897
      %v3121 = vpack.c.b16 %v3120, %v3119
      %v3123 = vsel %vm1046, %v3116, 0
      %v3126 = vsel %vm1046, %v3121, 0
      %3128 = vmatpush.bf16.xpose.msra.mxu0 0
      %3129 = vmatpush.bf16.xpose.msra.mxu0 0
      %3130 = vmatpush.bf16.xpose.msra.mxu0 0
      %3131 = vmatpush.bf16.xpose.msra.mxu0 0
      %3132 = vmatpush.bf16.xpose.msra.mxu0 0
      %3133 = vmatpush.bf16.xpose.msra.mxu0 0
      %3134 = vmatpush.bf16.xpose.msra.mxu0 0
      %3135 = vmatpush.bf16.xpose.msra.mxu0 %v3126
      %3136 = vmatmul.bf16.gmra.mxu0 %v3123
      %v3137 = vpop.f32.mrf.mxu0
      %v3138 = vadd.f32 0.0, %v3137
      %v3139 = vpop.f32.mrf.mxu0
      %v3140 = vadd.f32 0.0, %v3139
      %3141 = vdwg.mxu0
      %v3144 = vunpack.c.l.b16 %v2838
      %v3145 = vunpack.c.l.b16 %v2839
      %v3146 = vpack.c.b16 %v3145, %v3144
      %v3149 = vunpack.c.l.b16 %v2898
      %v3150 = vunpack.c.l.b16 %v2899
      %v3151 = vpack.c.b16 %v3150, %v3149
      %v3153 = vsel %vm1046, %v3146, 0
      %v3156 = vsel %vm1046, %v3151, 0
      %3158 = vmatpush.bf16.xpose.msra.mxu0 0
      %3159 = vmatpush.bf16.xpose.msra.mxu0 0
      %3160 = vmatpush.bf16.xpose.msra.mxu0 0
      %3161 = vmatpush.bf16.xpose.msra.mxu0 0
      %3162 = vmatpush.bf16.xpose.msra.mxu0 0
      %3163 = vmatpush.bf16.xpose.msra.mxu0 0
      %3164 = vmatpush.bf16.xpose.msra.mxu0 0
      %3165 = vmatpush.bf16.xpose.msra.mxu0 %v3156
      %3166 = vmatmul.bf16.gmra.mxu0 %v3153
      %v3167 = vpop.f32.mrf.mxu0
      %v3168 = vadd.f32 0.0, %v3167
      %v3169 = vpop.f32.mrf.mxu0
      %v3170 = vadd.f32 0.0, %v3169
      %3171 = vdwg.mxu0
      %v3174 = vunpack.c.l.b16 %v2840
      %v3175 = vunpack.c.l.b16 %v2841
      %v3176 = vpack.c.b16 %v3175, %v3174
      %v3179 = vunpack.c.l.b16 %v2900
      %v3180 = vunpack.c.l.b16 %v2901
      %v3181 = vpack.c.b16 %v3180, %v3179
      %v3183 = vsel %vm1046, %v3176, 0
      %v3186 = vsel %vm1046, %v3181, 0
      %3188 = vmatpush.bf16.xpose.msra.mxu0 0
      %3189 = vmatpush.bf16.xpose.msra.mxu0 0
      %3190 = vmatpush.bf16.xpose.msra.mxu0 0
      %3191 = vmatpush.bf16.xpose.msra.mxu0 0
      %3192 = vmatpush.bf16.xpose.msra.mxu0 0
      %3193 = vmatpush.bf16.xpose.msra.mxu0 0
      %3194 = vmatpush.bf16.xpose.msra.mxu0 0
      %3195 = vmatpush.bf16.xpose.msra.mxu0 %v3186
      %3196 = vmatmul.bf16.gmra.mxu0 %v3183
      %v3197 = vpop.f32.mrf.mxu0
      %v3198 = vadd.f32 0.0, %v3197
      %v3199 = vpop.f32.mrf.mxu0
      %v3200 = vadd.f32 0.0, %v3199
      %3201 = vdwg.mxu0
      %v3202 = vmul.f32 %v2988, 0.25
      %v3203 = vmul.f32 %v2990, 0.25
      %v3204 = vmul.f32 %v3018, 0.25
      %v3205 = vmul.f32 %v3020, 0.25
      %v3206 = vmul.f32 %v3048, 0.25
      %v3207 = vmul.f32 %v3050, 0.25
      %v3208 = vmul.f32 %v3078, 0.25
      %v3209 = vmul.f32 %v3080, 0.25
      %v3210 = vmul.f32 %v3108, 0.25
      %v3211 = vmul.f32 %v3110, 0.25
      %v3212 = vmul.f32 %v3138, 0.25
      %v3213 = vmul.f32 %v3140, 0.25
      %v3214 = vmul.f32 %v3168, 0.25
      %v3215 = vmul.f32 %v3170, 0.25
      %v3216 = vmul.f32 %v3198, 0.25
      %v3217 = vmul.f32 %v3200, 0.25
      %v3218 = vsel %vm1046, %v3202, -inf
      %3219 = vmax.xlane.f32.xlu0 %v3218
      %v3220 = vpop.xlane.xlu0 %3219
      %v3221 = vsel %vm1046, %v3203, -inf
      %3222 = vmax.xlane.f32.xlu0 %v3221
      %v3223 = vpop.xlane.xlu0 %3222
      %v3224 = vsel %vm1046, %v3204, -inf
      %3225 = vmax.xlane.f32.xlu0 %v3224
      %v3226 = vpop.xlane.xlu0 %3225
      %v3227 = vsel %vm1046, %v3205, -inf
      %3228 = vmax.xlane.f32.xlu0 %v3227
      %v3229 = vpop.xlane.xlu0 %3228
      %v3230 = vsel %vm1046, %v3206, -inf
      %3231 = vmax.xlane.f32.xlu0 %v3230
      %v3232 = vpop.xlane.xlu0 %3231
      %v3233 = vsel %vm1046, %v3207, -inf
      %3234 = vmax.xlane.f32.xlu0 %v3233
      %v3235 = vpop.xlane.xlu0 %3234
      %v3236 = vsel %vm1046, %v3208, -inf
      %3237 = vmax.xlane.f32.xlu0 %v3236
      %v3238 = vpop.xlane.xlu0 %3237
      %v3239 = vsel %vm1046, %v3209, -inf
      %3240 = vmax.xlane.f32.xlu0 %v3239
      %v3241 = vpop.xlane.xlu0 %3240
      %v3242 = vsel %vm1046, %v3210, -inf
      %3243 = vmax.xlane.f32.xlu0 %v3242
      %v3244 = vpop.xlane.xlu0 %3243
      %v3245 = vsel %vm1046, %v3211, -inf
      %3246 = vmax.xlane.f32.xlu0 %v3245
      %v3247 = vpop.xlane.xlu0 %3246
      %v3248 = vsel %vm1046, %v3212, -inf
      %3249 = vmax.xlane.f32.xlu0 %v3248
      %v3250 = vpop.xlane.xlu0 %3249
      %v3251 = vsel %vm1046, %v3213, -inf
      %3252 = vmax.xlane.f32.xlu0 %v3251
      %v3253 = vpop.xlane.xlu0 %3252
      %v3254 = vsel %vm1046, %v3214, -inf
      %3255 = vmax.xlane.f32.xlu0 %v3254
      %v3256 = vpop.xlane.xlu0 %3255
      %v3257 = vsel %vm1046, %v3215, -inf
      %3258 = vmax.xlane.f32.xlu0 %v3257
      %v3259 = vpop.xlane.xlu0 %3258
      %v3260 = vsel %vm1046, %v3216, -inf
      %3261 = vmax.xlane.f32.xlu0 %v3260
      %v3262 = vpop.xlane.xlu0 %3261
      %v3263 = vsel %vm1046, %v3217, -inf
      %3264 = vmax.xlane.f32.xlu0 %v3263
      %v3265 = vpop.xlane.xlu0 %3264
      %v3266 = vsub.f32 %v3202, %v3220
      %v3267 = vsub.f32 %v3203, %v3223
      %v3268 = vsub.f32 %v3204, %v3226
      %v3269 = vsub.f32 %v3205, %v3229
      %v3270 = vsub.f32 %v3206, %v3232
      %v3271 = vsub.f32 %v3207, %v3235
      %v3272 = vsub.f32 %v3208, %v3238
      %v3273 = vsub.f32 %v3209, %v3241
      %v3274 = vsub.f32 %v3210, %v3244
      %v3275 = vsub.f32 %v3211, %v3247
      %v3276 = vsub.f32 %v3212, %v3250
      %v3277 = vsub.f32 %v3213, %v3253
      %v3278 = vsub.f32 %v3214, %v3256
      %v3279 = vsub.f32 %v3215, %v3259
      %v3280 = vsub.f32 %v3216, %v3262
      %v3281 = vsub.f32 %v3217, %v3265
      %v3282 = vmul.f32 %v3266, 1.442695
      %v3283 = vpow.pop %v3282
      %v3284 = vmul.f32 %v3267, 1.442695
      %v3285 = vpow.pop %v3284
      %v3286 = vmul.f32 %v3268, 1.442695
      %v3287 = vpow.pop %v3286
      %v3288 = vmul.f32 %v3269, 1.442695
      %v3289 = vpow.pop %v3288
      %v3290 = vmul.f32 %v3270, 1.442695
      %v3291 = vpow.pop %v3290
      %v3292 = vmul.f32 %v3271, 1.442695
      %v3293 = vpow.pop %v3292
      %v3294 = vmul.f32 %v3272, 1.442695
      %v3295 = vpow.pop %v3294
      %v3296 = vmul.f32 %v3273, 1.442695
      %v3297 = vpow.pop %v3296
      %v3298 = vmul.f32 %v3274, 1.442695
      %v3299 = vpow.pop %v3298
      %v3300 = vmul.f32 %v3275, 1.442695
      %v3301 = vpow.pop %v3300
      %v3302 = vmul.f32 %v3276, 1.442695
      %v3303 = vpow.pop %v3302
      %v3304 = vmul.f32 %v3277, 1.442695
      %v3305 = vpow.pop %v3304
      %v3306 = vmul.f32 %v3278, 1.442695
      %v3307 = vpow.pop %v3306
      %v3308 = vmul.f32 %v3279, 1.442695
      %v3309 = vpow.pop %v3308
      %v3310 = vmul.f32 %v3280, 1.442695
      %v3311 = vpow.pop %v3310
      %v3312 = vmul.f32 %v3281, 1.442695
      %v3313 = vpow.pop %v3312
      %v3314 = vsel %vm1046, %v3283, 0.0
      %3315 = vadd.xlane.f32.xlu0 %v3314
      %v3316 = vpop.xlane.xlu0 %3315
      %v3317 = vsel %vm1046, %v3285, 0.0
      %3318 = vadd.xlane.f32.xlu0 %v3317
      %v3319 = vpop.xlane.xlu0 %3318
      %v3320 = vsel %vm1046, %v3287, 0.0
      %3321 = vadd.xlane.f32.xlu0 %v3320
      %v3322 = vpop.xlane.xlu0 %3321
      %v3323 = vsel %vm1046, %v3289, 0.0
      %3324 = vadd.xlane.f32.xlu0 %v3323
      %v3325 = vpop.xlane.xlu0 %3324
      %v3326 = vsel %vm1046, %v3291, 0.0
      %3327 = vadd.xlane.f32.xlu0 %v3326
      %v3328 = vpop.xlane.xlu0 %3327
      %v3329 = vsel %vm1046, %v3293, 0.0
      %3330 = vadd.xlane.f32.xlu0 %v3329
      %v3331 = vpop.xlane.xlu0 %3330
      %v3332 = vsel %vm1046, %v3295, 0.0
      %3333 = vadd.xlane.f32.xlu0 %v3332
      %v3334 = vpop.xlane.xlu0 %3333
      %v3335 = vsel %vm1046, %v3297, 0.0
      %3336 = vadd.xlane.f32.xlu0 %v3335
      %v3337 = vpop.xlane.xlu0 %3336
      %v3338 = vsel %vm1046, %v3299, 0.0
      %3339 = vadd.xlane.f32.xlu0 %v3338
      %v3340 = vpop.xlane.xlu0 %3339
      %v3341 = vsel %vm1046, %v3301, 0.0
      %3342 = vadd.xlane.f32.xlu0 %v3341
      %v3343 = vpop.xlane.xlu0 %3342
      %v3344 = vsel %vm1046, %v3303, 0.0
      %3345 = vadd.xlane.f32.xlu0 %v3344
      %v3346 = vpop.xlane.xlu0 %3345
      %v3347 = vsel %vm1046, %v3305, 0.0
      %3348 = vadd.xlane.f32.xlu0 %v3347
      %v3349 = vpop.xlane.xlu0 %3348
      %v3350 = vsel %vm1046, %v3307, 0.0
      %3351 = vadd.xlane.f32.xlu0 %v3350
      %v3352 = vpop.xlane.xlu0 %3351
      %v3353 = vsel %vm1046, %v3309, 0.0
      %3354 = vadd.xlane.f32.xlu0 %v3353
      %v3355 = vpop.xlane.xlu0 %3354
      %v3356 = vsel %vm1046, %v3311, 0.0
      %3357 = vadd.xlane.f32.xlu0 %v3356
      %v3358 = vpop.xlane.xlu0 %3357
      %v3359 = vsel %vm1046, %v3313, 0.0
      %3360 = vadd.xlane.f32.xlu0 %v3359
      %v3361 = vpop.xlane.xlu0 %3360
      %v3362 = vrcp.pop %v3316
      %v3363 = vrcp.pop %v3319
      %v3364 = vrcp.pop %v3322
      %v3365 = vrcp.pop %v3325
      %v3366 = vrcp.pop %v3328
      %v3367 = vrcp.pop %v3331
      %v3368 = vrcp.pop %v3334
      %v3369 = vrcp.pop %v3337
      %v3370 = vrcp.pop %v3340
      %v3371 = vrcp.pop %v3343
      %v3372 = vrcp.pop %v3346
      %v3373 = vrcp.pop %v3349
      %v3374 = vrcp.pop %v3352
      %v3375 = vrcp.pop %v3355
      %v3376 = vrcp.pop %v3358
      %v3377 = vrcp.pop %v3361
      %v3378 = vmul.f32 %v3283, %v3362
      %v3379 = vmul.f32 %v3285, %v3363
      %v3380 = vmul.f32 %v3287, %v3364
      %v3381 = vmul.f32 %v3289, %v3365
      %v3382 = vmul.f32 %v3291, %v3366
      %v3383 = vmul.f32 %v3293, %v3367
      %v3384 = vmul.f32 %v3295, %v3368
      %v3385 = vmul.f32 %v3297, %v3369
      %v3386 = vmul.f32 %v3299, %v3370
      %v3387 = vmul.f32 %v3301, %v3371
      %v3388 = vmul.f32 %v3303, %v3372
      %v3389 = vmul.f32 %v3305, %v3373
      %v3390 = vmul.f32 %v3307, %v3374
      %v3391 = vmul.f32 %v3309, %v3375
      %v3392 = vmul.f32 %v3311, %v3376
      %v3393 = vmul.f32 %v3313, %v3377
      %v3394 = vpack.c.bf16 %v3378, %v3378
      %v3395 = vpack.c.bf16 %v3379, %v3379
      %v3396 = vpack.c.bf16 %v3380, %v3380
      %v3397 = vpack.c.bf16 %v3381, %v3381
      %v3398 = vpack.c.bf16 %v3382, %v3382
      %v3399 = vpack.c.bf16 %v3383, %v3383
      %v3400 = vpack.c.bf16 %v3384, %v3384
      %v3401 = vpack.c.bf16 %v3385, %v3385
      %v3402 = vpack.c.bf16 %v3386, %v3386
      %v3403 = vpack.c.bf16 %v3387, %v3387
      %v3404 = vpack.c.bf16 %v3388, %v3388
      %v3405 = vpack.c.bf16 %v3389, %v3389
      %v3406 = vpack.c.bf16 %v3390, %v3390
      %v3407 = vpack.c.bf16 %v3391, %v3391
      %v3408 = vpack.c.bf16 %v3392, %v3392
      %v3409 = vpack.c.bf16 %v3393, %v3393
      %v3412 = vunpack.c.l.b16 %v3394
      %v3413 = vunpack.c.l.b16 %v3395
      %v3414 = vpack.c.b16 %v3413, %v3412
      %v3417 = vunpack.c.l.b16 %v2946
      %v3418 = vunpack.c.l.b16 %v2947
      %v3419 = vpack.c.b16 %v3418, %v3417
      %v3422 = vsel %vm1046, %v3414, 0
      %3424 = vmatpush.bf16.msra.mxu0 0
      %3425 = vmatpush.bf16.msra.mxu0 0
      %3426 = vmatpush.bf16.msra.mxu0 0
      %3427 = vmatpush.bf16.msra.mxu0 0
      %3428 = vmatpush.bf16.msra.mxu0 0
      %3429 = vmatpush.bf16.msra.mxu0 0
      %3430 = vmatpush.bf16.msra.mxu0 0
      %3431 = vmatpush.bf16.msra.mxu0 %v3419
      %3432 = vmatmul.bf16.gmra.mxu0 %v3422
      %v3433 = vpop.f32.mrf.mxu0
      %v3434 = vadd.f32 0.0, %v3433
      %v3435 = vpop.f32.mrf.mxu0
      %v3436 = vadd.f32 0.0, %v3435
      %3437 = vdwg.mxu0
      %v3440 = vunpack.c.l.b16 %v3396
      %v3441 = vunpack.c.l.b16 %v3397
      %v3442 = vpack.c.b16 %v3441, %v3440
      %v3445 = vunpack.c.l.b16 %v2948
      %v3446 = vunpack.c.l.b16 %v2949
      %v3447 = vpack.c.b16 %v3446, %v3445
      %v3450 = vsel %vm1046, %v3442, 0
      %3452 = vmatpush.bf16.msra.mxu0 0
      %3453 = vmatpush.bf16.msra.mxu0 0
      %3454 = vmatpush.bf16.msra.mxu0 0
      %3455 = vmatpush.bf16.msra.mxu0 0
      %3456 = vmatpush.bf16.msra.mxu0 0
      %3457 = vmatpush.bf16.msra.mxu0 0
      %3458 = vmatpush.bf16.msra.mxu0 0
      %3459 = vmatpush.bf16.msra.mxu0 %v3447
      %3460 = vmatmul.bf16.gmra.mxu0 %v3450
      %v3461 = vpop.f32.mrf.mxu0
      %v3462 = vadd.f32 0.0, %v3461
      %v3463 = vpop.f32.mrf.mxu0
      %v3464 = vadd.f32 0.0, %v3463
      %3465 = vdwg.mxu0
      %v3468 = vunpack.c.l.b16 %v3398
      %v3469 = vunpack.c.l.b16 %v3399
      %v3470 = vpack.c.b16 %v3469, %v3468
      %v3473 = vunpack.c.l.b16 %v2950
      %v3474 = vunpack.c.l.b16 %v2951
      %v3475 = vpack.c.b16 %v3474, %v3473
      %v3478 = vsel %vm1046, %v3470, 0
      %3480 = vmatpush.bf16.msra.mxu0 0
      %3481 = vmatpush.bf16.msra.mxu0 0
      %3482 = vmatpush.bf16.msra.mxu0 0
      %3483 = vmatpush.bf16.msra.mxu0 0
      %3484 = vmatpush.bf16.msra.mxu0 0
      %3485 = vmatpush.bf16.msra.mxu0 0
      %3486 = vmatpush.bf16.msra.mxu0 0
      %3487 = vmatpush.bf16.msra.mxu0 %v3475
      %3488 = vmatmul.bf16.gmra.mxu0 %v3478
      %v3489 = vpop.f32.mrf.mxu0
      %v3490 = vadd.f32 0.0, %v3489
      %v3491 = vpop.f32.mrf.mxu0
      %v3492 = vadd.f32 0.0, %v3491
      %3493 = vdwg.mxu0
      %v3496 = vunpack.c.l.b16 %v3400
      %v3497 = vunpack.c.l.b16 %v3401
      %v3498 = vpack.c.b16 %v3497, %v3496
      %v3501 = vunpack.c.l.b16 %v2952
      %v3502 = vunpack.c.l.b16 %v2953
      %v3503 = vpack.c.b16 %v3502, %v3501
      %v3506 = vsel %vm1046, %v3498, 0
      %3508 = vmatpush.bf16.msra.mxu0 0
      %3509 = vmatpush.bf16.msra.mxu0 0
      %3510 = vmatpush.bf16.msra.mxu0 0
      %3511 = vmatpush.bf16.msra.mxu0 0
      %3512 = vmatpush.bf16.msra.mxu0 0
      %3513 = vmatpush.bf16.msra.mxu0 0
      %3514 = vmatpush.bf16.msra.mxu0 0
      %3515 = vmatpush.bf16.msra.mxu0 %v3503
      %3516 = vmatmul.bf16.gmra.mxu0 %v3506
      %v3517 = vpop.f32.mrf.mxu0
      %v3518 = vadd.f32 0.0, %v3517
      %v3519 = vpop.f32.mrf.mxu0
      %v3520 = vadd.f32 0.0, %v3519
      %3521 = vdwg.mxu0
      %v3524 = vunpack.c.l.b16 %v3402
      %v3525 = vunpack.c.l.b16 %v3403
      %v3526 = vpack.c.b16 %v3525, %v3524
      %v3529 = vunpack.c.l.b16 %v2954
      %v3530 = vunpack.c.l.b16 %v2955
      %v3531 = vpack.c.b16 %v3530, %v3529
      %v3534 = vsel %vm1046, %v3526, 0
      %3536 = vmatpush.bf16.msra.mxu0 0
      %3537 = vmatpush.bf16.msra.mxu0 0
      %3538 = vmatpush.bf16.msra.mxu0 0
      %3539 = vmatpush.bf16.msra.mxu0 0
      %3540 = vmatpush.bf16.msra.mxu0 0
      %3541 = vmatpush.bf16.msra.mxu0 0
      %3542 = vmatpush.bf16.msra.mxu0 0
      %3543 = vmatpush.bf16.msra.mxu0 %v3531
      %3544 = vmatmul.bf16.gmra.mxu0 %v3534
      %v3545 = vpop.f32.mrf.mxu0
      %v3546 = vadd.f32 0.0, %v3545
      %v3547 = vpop.f32.mrf.mxu0
      %v3548 = vadd.f32 0.0, %v3547
      %3549 = vdwg.mxu0
      %v3552 = vunpack.c.l.b16 %v3404
      %v3553 = vunpack.c.l.b16 %v3405
      %v3554 = vpack.c.b16 %v3553, %v3552
      %v3557 = vunpack.c.l.b16 %v2956
      %v3558 = vunpack.c.l.b16 %v2957
      %v3559 = vpack.c.b16 %v3558, %v3557
      %v3562 = vsel %vm1046, %v3554, 0
      %3564 = vmatpush.bf16.msra.mxu0 0
      %3565 = vmatpush.bf16.msra.mxu0 0
      %3566 = vmatpush.bf16.msra.mxu0 0
      %3567 = vmatpush.bf16.msra.mxu0 0
      %3568 = vmatpush.bf16.msra.mxu0 0
      %3569 = vmatpush.bf16.msra.mxu0 0
      %3570 = vmatpush.bf16.msra.mxu0 0
      %3571 = vmatpush.bf16.msra.mxu0 %v3559
      %3572 = vmatmul.bf16.gmra.mxu0 %v3562
      %v3573 = vpop.f32.mrf.mxu0
      %v3574 = vadd.f32 0.0, %v3573
      %v3575 = vpop.f32.mrf.mxu0
      %v3576 = vadd.f32 0.0, %v3575
      %3577 = vdwg.mxu0
      %v3580 = vunpack.c.l.b16 %v3406
      %v3581 = vunpack.c.l.b16 %v3407
      %v3582 = vpack.c.b16 %v3581, %v3580
      %v3585 = vunpack.c.l.b16 %v2958
      %v3586 = vunpack.c.l.b16 %v2959
      %v3587 = vpack.c.b16 %v3586, %v3585
      %v3590 = vsel %vm1046, %v3582, 0
      %3592 = vmatpush.bf16.msra.mxu0 0
      %3593 = vmatpush.bf16.msra.mxu0 0
      %3594 = vmatpush.bf16.msra.mxu0 0
      %3595 = vmatpush.bf16.msra.mxu0 0
      %3596 = vmatpush.bf16.msra.mxu0 0
      %3597 = vmatpush.bf16.msra.mxu0 0
      %3598 = vmatpush.bf16.msra.mxu0 0
      %3599 = vmatpush.bf16.msra.mxu0 %v3587
      %3600 = vmatmul.bf16.gmra.mxu0 %v3590
      %v3601 = vpop.f32.mrf.mxu0
      %v3602 = vadd.f32 0.0, %v3601
      %v3603 = vpop.f32.mrf.mxu0
      %v3604 = vadd.f32 0.0, %v3603
      %3605 = vdwg.mxu0
      %v3608 = vunpack.c.l.b16 %v3408
      %v3609 = vunpack.c.l.b16 %v3409
      %v3610 = vpack.c.b16 %v3609, %v3608
      %v3613 = vunpack.c.l.b16 %v2960
      %v3614 = vunpack.c.l.b16 %v2961
      %v3615 = vpack.c.b16 %v3614, %v3613
      %v3618 = vsel %vm1046, %v3610, 0
      %3620 = vmatpush.bf16.msra.mxu0 0
      %3621 = vmatpush.bf16.msra.mxu0 0
      %3622 = vmatpush.bf16.msra.mxu0 0
      %3623 = vmatpush.bf16.msra.mxu0 0
      %3624 = vmatpush.bf16.msra.mxu0 0
      %3625 = vmatpush.bf16.msra.mxu0 0
      %3626 = vmatpush.bf16.msra.mxu0 0
      %3627 = vmatpush.bf16.msra.mxu0 %v3615
      %3628 = vmatmul.bf16.gmra.mxu0 %v3618
      %v3629 = vpop.f32.mrf.mxu0
      %v3630 = vadd.f32 0.0, %v3629
      %v3631 = vpop.f32.mrf.mxu0
      %v3632 = vadd.f32 0.0, %v3631
      %3633 = vdwg.mxu0
      %3636 = vrot.lane.b32.xlu0 %v3462, 16
      %v3637 = vpop.permute.xlu0 %3636
      %3638 = vrot.lane.b32.xlu0 %v3464, 16
      %v3639 = vpop.permute.xlu0 %3638
      %3644 = vrot.lane.b32.xlu0 %v3490, 32
      %v3645 = vpop.permute.xlu0 %3644
      %3646 = vrot.lane.b32.xlu0 %v3492, 32
      %v3647 = vpop.permute.xlu0 %3646
      %3652 = vrot.lane.b32.xlu0 %v3518, 48
      %v3653 = vpop.permute.xlu0 %3652
      %3654 = vrot.lane.b32.xlu0 %v3520, 48
      %v3655 = vpop.permute.xlu0 %3654
      %3660 = vrot.lane.b32.xlu0 %v3546, 64
      %v3661 = vpop.permute.xlu0 %3660
      %3662 = vrot.lane.b32.xlu0 %v3548, 64
      %v3663 = vpop.permute.xlu0 %3662
      %3668 = vrot.lane.b32.xlu0 %v3574, 80
      %v3669 = vpop.permute.xlu0 %3668
      %3670 = vrot.lane.b32.xlu0 %v3576, 80
      %v3671 = vpop.permute.xlu0 %3670
      %3676 = vrot.lane.b32.xlu0 %v3602, 96
      %v3677 = vpop.permute.xlu0 %3676
      %3678 = vrot.lane.b32.xlu0 %v3604, 96
      %v3679 = vpop.permute.xlu0 %3678
      %3684 = vrot.lane.b32.xlu0 %v3630, 112
      %v3685 = vpop.permute.xlu0 %3684
      %3686 = vrot.lane.b32.xlu0 %v3632, 112
      %v3687 = vpop.permute.xlu0 %3686
      %v3690 = vsel %vm1046, %v3434, %v3637
      %v3691 = vsel %vm1046, %v3436, %v3639
      %v3692 = vsel %vm1767, %v3690, %v3645
      %v3693 = vsel %vm1767, %v3691, %v3647
      %v3694 = vsel %vm1770, %v3692, %v3653
      %v3695 = vsel %vm1770, %v3693, %v3655
      %v3696 = vsel %vm627, %v3694, %v3661
      %v3697 = vsel %vm627, %v3695, %v3663
      %v3698 = vsel %vm1775, %v3696, %v3669
      %v3699 = vsel %vm1775, %v3697, %v3671
      %v3700 = vsel %vm1778, %v3698, %v3677
      %v3701 = vsel %vm1778, %v3699, %v3679
      %v3702 = vsel %vm1781, %v3700, %v3685
      %v3703 = vsel %vm1781, %v3701, %v3687
      %v3704 = vpack.c.bf16 %v3703, %v3702
      %s3705 = scalar_lea.vmem %s6, 64
      %v3706 = vld [vmem:[%s3705] sm:$0xf]
      %v3707 = vld [vmem:[%s3705 + $0x4] sm:$0xf]
      %v3708 = vld [vmem:[%s3705 + $0x8] sm:$0xf]
      %v3709 = vld [vmem:[%s3705 + $0xc] sm:$0xf]
      %v3710 = vld [vmem:[%s3705 + $0x10] sm:$0xf]
      %v3711 = vld [vmem:[%s3705 + $0x14] sm:$0xf]
      %v3712 = vld [vmem:[%s3705 + $0x18] sm:$0xf]
      %v3713 = vld [vmem:[%s3705 + $0x1c] sm:$0xf]
      %v3714 = vld [vmem:[%s3705 + $0x20] sm:$0xf]
      %v3715 = vld [vmem:[%s3705 + $0x24] sm:$0xf]
      %v3716 = vld [vmem:[%s3705 + $0x28] sm:$0xf]
      %v3717 = vld [vmem:[%s3705 + $0x2c] sm:$0xf]
      %v3718 = vld [vmem:[%s3705 + $0x30] sm:$0xf]
      %v3719 = vld [vmem:[%s3705 + $0x34] sm:$0xf]
      %v3720 = vld [vmem:[%s3705 + $0x38] sm:$0xf]
      %v3721 = vld [vmem:[%s3705 + $0x3c] sm:$0xf]
      %s3722 = scalar_lea.vmem %s7, 1
      %v3723 = vld [vmem:[%s3722] sm:$0x1]
      %v3725 = vperm.slane %v3723, 0
      %v3743 = vunpack.c.l.b16 %v3706
      %v3744 = vunpack.c.l.b16 %v3707
      %v3745 = vunpack.c.l.b16 %v3708
      %v3746 = vunpack.c.l.b16 %v3709
      %v3747 = vunpack.c.l.b16 %v3710
      %v3748 = vunpack.c.l.b16 %v3711
      %v3749 = vunpack.c.l.b16 %v3712
      %v3750 = vunpack.c.l.b16 %v3713
      %v3751 = vunpack.c.l.b16 %v3714
      %v3752 = vunpack.c.l.b16 %v3715
      %v3753 = vunpack.c.l.b16 %v3716
      %v3754 = vunpack.c.l.b16 %v3717
      %v3755 = vunpack.c.l.b16 %v3718
      %v3756 = vunpack.c.l.b16 %v3719
      %v3757 = vunpack.c.l.b16 %v3720
      %v3758 = vunpack.c.l.b16 %v3721
      %v3759 = vpack.c.b16 %v3744, %v3743
      %v3760 = vpack.c.b16 %v3746, %v3745
      %v3761 = vpack.c.b16 %v3748, %v3747
      %v3762 = vpack.c.b16 %v3750, %v3749
      %v3763 = vpack.c.b16 %v3752, %v3751
      %v3764 = vpack.c.b16 %v3754, %v3753
      %v3765 = vpack.c.b16 %v3756, %v3755
      %v3766 = vpack.c.b16 %v3758, %v3757
      %3775 = vmatpush.bf16.msra.mxu0 %v3766
      %3776 = vmatpush.bf16.msra.mxu0 %v3765
      %3777 = vmatpush.bf16.msra.mxu0 %v3764
      %3778 = vmatpush.bf16.msra.mxu0 %v3763
      %3779 = vmatpush.bf16.msra.mxu0 %v3762
      %3780 = vmatpush.bf16.msra.mxu0 %v3761
      %3781 = vmatpush.bf16.msra.mxu0 %v3760
      %3782 = vmatpush.bf16.msra.mxu0 %v3759
      %3783 = vmatmul.bf16.gmra.mxu0 %v3704
      %v3784 = vpop.f32.mrf.mxu0
      %v3785 = vadd.f32 %v3725, %v3784
      %v3786 = vpop.f32.mrf.mxu0
      %v3787 = vadd.f32 %v3725, %v3786
      %3788 = vdwg.mxu0
      %v3789 = vadd.f32 %v2567, %v3785
      %v3790 = vadd.f32 %v2568, %v3787
      %s3791 = scalar_lea.vmem %s8, 1
      %v3792 = vld [vmem:[%s3791] sm:$0x1]
      %s3793 = scalar_lea.vmem %s9, 1
      %v3794 = vld [vmem:[%s3793] sm:$0x1]
      %3795 = vadd.xlane.f32.xlu0 %v3789
      %v3796 = vpop.xlane.xlu0 %3795
      %3797 = vadd.xlane.f32.xlu0 %v3790
      %v3798 = vpop.xlane.xlu0 %3797
      %v3799 = vmul.f32 %v3796, %v1881
      %v3800 = vmul.f32 %v3798, %v1881
      %v3801 = vsub.f32 %v3789, %v3799
      %v3802 = vsub.f32 %v3790, %v3800
      %v3803 = vmul.f32 %v3801, %v3801
      %v3804 = vmul.f32 %v3802, %v3802
      %3805 = vadd.xlane.f32.xlu0 %v3803
      %v3806 = vpop.xlane.xlu0 %3805
      %3807 = vadd.xlane.f32.xlu0 %v3804
      %v3808 = vpop.xlane.xlu0 %3807
      %v3809 = vmul.f32 %v3806, %v1881
      %v3810 = vmul.f32 %v3808, %v1881
      %v3811 = vadd.f32 %v3809, 1e-05
      %v3812 = vadd.f32 %v3810, 1e-05
      %v3813 = vrsqrt.pop %v3811
      %v3814 = vmul.f32 %v3813, %v3811
      %v3815 = vmul.f32 %v3814, %v3813
      %v3816 = vmul.f32 0.5, %v3815
      %v3817 = vsub.f32 1.5, %v3816
      %v3818 = vmul.f32 %v3813, %v3817
      %vm3819 = vweird.f32 %v3811
      %vm3820 = vweird.f32 %v3813
      %vm3821 = vmor %vm3819, %vm3820
      %v3822 = vsel %vm3821, %v3813, %v3818
      %v3823 = vrsqrt.pop %v3812
      %v3824 = vmul.f32 %v3823, %v3812
      %v3825 = vmul.f32 %v3824, %v3823
      %v3826 = vmul.f32 0.5, %v3825
      %v3827 = vsub.f32 1.5, %v3826
      %v3828 = vmul.f32 %v3823, %v3827
      %vm3829 = vweird.f32 %v3812
      %vm3830 = vweird.f32 %v3823
      %vm3831 = vmor %vm3829, %vm3830
      %v3832 = vsel %vm3831, %v3823, %v3828
      %v3833 = vmul.f32 %v3801, %v3822
      %v3834 = vmul.f32 %v3802, %v3832
      %v3836 = vperm.slane %v3792, 0
      %v3838 = vmul.f32 %v3833, %v3836
      %v3839 = vmul.f32 %v3834, %v3836
      %v3841 = vperm.slane %v3794, 0
      %v3843 = vadd.f32 %v3838, %v3841
      %v3844 = vadd.f32 %v3839, %v3841
      %v3845 = vpack.c.bf16 %v3844, %v3843
      %s3846 = scalar_lea.vmem %s10, 256
      %v3847 = vld [vmem:[%s3846] sm:$0xff]
      %v3848 = vld [vmem:[%s3846 + $0x8] sm:$0xff]
      %v3849 = vld [vmem:[%s3846 + $0x10] sm:$0xff]
      %v3850 = vld [vmem:[%s3846 + $0x18] sm:$0xff]
      %v3851 = vld [vmem:[%s3846 + $0x20] sm:$0xff]
      %v3852 = vld [vmem:[%s3846 + $0x28] sm:$0xff]
      %v3853 = vld [vmem:[%s3846 + $0x30] sm:$0xff]
      %v3854 = vld [vmem:[%s3846 + $0x38] sm:$0xff]
      %v3855 = vld [vmem:[%s3846 + $0x40] sm:$0xff]
      %v3856 = vld [vmem:[%s3846 + $0x48] sm:$0xff]
      %v3857 = vld [vmem:[%s3846 + $0x50] sm:$0xff]
      %v3858 = vld [vmem:[%s3846 + $0x58] sm:$0xff]
      %v3859 = vld [vmem:[%s3846 + $0x60] sm:$0xff]
      %v3860 = vld [vmem:[%s3846 + $0x68] sm:$0xff]
      %v3861 = vld [vmem:[%s3846 + $0x70] sm:$0xff]
      %v3862 = vld [vmem:[%s3846 + $0x78] sm:$0xff]
      %v3863 = vld [vmem:[%s3846 + $0x80] sm:$0xff]
      %v3864 = vld [vmem:[%s3846 + $0x88] sm:$0xff]
      %v3865 = vld [vmem:[%s3846 + $0x90] sm:$0xff]
      %v3866 = vld [vmem:[%s3846 + $0x98] sm:$0xff]
      %v3867 = vld [vmem:[%s3846 + $0xa0] sm:$0xff]
      %v3868 = vld [vmem:[%s3846 + $0xa8] sm:$0xff]
      %v3869 = vld [vmem:[%s3846 + $0xb0] sm:$0xff]
      %v3870 = vld [vmem:[%s3846 + $0xb8] sm:$0xff]
      %v3871 = vld [vmem:[%s3846 + $0xc0] sm:$0xff]
      %v3872 = vld [vmem:[%s3846 + $0xc8] sm:$0xff]
      %v3873 = vld [vmem:[%s3846 + $0xd0] sm:$0xff]
      %v3874 = vld [vmem:[%s3846 + $0xd8] sm:$0xff]
      %v3875 = vld [vmem:[%s3846 + $0xe0] sm:$0xff]
      %v3876 = vld [vmem:[%s3846 + $0xe8] sm:$0xff]
      %v3877 = vld [vmem:[%s3846 + $0xf0] sm:$0xff]
      %v3878 = vld [vmem:[%s3846 + $0xf8] sm:$0xff]
      %s3879 = scalar_lea.vmem %s11, 4
      %v3880 = vld [vmem:[%s3879] sm:$0xf]
      %v3882 = vperm.slane %v3880, 0
      %v3883 = vperm.slane %v3880, 1
      %v3884 = vperm.slane %v3880, 2
      %v3885 = vperm.slane %v3880, 3
      %v3922 = vunpack.c.l.b16 %v3847
      %v3923 = vunpack.c.h.b16 %v3847
      %v3924 = vunpack.c.l.b16 %v3848
      %v3925 = vunpack.c.h.b16 %v3848
      %v3926 = vunpack.c.l.b16 %v3849
      %v3927 = vunpack.c.h.b16 %v3849
      %v3928 = vunpack.c.l.b16 %v3850
      %v3929 = vunpack.c.h.b16 %v3850
      %v3930 = vunpack.c.l.b16 %v3851
      %v3931 = vunpack.c.h.b16 %v3851
      %v3932 = vunpack.c.l.b16 %v3852
      %v3933 = vunpack.c.h.b16 %v3852
      %v3934 = vunpack.c.l.b16 %v3853
      %v3935 = vunpack.c.h.b16 %v3853
      %v3936 = vunpack.c.l.b16 %v3854
      %v3937 = vunpack.c.h.b16 %v3854
      %v3938 = vunpack.c.l.b16 %v3855
      %v3939 = vunpack.c.h.b16 %v3855
      %v3940 = vunpack.c.l.b16 %v3856
      %v3941 = vunpack.c.h.b16 %v3856
      %v3942 = vunpack.c.l.b16 %v3857
      %v3943 = vunpack.c.h.b16 %v3857
      %v3944 = vunpack.c.l.b16 %v3858
      %v3945 = vunpack.c.h.b16 %v3858
      %v3946 = vunpack.c.l.b16 %v3859
      %v3947 = vunpack.c.h.b16 %v3859
      %v3948 = vunpack.c.l.b16 %v3860
      %v3949 = vunpack.c.h.b16 %v3860
      %v3950 = vunpack.c.l.b16 %v3861
      %v3951 = vunpack.c.h.b16 %v3861
      %v3952 = vunpack.c.l.b16 %v3862
      %v3953 = vunpack.c.h.b16 %v3862
      %v3954 = vunpack.c.l.b16 %v3863
      %v3955 = vunpack.c.h.b16 %v3863
      %v3956 = vunpack.c.l.b16 %v3864
      %v3957 = vunpack.c.h.b16 %v3864
      %v3958 = vunpack.c.l.b16 %v3865
      %v3959 = vunpack.c.h.b16 %v3865
      %v3960 = vunpack.c.l.b16 %v3866
      %v3961 = vunpack.c.h.b16 %v3866
      %v3962 = vunpack.c.l.b16 %v3867
      %v3963 = vunpack.c.h.b16 %v3867
      %v3964 = vunpack.c.l.b16 %v3868
      %v3965 = vunpack.c.h.b16 %v3868
      %v3966 = vunpack.c.l.b16 %v3869
      %v3967 = vunpack.c.h.b16 %v3869
      %v3968 = vunpack.c.l.b16 %v3870
      %v3969 = vunpack.c.h.b16 %v3870
      %v3970 = vunpack.c.l.b16 %v3871
      %v3971 = vunpack.c.h.b16 %v3871
      %v3972 = vunpack.c.l.b16 %v3872
      %v3973 = vunpack.c.h.b16 %v3872
      %v3974 = vunpack.c.l.b16 %v3873
      %v3975 = vunpack.c.h.b16 %v3873
      %v3976 = vunpack.c.l.b16 %v3874
      %v3977 = vunpack.c.h.b16 %v3874
      %v3978 = vunpack.c.l.b16 %v3875
      %v3979 = vunpack.c.h.b16 %v3875
      %v3980 = vunpack.c.l.b16 %v3876
      %v3981 = vunpack.c.h.b16 %v3876
      %v3982 = vunpack.c.l.b16 %v3877
      %v3983 = vunpack.c.h.b16 %v3877
      %v3984 = vunpack.c.l.b16 %v3878
      %v3985 = vunpack.c.h.b16 %v3878
      %v3986 = vpack.c.b16 %v3926, %v3922
      %v3987 = vpack.c.b16 %v3927, %v3923
      %v3988 = vpack.c.b16 %v3928, %v3924
      %v3989 = vpack.c.b16 %v3929, %v3925
      %v3990 = vpack.c.b16 %v3934, %v3930
      %v3991 = vpack.c.b16 %v3935, %v3931
      %v3992 = vpack.c.b16 %v3936, %v3932
      %v3993 = vpack.c.b16 %v3937, %v3933
      %v3994 = vpack.c.b16 %v3942, %v3938
      %v3995 = vpack.c.b16 %v3943, %v3939
      %v3996 = vpack.c.b16 %v3944, %v3940
      %v3997 = vpack.c.b16 %v3945, %v3941
      %v3998 = vpack.c.b16 %v3950, %v3946
      %v3999 = vpack.c.b16 %v3951, %v3947
      %v4000 = vpack.c.b16 %v3952, %v3948
      %v4001 = vpack.c.b16 %v3953, %v3949
      %v4002 = vpack.c.b16 %v3958, %v3954
      %v4003 = vpack.c.b16 %v3959, %v3955
      %v4004 = vpack.c.b16 %v3960, %v3956
      %v4005 = vpack.c.b16 %v3961, %v3957
      %v4006 = vpack.c.b16 %v3966, %v3962
      %v4007 = vpack.c.b16 %v3967, %v3963
      %v4008 = vpack.c.b16 %v3968, %v3964
      %v4009 = vpack.c.b16 %v3969, %v3965
      %v4010 = vpack.c.b16 %v3974, %v3970
      %v4011 = vpack.c.b16 %v3975, %v3971
      %v4012 = vpack.c.b16 %v3976, %v3972
      %v4013 = vpack.c.b16 %v3977, %v3973
      %v4014 = vpack.c.b16 %v3982, %v3978
      %v4015 = vpack.c.b16 %v3983, %v3979
      %v4016 = vpack.c.b16 %v3984, %v3980
      %v4017 = vpack.c.b16 %v3985, %v3981
      %4050 = vmatpush.bf16.msra.mxu0 %v4014
      %4051 = vmatpush.bf16.msra.mxu0 %v4010
      %4052 = vmatpush.bf16.msra.mxu0 %v4006
      %4053 = vmatpush.bf16.msra.mxu0 %v4002
      %4054 = vmatpush.bf16.msra.mxu0 %v3998
      %4055 = vmatpush.bf16.msra.mxu0 %v3994
      %4056 = vmatpush.bf16.msra.mxu0 %v3990
      %4057 = vmatpush.bf16.msra.mxu0 %v3986
      %4058 = vmatmul.bf16.gmra.mxu0 %v3845
      %v4059 = vpop.f32.mrf.mxu0
      %v4060 = vadd.f32 %v3882, %v4059
      %v4061 = vpop.f32.mrf.mxu0
      %v4062 = vadd.f32 %v3882, %v4061
      %4063 = vdwg.mxu0
      %4064 = vmatpush.bf16.msra.mxu0 %v4015
      %4065 = vmatpush.bf16.msra.mxu0 %v4011
      %4066 = vmatpush.bf16.msra.mxu0 %v4007
      %4067 = vmatpush.bf16.msra.mxu0 %v4003
      %4068 = vmatpush.bf16.msra.mxu0 %v3999
      %4069 = vmatpush.bf16.msra.mxu0 %v3995
      %4070 = vmatpush.bf16.msra.mxu0 %v3991
      %4071 = vmatpush.bf16.msra.mxu0 %v3987
      %4072 = vmatmul.bf16.gmra.mxu0 %v3845
      %v4073 = vpop.f32.mrf.mxu0
      %v4074 = vadd.f32 %v3883, %v4073
      %v4075 = vpop.f32.mrf.mxu0
      %v4076 = vadd.f32 %v3883, %v4075
      %4077 = vdwg.mxu0
      %4078 = vmatpush.bf16.msra.mxu0 %v4016
      %4079 = vmatpush.bf16.msra.mxu0 %v4012
      %4080 = vmatpush.bf16.msra.mxu0 %v4008
      %4081 = vmatpush.bf16.msra.mxu0 %v4004
      %4082 = vmatpush.bf16.msra.mxu0 %v4000
      %4083 = vmatpush.bf16.msra.mxu0 %v3996
      %4084 = vmatpush.bf16.msra.mxu0 %v3992
      %4085 = vmatpush.bf16.msra.mxu0 %v3988
      %4086 = vmatmul.bf16.gmra.mxu0 %v3845
      %v4087 = vpop.f32.mrf.mxu0
      %v4088 = vadd.f32 %v3884, %v4087
      %v4089 = vpop.f32.mrf.mxu0
      %v4090 = vadd.f32 %v3884, %v4089
      %4091 = vdwg.mxu0
      %4092 = vmatpush.bf16.msra.mxu0 %v4017
      %4093 = vmatpush.bf16.msra.mxu0 %v4013
      %4094 = vmatpush.bf16.msra.mxu0 %v4009
      %4095 = vmatpush.bf16.msra.mxu0 %v4005
      %4096 = vmatpush.bf16.msra.mxu0 %v4001
      %4097 = vmatpush.bf16.msra.mxu0 %v3997
      %4098 = vmatpush.bf16.msra.mxu0 %v3993
      %4099 = vmatpush.bf16.msra.mxu0 %v3989
      %4100 = vmatmul.bf16.gmra.mxu0 %v3845
      %v4101 = vpop.f32.mrf.mxu0
      %v4102 = vadd.f32 %v3885, %v4101
      %v4103 = vpop.f32.mrf.mxu0
      %v4104 = vadd.f32 %v3885, %v4103
      %4105 = vdwg.mxu0
      %v4106 = vmax.f32 %v4060, 0.0
      %v4107 = vmax.f32 %v4074, 0.0
      %v4108 = vmax.f32 %v4088, 0.0
      %v4109 = vmax.f32 %v4102, 0.0
      %v4110 = vmax.f32 %v4062, 0.0
      %v4111 = vmax.f32 %v4076, 0.0
      %v4112 = vmax.f32 %v4090, 0.0
      %v4113 = vmax.f32 %v4104, 0.0
      %v4114 = vpack.c.bf16 %v4110, %v4106
      %v4115 = vpack.c.bf16 %v4111, %v4107
      %v4116 = vpack.c.bf16 %v4112, %v4108
      %v4117 = vpack.c.bf16 %v4113, %v4109
      %s4118 = scalar_lea.vmem %s12, 256
      %v4119 = vld [vmem:[%s4118] sm:$0xf]
      %v4120 = vld [vmem:[%s4118 + $0x4] sm:$0xf]
      %v4121 = vld [vmem:[%s4118 + $0x8] sm:$0xf]
      %v4122 = vld [vmem:[%s4118 + $0xc] sm:$0xf]
      %v4123 = vld [vmem:[%s4118 + $0x10] sm:$0xf]
      %v4124 = vld [vmem:[%s4118 + $0x14] sm:$0xf]
      %v4125 = vld [vmem:[%s4118 + $0x18] sm:$0xf]
      %v4126 = vld [vmem:[%s4118 + $0x1c] sm:$0xf]
      %v4127 = vld [vmem:[%s4118 + $0x20] sm:$0xf]
      %v4128 = vld [vmem:[%s4118 + $0x24] sm:$0xf]
      %v4129 = vld [vmem:[%s4118 + $0x28] sm:$0xf]
      %v4130 = vld [vmem:[%s4118 + $0x2c] sm:$0xf]
      %v4131 = vld [vmem:[%s4118 + $0x30] sm:$0xf]
      %v4132 = vld [vmem:[%s4118 + $0x34] sm:$0xf]
      %v4133 = vld [vmem:[%s4118 + $0x38] sm:$0xf]
      %v4134 = vld [vmem:[%s4118 + $0x3c] sm:$0xf]
      %v4135 = vld [vmem:[%s4118 + $0x40] sm:$0xf]
      %v4136 = vld [vmem:[%s4118 + $0x44] sm:$0xf]
      %v4137 = vld [vmem:[%s4118 + $0x48] sm:$0xf]
      %v4138 = vld [vmem:[%s4118 + $0x4c] sm:$0xf]
      %v4139 = vld [vmem:[%s4118 + $0x50] sm:$0xf]
      %v4140 = vld [vmem:[%s4118 + $0x54] sm:$0xf]
      %v4141 = vld [vmem:[%s4118 + $0x58] sm:$0xf]
      %v4142 = vld [vmem:[%s4118 + $0x5c] sm:$0xf]
      %v4143 = vld [vmem:[%s4118 + $0x60] sm:$0xf]
      %v4144 = vld [vmem:[%s4118 + $0x64] sm:$0xf]
      %v4145 = vld [vmem:[%s4118 + $0x68] sm:$0xf]
      %v4146 = vld [vmem:[%s4118 + $0x6c] sm:$0xf]
      %v4147 = vld [vmem:[%s4118 + $0x70] sm:$0xf]
      %v4148 = vld [vmem:[%s4118 + $0x74] sm:$0xf]
      %v4149 = vld [vmem:[%s4118 + $0x78] sm:$0xf]
      %v4150 = vld [vmem:[%s4118 + $0x7c] sm:$0xf]
      %v4151 = vld [vmem:[%s4118 + $0x80] sm:$0xf]
      %v4152 = vld [vmem:[%s4118 + $0x84] sm:$0xf]
      %v4153 = vld [vmem:[%s4118 + $0x88] sm:$0xf]
      %v4154 = vld [vmem:[%s4118 + $0x8c] sm:$0xf]
      %v4155 = vld [vmem:[%s4118 + $0x90] sm:$0xf]
      %v4156 = vld [vmem:[%s4118 + $0x94] sm:$0xf]
      %v4157 = vld [vmem:[%s4118 + $0x98] sm:$0xf]
      %v4158 = vld [vmem:[%s4118 + $0x9c] sm:$0xf]
      %v4159 = vld [vmem:[%s4118 + $0xa0] sm:$0xf]
      %v4160 = vld [vmem:[%s4118 + $0xa4] sm:$0xf]
      %v4161 = vld [vmem:[%s4118 + $0xa8] sm:$0xf]
      %v4162 = vld [vmem:[%s4118 + $0xac] sm:$0xf]
      %v4163 = vld [vmem:[%s4118 + $0xb0] sm:$0xf]
      %v4164 = vld [vmem:[%s4118 + $0xb4] sm:$0xf]
      %v4165 = vld [vmem:[%s4118 + $0xb8] sm:$0xf]
      %v4166 = vld [vmem:[%s4118 + $0xbc] sm:$0xf]
      %v4167 = vld [vmem:[%s4118 + $0xc0] sm:$0xf]
      %v4168 = vld [vmem:[%s4118 + $0xc4] sm:$0xf]
      %v4169 = vld [vmem:[%s4118 + $0xc8] sm:$0xf]
      %v4170 = vld [vmem:[%s4118 + $0xcc] sm:$0xf]
      %v4171 = vld [vmem:[%s4118 + $0xd0] sm:$0xf]
      %v4172 = vld [vmem:[%s4118 + $0xd4] sm:$0xf]
      %v4173 = vld [vmem:[%s4118 + $0xd8] sm:$0xf]
      %v4174 = vld [vmem:[%s4118 + $0xdc] sm:$0xf]
      %v4175 = vld [vmem:[%s4118 + $0xe0] sm:$0xf]
      %v4176 = vld [vmem:[%s4118 + $0xe4] sm:$0xf]
      %v4177 = vld [vmem:[%s4118 + $0xe8] sm:$0xf]
      %v4178 = vld [vmem:[%s4118 + $0xec] sm:$0xf]
      %v4179 = vld [vmem:[%s4118 + $0xf0] sm:$0xf]
      %v4180 = vld [vmem:[%s4118 + $0xf4] sm:$0xf]
      %v4181 = vld [vmem:[%s4118 + $0xf8] sm:$0xf]
      %v4182 = vld [vmem:[%s4118 + $0xfc] sm:$0xf]
      %s4183 = scalar_lea.vmem %s13, 1
      %v4184 = vld [vmem:[%s4183] sm:$0x1]
      %v4186 = vperm.slane %v4184, 0
      %v4252 = vunpack.c.l.b16 %v4119
      %v4253 = vunpack.c.l.b16 %v4120
      %v4254 = vunpack.c.l.b16 %v4121
      %v4255 = vunpack.c.l.b16 %v4122
      %v4256 = vunpack.c.l.b16 %v4123
      %v4257 = vunpack.c.l.b16 %v4124
      %v4258 = vunpack.c.l.b16 %v4125
      %v4259 = vunpack.c.l.b16 %v4126
      %v4260 = vunpack.c.l.b16 %v4127
      %v4261 = vunpack.c.l.b16 %v4128
      %v4262 = vunpack.c.l.b16 %v4129
      %v4263 = vunpack.c.l.b16 %v4130
      %v4264 = vunpack.c.l.b16 %v4131
      %v4265 = vunpack.c.l.b16 %v4132
      %v4266 = vunpack.c.l.b16 %v4133
      %v4267 = vunpack.c.l.b16 %v4134
      %v4268 = vunpack.c.l.b16 %v4135
      %v4269 = vunpack.c.l.b16 %v4136
      %v4270 = vunpack.c.l.b16 %v4137
      %v4271 = vunpack.c.l.b16 %v4138
      %v4272 = vunpack.c.l.b16 %v4139
      %v4273 = vunpack.c.l.b16 %v4140
      %v4274 = vunpack.c.l.b16 %v4141
      %v4275 = vunpack.c.l.b16 %v4142
      %v4276 = vunpack.c.l.b16 %v4143
      %v4277 = vunpack.c.l.b16 %v4144
      %v4278 = vunpack.c.l.b16 %v4145
      %v4279 = vunpack.c.l.b16 %v4146
      %v4280 = vunpack.c.l.b16 %v4147
      %v4281 = vunpack.c.l.b16 %v4148
      %v4282 = vunpack.c.l.b16 %v4149
      %v4283 = vunpack.c.l.b16 %v4150
      %v4284 = vunpack.c.l.b16 %v4151
      %v4285 = vunpack.c.l.b16 %v4152
      %v4286 = vunpack.c.l.b16 %v4153
      %v4287 = vunpack.c.l.b16 %v4154
      %v4288 = vunpack.c.l.b16 %v4155
      %v4289 = vunpack.c.l.b16 %v4156
      %v4290 = vunpack.c.l.b16 %v4157
      %v4291 = vunpack.c.l.b16 %v4158
      %v4292 = vunpack.c.l.b16 %v4159
      %v4293 = vunpack.c.l.b16 %v4160
      %v4294 = vunpack.c.l.b16 %v4161
      %v4295 = vunpack.c.l.b16 %v4162
      %v4296 = vunpack.c.l.b16 %v4163
      %v4297 = vunpack.c.l.b16 %v4164
      %v4298 = vunpack.c.l.b16 %v4165
      %v4299 = vunpack.c.l.b16 %v4166
      %v4300 = vunpack.c.l.b16 %v4167
      %v4301 = vunpack.c.l.b16 %v4168
      %v4302 = vunpack.c.l.b16 %v4169
      %v4303 = vunpack.c.l.b16 %v4170
      %v4304 = vunpack.c.l.b16 %v4171
      %v4305 = vunpack.c.l.b16 %v4172
      %v4306 = vunpack.c.l.b16 %v4173
      %v4307 = vunpack.c.l.b16 %v4174
      %v4308 = vunpack.c.l.b16 %v4175
      %v4309 = vunpack.c.l.b16 %v4176
      %v4310 = vunpack.c.l.b16 %v4177
      %v4311 = vunpack.c.l.b16 %v4178
      %v4312 = vunpack.c.l.b16 %v4179
      %v4313 = vunpack.c.l.b16 %v4180
      %v4314 = vunpack.c.l.b16 %v4181
      %v4315 = vunpack.c.l.b16 %v4182
      %v4316 = vpack.c.b16 %v4253, %v4252
      %v4317 = vpack.c.b16 %v4255, %v4254
      %v4318 = vpack.c.b16 %v4257, %v4256
      %v4319 = vpack.c.b16 %v4259, %v4258
      %v4320 = vpack.c.b16 %v4261, %v4260
      %v4321 = vpack.c.b16 %v4263, %v4262
      %v4322 = vpack.c.b16 %v4265, %v4264
      %v4323 = vpack.c.b16 %v4267, %v4266
      %v4324 = vpack.c.b16 %v4269, %v4268
      %v4325 = vpack.c.b16 %v4271, %v4270
      %v4326 = vpack.c.b16 %v4273, %v4272
      %v4327 = vpack.c.b16 %v4275, %v4274
      %v4328 = vpack.c.b16 %v4277, %v4276
      %v4329 = vpack.c.b16 %v4279, %v4278
      %v4330 = vpack.c.b16 %v4281, %v4280
      %v4331 = vpack.c.b16 %v4283, %v4282
      %v4332 = vpack.c.b16 %v4285, %v4284
      %v4333 = vpack.c.b16 %v4287, %v4286
      %v4334 = vpack.c.b16 %v4289, %v4288
      %v4335 = vpack.c.b16 %v4291, %v4290
      %v4336 = vpack.c.b16 %v4293, %v4292
      %v4337 = vpack.c.b16 %v4295, %v4294
      %v4338 = vpack.c.b16 %v4297, %v4296
      %v4339 = vpack.c.b16 %v4299, %v4298
      %v4340 = vpack.c.b16 %v4301, %v4300
      %v4341 = vpack.c.b16 %v4303, %v4302
      %v4342 = vpack.c.b16 %v4305, %v4304
      %v4343 = vpack.c.b16 %v4307, %v4306
      %v4344 = vpack.c.b16 %v4309, %v4308
      %v4345 = vpack.c.b16 %v4311, %v4310
      %v4346 = vpack.c.b16 %v4313, %v4312
      %v4347 = vpack.c.b16 %v4315, %v4314
      %4380 = vmatpush.bf16.msra.mxu0 %v4323
      %4381 = vmatpush.bf16.msra.mxu0 %v4322
      %4382 = vmatpush.bf16.msra.mxu0 %v4321
      %4383 = vmatpush.bf16.msra.mxu0 %v4320
      %4384 = vmatpush.bf16.msra.mxu0 %v4319
      %4385 = vmatpush.bf16.msra.mxu0 %v4318
      %4386 = vmatpush.bf16.msra.mxu0 %v4317
      %4387 = vmatpush.bf16.msra.mxu0 %v4316
      %4388 = vmatmul.bf16.gmra.mxu0 %v4114
      %v4389 = vpop.f32.mrf.mxu0
      %v4390 = vadd.f32 %v4186, %v4389
      %v4391 = vpop.f32.mrf.mxu0
      %4392 = vdwg.mxu0
      %4393 = vmatpush.bf16.msra.mxu0 %v4331
      %4394 = vmatpush.bf16.msra.mxu0 %v4330
      %4395 = vmatpush.bf16.msra.mxu0 %v4329
      %4396 = vmatpush.bf16.msra.mxu0 %v4328
      %4397 = vmatpush.bf16.msra.mxu0 %v4327
      %4398 = vmatpush.bf16.msra.mxu0 %v4326
      %4399 = vmatpush.bf16.msra.mxu0 %v4325
      %4400 = vmatpush.bf16.msra.mxu0 %v4324
      %4401 = vmatmul.bf16.gmra.mxu0 %v4115
      %v4402 = vpop.f32.mrf.mxu0
      %v4403 = vadd.f32 %v4390, %v4402
      %v4404 = vpop.f32.mrf.mxu0
      %4405 = vdwg.mxu0
      %4406 = vmatpush.bf16.msra.mxu0 %v4339
      %4407 = vmatpush.bf16.msra.mxu0 %v4338
      %4408 = vmatpush.bf16.msra.mxu0 %v4337
      %4409 = vmatpush.bf16.msra.mxu0 %v4336
      %4410 = vmatpush.bf16.msra.mxu0 %v4335
      %4411 = vmatpush.bf16.msra.mxu0 %v4334
      %4412 = vmatpush.bf16.msra.mxu0 %v4333
      %4413 = vmatpush.bf16.msra.mxu0 %v4332
      %4414 = vmatmul.bf16.gmra.mxu0 %v4116
      %v4415 = vpop.f32.mrf.mxu0
      %v4416 = vadd.f32 %v4403, %v4415
      %v4417 = vpop.f32.mrf.mxu0
      %4418 = vdwg.mxu0
      %4419 = vmatpush.bf16.msra.mxu0 %v4347
      %4420 = vmatpush.bf16.msra.mxu0 %v4346
      %4421 = vmatpush.bf16.msra.mxu0 %v4345
      %4422 = vmatpush.bf16.msra.mxu0 %v4344
      %4423 = vmatpush.bf16.msra.mxu0 %v4343
      %4424 = vmatpush.bf16.msra.mxu0 %v4342
      %4425 = vmatpush.bf16.msra.mxu0 %v4341
      %4426 = vmatpush.bf16.msra.mxu0 %v4340
      %4427 = vmatmul.bf16.gmra.mxu0 %v4117
      %v4428 = vpop.f32.mrf.mxu0
      %v4429 = vadd.f32 %v4416, %v4428
      %v4430 = vpop.f32.mrf.mxu0
      %4431 = vdwg.mxu0
      %v4432 = vadd.f32 %v3843, %v4429
      %s4433 = scalar_lea.vmem %s14, 1
      %v4434 = vld [vmem:[%s4433] sm:$0x1]
      %s4435 = scalar_lea.vmem %s15, 1
      %v4436 = vld [vmem:[%s4435] sm:$0x1]
      %4437 = vadd.xlane.f32.xlu0 %v4432
      %v4438 = vpop.xlane.xlu0 %4437
      %v4439 = vmul.f32 %v4438, %v1881
      %v4440 = vsub.f32 %v4432, %v4439
      %v4441 = vmul.f32 %v4440, %v4440
      %4442 = vadd.xlane.f32.xlu0 %v4441
      %v4443 = vpop.xlane.xlu0 %4442
      %v4444 = vmul.f32 %v4443, %v1881
      %v4445 = vadd.f32 %v4444, 1e-05
      %v4446 = vrsqrt.pop %v4445
      %v4447 = vmul.f32 %v4446, %v4445
      %v4448 = vmul.f32 %v4447, %v4446
      %v4449 = vmul.f32 0.5, %v4448
      %v4450 = vsub.f32 1.5, %v4449
      %v4451 = vmul.f32 %v4446, %v4450
      %vm4452 = vweird.f32 %v4445
      %vm4453 = vweird.f32 %v4446
      %vm4454 = vmor %vm4452, %vm4453
      %v4455 = vsel %vm4454, %v4446, %v4451
      %v4456 = vmul.f32 %v4440, %v4455
      %v4458 = vperm.slane %v4434, 0
      %v4460 = vmul.f32 %v4456, %v4458
      %v4462 = vperm.slane %v4436, 0
      %v4464 = vadd.f32 %v4460, %v4462
      %v4465 = vld [vmem:[%s16] sm:$0x1]
      %v4466 = vmul.f32 %v4464, %v4465
      %vm4467 = vcmask 1040384
      %v4468 = vsel %vm4467, %v4466, 0.0
      %4469 = vadd.xlane.f32.xlu0 %v4468
      %v4470 = vpop.xlane.xlu0 %4469
      %v4471 = vld [vmem:[#allocation2] sm:$0x1]
      %v4472 = vadd.f32 %v4470, %v4471
      %vm4473 = vcmask 0
      %4474 = vst.msk [vmem:[%s587] sm:$0x1] %vm4473, %v4472
      %p4475 = scmp.lt.s32.totalorder %s31, 1
      %s4476 = scalar_select %p4475, %s31, 1
      %s4477 = scalar_lea.vmem %s18, %s4476
      // Predicated region
      $region93: #{cross_modal_reranker.1} parent=91 // pred_check
        %p4478 = pneg %p437
      $region94: #{cross_modal_reranker.1} parent=91 // pred_check_branch
        %4480 = sbr.rel (%p4478) target = $region96
      $region95: #{cross_modal_reranker.1} parent=91 // pred_region
        _
      $region96: #{cross_modal_reranker.1} parent=91 // pred_fallthru
        _
    $region92: #{cross_modal_reranker.1} parent=5 // pred_fallthru
      _
    %p4481 = scmp.le.s32.totalorder 2, %s26
    // Predicated region
    $region97: #{cross_modal_reranker.1} parent=5 // pred_check
      %p4482 = pneg %p4481
    $region98: #{cross_modal_reranker.1} parent=5 // pred_check_branch
      %4484 = sbr.rel (%p4482) target = $region100
    $region99: #{cross_modal_reranker.1} parent=5 // pred_region
      %s4485 = ssub.s32 %s26, 2
      // Predicated region
      $region101: #{cross_modal_reranker.1} parent=99 // pred_check
        %p4486 = pneg %p443
      $region102: #{cross_modal_reranker.1} parent=99 // pred_check_branch
        %4488 = sbr.rel (%p4486) target = $region104
      $region103: #{cross_modal_reranker.1} parent=99 // pred_region
        %p4489 = scmp.lt.s32.totalorder %s32, 1
        %s4490 = scalar_select %p4489, %s32, 1
        %s4491 = scalar_lea.vmem %s18, %s4490
      $region104: #{cross_modal_reranker.1} parent=99 // pred_fallthru
        _
    $region100: #{cross_modal_reranker.1} parent=5 // pred_fallthru
      _
  $region6: #{cross_modal_reranker.1} parent=0 // loop_footer
    %s30 = sadd.s32 1, %s26
  $region7: #{cross_modal_reranker.1} parent=0 // loop_footer_branch
    %25 = sbr.rel target = $region3
  $region8: #{cross_modal_reranker.1} parent=0 // loop_exit
    _

</llo_original>
